<compile_context>
chip_gen: v6e
topology: v6e:2x2x1
jax: 0.10.0
libtpu: 0.0.40
codegen_flags: <defaults>
</compile_context>

<pallas_src>
import jax
import jax.numpy as jnp
from jax.experimental import pallas as pl
from jax.experimental.pallas import tpu as pltpu


# ----------------------------------------------------------------------------
# Fused Pallas kernel: all stages + lateral fusion + time alignment + concat
# ----------------------------------------------------------------------------
def _slowfast_fused_kernel(slow_ref, fast_ref, wlat_ref, blat_ref,
                           ws_ref, bs_ref, wf_ref, bf_ref, out_ref):
    # slow_ref: (Cs, Ts, P)           VMEM block (P = HW tile, lane-dense)
    # fast_ref: (Cf, Ts, alpha, P)    VMEM block
    # w*_ref / b*_ref: flattened f32 weight tables in SMEM (scalar reads)
    # out_ref:  (Cs + Cf, Ts, P)      VMEM block, written once per grid step
    Cs, Ts, P = slow_ref.shape
    Cf, _, alpha, _ = fast_ref.shape
    num_stages = blat_ref.shape[0] // Cs

    # Load each block once; keep per-channel slabs VMEM/vreg-resident across
    # every stage (no HBM round trips between stages).
    slow_blk = slow_ref[...]                          # (Cs, Ts, P)
    fast_blk = fast_ref[...]                          # (Cf, Ts, alpha, P)
    slow = [slow_blk[c] for c in range(Cs)]           # each (Ts, P)
    fast = [fast_blk[c] for c in range(Cf)]           # each (Ts, alpha, P)

    def mix_relu(xs, w_ref, b_ref, stage, c_out):
        """out[o] = relu(sum_i xs[i] * w[stage, o, i] + b[stage, o]).

        Channel counts are 4-8 here, so this is cheapest as unrolled VPU
        scalar*vector MACs (weights are SMEM scalars); the MXU would be <1%
        utilized and would force awkward relayouts."""
        c_in = len(xs)
        outs = []
        for o in range(c_out):
            w_base = (stage * c_out + o) * c_in
            acc = xs[0] * w_ref[w_base]
            for i in range(1, c_in):
                acc = acc + xs[i] * w_ref[w_base + i]
            outs.append(jnp.maximum(acc + b_ref[stage * c_out + o], 0.0))
        return outs

    for s in range(num_stages):
        # Lateral: time-strided fast frames (frame 0 of each alpha-window),
        # projected to slow channels.  Fused with the slow-path conv below, so
        # the lateral tensor never touches HBM.
        fast_strided = [f[:, 0, :] for f in fast]                 # (Ts, P) each
        lat = mix_relu(fast_strided, wlat_ref, blat_ref, s, Cs)
        fused = [slow[c] + lat[c] for c in range(Cs)]
        slow = mix_relu(fused, ws_ref, bs_ref, s, Cs)             # slow pathway
        fast = mix_relu(fast, wf_ref, bf_ref, s, Cf)              # fast pathway

    # align_time_dimensions (temporal average over each alpha-window) + channel
    # concat, written straight into the NCTHW-layout output block.  The mean is
    # an unrolled VPU sum of (Ts, P) slabs scaled by a compile-time constant.
    inv_alpha = 1.0 / float(alpha)
    for c in range(Cs):
        out_ref[c] = slow[c].astype(out_ref.dtype)
    for c in range(Cf):
        acc = fast[c][:, 0, :]
        for a in range(1, alpha):
            acc = acc + fast[c][:, a, :]
        out_ref[Cs + c] = (acc * inv_alpha).astype(out_ref.dtype)


# ----------------------------------------------------------------------------
# Wrapper
# ----------------------------------------------------------------------------
def _choose_hw_block(hw, cs, cf, ts, alpha, budget_bytes=8 * 1024 * 1024):
    """Largest lane-aligned HW tile whose double-buffered blocks fit the budget
    (keeps blocks far below v7x's 64 MiB physical / 32 MiB scoped VMEM)."""
    if hw % 128 != 0:
        return hw                      # must take the full (last) dim then
    bytes_per_hw = 4 * 2 * (cs * ts + cf * ts * alpha + (cs + cf) * ts)
    blk = min(hw, max(128, (budget_bytes // bytes_per_hw) // 128 * 128))
    while hw % blk:
        blk -= 128
    return blk


def debug_slowfast_forward(slow_ncthw, fast_ncthw, params, alpha):
    """Inputs and output in PyTorch NCTHW layout.  Single fused pallas_call."""
    N, Cs, Ts, H, W = slow_ncthw.shape
    _, Cf, Tf, _, _ = fast_ncthw.shape
    assert Tf == Ts * alpha, (Tf, Ts, alpha)
    num_stages = len(params)
    HW = H * W

    print(f"Input Slow Pathway shape: {slow_ncthw.shape}")
    print(f"Input Fast Pathway shape: {fast_ncthw.shape}")

    # Free (contiguous, row-major) reshapes only -- no transposes.
    slow2 = slow_ncthw.reshape(N, Cs, Ts, HW)
    fast2 = fast_ncthw.reshape(N, Cf, Ts, alpha, HW)

    # Stack per-stage weights, pre-transpose to (out, in), flatten for SMEM.
    wlat = jnp.stack([p["w_lat"].T for p in params]).reshape(-1)   # (S*Cs*Cf,)
    ws   = jnp.stack([p["w_s"].T for p in params]).reshape(-1)     # (S*Cs*Cs,)
    wf   = jnp.stack([p["w_f"].T for p in params]).reshape(-1)     # (S*Cf*Cf,)
    blat = jnp.stack([p["b_lat"] for p in params]).reshape(-1)     # (S*Cs,)
    bs   = jnp.stack([p["b_s"] for p in params]).reshape(-1)       # (S*Cs,)
    bf   = jnp.stack([p["b_f"] for p in params]).reshape(-1)       # (S*Cf,)

    hw_blk = _choose_hw_block(HW, Cs, Cf, Ts, alpha)
    grid = (N, HW // hw_blk)

    def smem_spec():
        return pl.BlockSpec(memory_space=pltpu.MemorySpace.SMEM)

    out2 = pl.pallas_call(
        _slowfast_fused_kernel,
        out_shape=jax.ShapeDtypeStruct((N, Cs + Cf, Ts, HW), slow_ncthw.dtype),
        grid=grid,
        in_specs=[
            pl.BlockSpec((None, Cs, Ts, hw_blk), lambda n, h: (n, 0, 0, h)),
            pl.BlockSpec((None, Cf, Ts, alpha, hw_blk),
                         lambda n, h: (n, 0, 0, 0, h)),
            smem_spec(), smem_spec(), smem_spec(),
            smem_spec(), smem_spec(), smem_spec(),
        ],
        out_specs=pl.BlockSpec((None, Cs + Cf, Ts, hw_blk),
                               lambda n, h: (n, 0, 0, h)),
        compiler_params=pltpu.CompilerParams(
            dimension_semantics=("parallel", "parallel")),
    )(slow2, fast2, wlat, blat, ws, bs, wf, bf)

    # Debug prints mirroring the DebugSlowFast wrapper (shapes are static).
    for idx in range(num_stages):
        print(f"Submodule stages[{idx}]: Slow={(N, Cs, Ts, H, W)}, "
              f"Fast={(N, Cf, Tf, H, W)}")
    print(f"Aligned Slow Pathway shape: {(N, Cs, Ts, H, W)}")
    print(f"Aligned Fast Pathway shape: {(N, Cf, Ts, H, W)}")

    return out2.reshape(N, Cs + Cf, Ts, H, W)       # free reshape back to NCTHW


# ----------------------------------------------------------------------------
# Synthetic SlowFast params + pure-JAX reference
# ----------------------------------------------------------------------------
def init_params(key, num_stages, c_slow, c_fast):
    params = []
    for s in range(num_stages):
        k = jax.random.fold_in(key, s)
        k1, k2, k3 = jax.random.split(k, 3)
        params.append(
            dict(
                w_lat=0.2 * jax.random.normal(k1, (c_fast, c_slow), jnp.float32),
                b_lat=jnp.full((c_slow,), 0.01, jnp.float32),
                w_s=0.2 * jax.random.normal(k2, (c_slow, c_slow), jnp.float32),
                b_s=jnp.full((c_slow,), 0.01, jnp.float32),
                w_f=0.2 * jax.random.normal(k3, (c_fast, c_fast), jnp.float32),
                b_f=jnp.full((c_fast,), 0.01, jnp.float32),
            )
        )
    return params


def _reference_forward(slow_ncthw, fast_ncthw, params, alpha):
    """Plain-JAX (channels-last) reference of the same synthetic model."""
    hi = jax.lax.Precision.HIGHEST
    slow = jnp.transpose(slow_ncthw, (0, 2, 3, 4, 1))
    fast = jnp.transpose(fast_ncthw, (0, 2, 3, 4, 1))
    for p in params:
        lat = jax.nn.relu(
            jnp.einsum("nthwc,cd->nthwd", fast[:, ::alpha], p["w_lat"],
                       precision=hi) + p["b_lat"])
        slow = jax.nn.relu(
            jnp.einsum("nthwc,cd->nthwd", slow + lat, p["w_s"],
                       precision=hi) + p["b_s"])
        fast = jax.nn.relu(
            jnp.einsum("nthwc,cd->nthwd", fast, p["w_f"],
                       precision=hi) + p["b_f"])
    N, Ts, H, W, Cs = slow.shape
    _, Tf, _, _, Cf = fast.shape
    # TODO(synk): align_time_dimensions is undefined in the reference module;
    # temporal average pooling to the slow T is a reasonable stand-in.
    fast_al = fast.reshape(N, Ts, alpha, H, W, Cf).mean(axis=2)
    out = jnp.concatenate([slow, fast_al], axis=-1)
    return jnp.transpose(out, (0, 4, 1, 2, 3))


# ----------------------------------------------------------------------------
if __name__ == "__main__":
    N, Cs, Cf = 2, 8, 4
    Ts, H, W = 4, 8, 8
    alpha = 4
    Tf = Ts * alpha
    num_stages = 2

    key = jax.random.PRNGKey(0)
    k_slow, k_fast, k_param = jax.random.split(key, 3)
    slow_in = jax.random.normal(k_slow, (N, Cs, Ts, H, W), jnp.float32)   # NCTHW
    fast_in = jax.random.normal(k_fast, (N, Cf, Tf, H, W), jnp.float32)   # NCTHW
    params = init_params(k_param, num_stages, Cs, Cf)

    out = debug_slowfast_forward(slow_in, fast_in, params, alpha)
    out = jax.block_until_ready(out)
    assert out.shape == (N, Cs + Cf, Ts, H, W), out.shape

    ref = jax.block_until_ready(_reference_forward(slow_in, fast_in, params, alpha))
    max_err = float(jnp.max(jnp.abs(out - ref)))
    assert max_err < 1e-3, f"mismatch vs reference: {max_err}"

    print("KERNEL_OK")
</pallas_src>

<mosaic_0001>
module attributes {stable_mosaic.version = 11 : i64} {
  func.func @_slowfast_fused_kernel(%arg0: i32, %arg1: i32, %arg2: memref<1x8x4x64xf32, #tpu.memory_space<vmem>>, %arg3: memref<1x4x4x4x64xf32, #tpu.memory_space<vmem>>, %arg4: memref<64xf32, #tpu.memory_space<smem>>, %arg5: memref<16xf32, #tpu.memory_space<smem>>, %arg6: memref<128xf32, #tpu.memory_space<smem>>, %arg7: memref<16xf32, #tpu.memory_space<smem>>, %arg8: memref<32xf32, #tpu.memory_space<smem>>, %arg9: memref<8xf32, #tpu.memory_space<smem>>, %arg10: memref<1x12x4x64xf32, #tpu.memory_space<vmem>>) attributes {dimension_semantics = [#tpu.dimension_semantics<parallel>, #tpu.dimension_semantics<parallel>], iteration_bounds = array<i64: 2, 1>, scalar_prefetch = 0 : i64, scratch_operands = 0 : i64, tpu.core_type = #tpu.core_type<tc>, window_params = [{transform_indices = @transform_0, window_bounds = array<i64: 1, 8, 4, 64>}, {transform_indices = @transform_1, window_bounds = array<i64: 1, 4, 4, 4, 64>}, {transform_indices = @transform_2, window_bounds = array<i64: 64>}, {transform_indices = @transform_3, window_bounds = array<i64: 16>}, {transform_indices = @transform_4, window_bounds = array<i64: 128>}, {transform_indices = @transform_5, window_bounds = array<i64: 16>}, {transform_indices = @transform_6, window_bounds = array<i64: 32>}, {transform_indices = @transform_7, window_bounds = array<i64: 8>}, {transform_indices = @transform_8, window_bounds = array<i64: 1, 12, 4, 64>}]} {
    %c0 = arith.constant 0 : index
    %c0_0 = arith.constant 0 : index
    %c0_1 = arith.constant 0 : index
    %c0_2 = arith.constant 0 : index
    %0 = vector.load %arg2[%c0, %c0_0, %c0_1, %c0_2] : memref<1x8x4x64xf32, #tpu.memory_space<vmem>>, vector<1x8x4x64xf32>
    %1 = vector.shape_cast %0 : vector<1x8x4x64xf32> to vector<8x4x64xf32>
    %c0_3 = arith.constant 0 : index
    %c0_4 = arith.constant 0 : index
    %c0_5 = arith.constant 0 : index
    %c0_6 = arith.constant 0 : index
    %c0_7 = arith.constant 0 : index
    %2 = vector.load %arg3[%c0_3, %c0_4, %c0_5, %c0_6, %c0_7] : memref<1x4x4x4x64xf32, #tpu.memory_space<vmem>>, vector<1x4x4x4x64xf32>
    %3 = vector.shape_cast %2 : vector<1x4x4x4x64xf32> to vector<4x4x4x64xf32>
    %4 = vector.extract_strided_slice %1 {offsets = [0, 0, 0], sizes = [1, 4, 64], strides = [1, 1, 1]} : vector<8x4x64xf32> to vector<1x4x64xf32>
    %5 = vector.shape_cast %4 : vector<1x4x64xf32> to vector<4x64xf32>
    %6 = vector.extract_strided_slice %1 {offsets = [1, 0, 0], sizes = [1, 4, 64], strides = [1, 1, 1]} : vector<8x4x64xf32> to vector<1x4x64xf32>
    %7 = vector.shape_cast %6 : vector<1x4x64xf32> to vector<4x64xf32>
    %8 = vector.extract_strided_slice %1 {offsets = [2, 0, 0], sizes = [1, 4, 64], strides = [1, 1, 1]} : vector<8x4x64xf32> to vector<1x4x64xf32>
    %9 = vector.shape_cast %8 : vector<1x4x64xf32> to vector<4x64xf32>
    %10 = vector.extract_strided_slice %1 {offsets = [3, 0, 0], sizes = [1, 4, 64], strides = [1, 1, 1]} : vector<8x4x64xf32> to vector<1x4x64xf32>
    %11 = vector.shape_cast %10 : vector<1x4x64xf32> to vector<4x64xf32>
    %12 = vector.extract_strided_slice %1 {offsets = [4, 0, 0], sizes = [1, 4, 64], strides = [1, 1, 1]} : vector<8x4x64xf32> to vector<1x4x64xf32>
    %13 = vector.shape_cast %12 : vector<1x4x64xf32> to vector<4x64xf32>
    %14 = vector.extract_strided_slice %1 {offsets = [5, 0, 0], sizes = [1, 4, 64], strides = [1, 1, 1]} : vector<8x4x64xf32> to vector<1x4x64xf32>
    %15 = vector.shape_cast %14 : vector<1x4x64xf32> to vector<4x64xf32>
    %16 = vector.extract_strided_slice %1 {offsets = [6, 0, 0], sizes = [1, 4, 64], strides = [1, 1, 1]} : vector<8x4x64xf32> to vector<1x4x64xf32>
    %17 = vector.shape_cast %16 : vector<1x4x64xf32> to vector<4x64xf32>
    %18 = vector.extract_strided_slice %1 {offsets = [7, 0, 0], sizes = [1, 4, 64], strides = [1, 1, 1]} : vector<8x4x64xf32> to vector<1x4x64xf32>
    %19 = vector.shape_cast %18 : vector<1x4x64xf32> to vector<4x64xf32>
    %20 = vector.extract_strided_slice %3 {offsets = [0, 0, 0, 0], sizes = [1, 4, 4, 64], strides = [1, 1, 1, 1]} : vector<4x4x4x64xf32> to vector<1x4x4x64xf32>
    %21 = vector.shape_cast %20 : vector<1x4x4x64xf32> to vector<4x4x64xf32>
    %22 = vector.extract_strided_slice %3 {offsets = [1, 0, 0, 0], sizes = [1, 4, 4, 64], strides = [1, 1, 1, 1]} : vector<4x4x4x64xf32> to vector<1x4x4x64xf32>
    %23 = vector.shape_cast %22 : vector<1x4x4x64xf32> to vector<4x4x64xf32>
    %24 = vector.extract_strided_slice %3 {offsets = [2, 0, 0, 0], sizes = [1, 4, 4, 64], strides = [1, 1, 1, 1]} : vector<4x4x4x64xf32> to vector<1x4x4x64xf32>
    %25 = vector.shape_cast %24 : vector<1x4x4x64xf32> to vector<4x4x64xf32>
    %26 = vector.extract_strided_slice %3 {offsets = [3, 0, 0, 0], sizes = [1, 4, 4, 64], strides = [1, 1, 1, 1]} : vector<4x4x4x64xf32> to vector<1x4x4x64xf32>
    %27 = vector.shape_cast %26 : vector<1x4x4x64xf32> to vector<4x4x64xf32>
    %28 = vector.extract_strided_slice %21 {offsets = [0, 0, 0], sizes = [4, 1, 64], strides = [1, 1, 1]} : vector<4x4x64xf32> to vector<4x1x64xf32>
    %29 = vector.shape_cast %28 : vector<4x1x64xf32> to vector<4x64xf32>
    %30 = vector.extract_strided_slice %23 {offsets = [0, 0, 0], sizes = [4, 1, 64], strides = [1, 1, 1]} : vector<4x4x64xf32> to vector<4x1x64xf32>
    %31 = vector.shape_cast %30 : vector<4x1x64xf32> to vector<4x64xf32>
    %32 = vector.extract_strided_slice %25 {offsets = [0, 0, 0], sizes = [4, 1, 64], strides = [1, 1, 1]} : vector<4x4x64xf32> to vector<4x1x64xf32>
    %33 = vector.shape_cast %32 : vector<4x1x64xf32> to vector<4x64xf32>
    %34 = vector.extract_strided_slice %27 {offsets = [0, 0, 0], sizes = [4, 1, 64], strides = [1, 1, 1]} : vector<4x4x64xf32> to vector<4x1x64xf32>
    %35 = vector.shape_cast %34 : vector<4x1x64xf32> to vector<4x64xf32>
    %c0_8 = arith.constant 0 : index
    %36 = memref.load %arg4[%c0_8] : memref<64xf32, #tpu.memory_space<smem>>
    %37 = vector.broadcast %36 : f32 to vector<4x64xf32>
    %38 = arith.mulf %29, %37 : vector<4x64xf32>
    %c1 = arith.constant 1 : index
    %39 = memref.load %arg4[%c1] : memref<64xf32, #tpu.memory_space<smem>>
    %40 = vector.broadcast %39 : f32 to vector<4x64xf32>
    %41 = arith.mulf %31, %40 : vector<4x64xf32>
    %42 = arith.addf %38, %41 : vector<4x64xf32>
    %c2 = arith.constant 2 : index
    %43 = memref.load %arg4[%c2] : memref<64xf32, #tpu.memory_space<smem>>
    %44 = vector.broadcast %43 : f32 to vector<4x64xf32>
    %45 = arith.mulf %33, %44 : vector<4x64xf32>
    %46 = arith.addf %42, %45 : vector<4x64xf32>
    %c3 = arith.constant 3 : index
    %47 = memref.load %arg4[%c3] : memref<64xf32, #tpu.memory_space<smem>>
    %48 = vector.broadcast %47 : f32 to vector<4x64xf32>
    %49 = arith.mulf %35, %48 : vector<4x64xf32>
    %50 = arith.addf %46, %49 : vector<4x64xf32>
    %c0_9 = arith.constant 0 : index
    %51 = memref.load %arg5[%c0_9] : memref<16xf32, #tpu.memory_space<smem>>
    %52 = vector.broadcast %51 : f32 to vector<4x64xf32>
    %53 = arith.addf %50, %52 : vector<4x64xf32>
    %cst = arith.constant 0.000000e+00 : f32
    %54 = vector.broadcast %cst : f32 to vector<4x64xf32>
    %55 = arith.maximumf %53, %54 : vector<4x64xf32>
    %c4 = arith.constant 4 : index
    %56 = memref.load %arg4[%c4] : memref<64xf32, #tpu.memory_space<smem>>
    %57 = vector.broadcast %56 : f32 to vector<4x64xf32>
    %58 = arith.mulf %29, %57 : vector<4x64xf32>
    %c5 = arith.constant 5 : index
    %59 = memref.load %arg4[%c5] : memref<64xf32, #tpu.memory_space<smem>>
    %60 = vector.broadcast %59 : f32 to vector<4x64xf32>
    %61 = arith.mulf %31, %60 : vector<4x64xf32>
    %62 = arith.addf %58, %61 : vector<4x64xf32>
    %c6 = arith.constant 6 : index
    %63 = memref.load %arg4[%c6] : memref<64xf32, #tpu.memory_space<smem>>
    %64 = vector.broadcast %63 : f32 to vector<4x64xf32>
    %65 = arith.mulf %33, %64 : vector<4x64xf32>
    %66 = arith.addf %62, %65 : vector<4x64xf32>
    %c7 = arith.constant 7 : index
    %67 = memref.load %arg4[%c7] : memref<64xf32, #tpu.memory_space<smem>>
    %68 = vector.broadcast %67 : f32 to vector<4x64xf32>
    %69 = arith.mulf %35, %68 : vector<4x64xf32>
    %70 = arith.addf %66, %69 : vector<4x64xf32>
    %c1_10 = arith.constant 1 : index
    %71 = memref.load %arg5[%c1_10] : memref<16xf32, #tpu.memory_space<smem>>
    %72 = vector.broadcast %71 : f32 to vector<4x64xf32>
    %73 = arith.addf %70, %72 : vector<4x64xf32>
    %cst_11 = arith.constant 0.000000e+00 : f32
    %74 = vector.broadcast %cst_11 : f32 to vector<4x64xf32>
    %75 = arith.maximumf %73, %74 : vector<4x64xf32>
    %c8 = arith.constant 8 : index
    %76 = memref.load %arg4[%c8] : memref<64xf32, #tpu.memory_space<smem>>
    %77 = vector.broadcast %76 : f32 to vector<4x64xf32>
    %78 = arith.mulf %29, %77 : vector<4x64xf32>
    %c9 = arith.constant 9 : index
    %79 = memref.load %arg4[%c9] : memref<64xf32, #tpu.memory_space<smem>>
    %80 = vector.broadcast %79 : f32 to vector<4x64xf32>
    %81 = arith.mulf %31, %80 : vector<4x64xf32>
    %82 = arith.addf %78, %81 : vector<4x64xf32>
    %c10 = arith.constant 10 : index
    %83 = memref.load %arg4[%c10] : memref<64xf32, #tpu.memory_space<smem>>
    %84 = vector.broadcast %83 : f32 to vector<4x64xf32>
    %85 = arith.mulf %33, %84 : vector<4x64xf32>
    %86 = arith.addf %82, %85 : vector<4x64xf32>
    %c11 = arith.constant 11 : index
    %87 = memref.load %arg4[%c11] : memref<64xf32, #tpu.memory_space<smem>>
    %88 = vector.broadcast %87 : f32 to vector<4x64xf32>
    %89 = arith.mulf %35, %88 : vector<4x64xf32>
    %90 = arith.addf %86, %89 : vector<4x64xf32>
    %c2_12 = arith.constant 2 : index
    %91 = memref.load %arg5[%c2_12] : memref<16xf32, #tpu.memory_space<smem>>
    %92 = vector.broadcast %91 : f32 to vector<4x64xf32>
    %93 = arith.addf %90, %92 : vector<4x64xf32>
    %cst_13 = arith.constant 0.000000e+00 : f32
    %94 = vector.broadcast %cst_13 : f32 to vector<4x64xf32>
    %95 = arith.maximumf %93, %94 : vector<4x64xf32>
    %c12 = arith.constant 12 : index
    %96 = memref.load %arg4[%c12] : memref<64xf32, #tpu.memory_space<smem>>
    %97 = vector.broadcast %96 : f32 to vector<4x64xf32>
    %98 = arith.mulf %29, %97 : vector<4x64xf32>
    %c13 = arith.constant 13 : index
    %99 = memref.load %arg4[%c13] : memref<64xf32, #tpu.memory_space<smem>>
    %100 = vector.broadcast %99 : f32 to vector<4x64xf32>
    %101 = arith.mulf %31, %100 : vector<4x64xf32>
    %102 = arith.addf %98, %101 : vector<4x64xf32>
    %c14 = arith.constant 14 : index
    %103 = memref.load %arg4[%c14] : memref<64xf32, #tpu.memory_space<smem>>
    %104 = vector.broadcast %103 : f32 to vector<4x64xf32>
    %105 = arith.mulf %33, %104 : vector<4x64xf32>
    %106 = arith.addf %102, %105 : vector<4x64xf32>
    %c15 = arith.constant 15 : index
    %107 = memref.load %arg4[%c15] : memref<64xf32, #tpu.memory_space<smem>>
    %108 = vector.broadcast %107 : f32 to vector<4x64xf32>
    %109 = arith.mulf %35, %108 : vector<4x64xf32>
    %110 = arith.addf %106, %109 : vector<4x64xf32>
    %c3_14 = arith.constant 3 : index
    %111 = memref.load %arg5[%c3_14] : memref<16xf32, #tpu.memory_space<smem>>
    %112 = vector.broadcast %111 : f32 to vector<4x64xf32>
    %113 = arith.addf %110, %112 : vector<4x64xf32>
    %cst_15 = arith.constant 0.000000e+00 : f32
    %114 = vector.broadcast %cst_15 : f32 to vector<4x64xf32>
    %115 = arith.maximumf %113, %114 : vector<4x64xf32>
    %c16 = arith.constant 16 : index
    %116 = memref.load %arg4[%c16] : memref<64xf32, #tpu.memory_space<smem>>
    %117 = vector.broadcast %116 : f32 to vector<4x64xf32>
    %118 = arith.mulf %29, %117 : vector<4x64xf32>
    %c17 = arith.constant 17 : index
    %119 = memref.load %arg4[%c17] : memref<64xf32, #tpu.memory_space<smem>>
    %120 = vector.broadcast %119 : f32 to vector<4x64xf32>
    %121 = arith.mulf %31, %120 : vector<4x64xf32>
    %122 = arith.addf %118, %121 : vector<4x64xf32>
    %c18 = arith.constant 18 : index
    %123 = memref.load %arg4[%c18] : memref<64xf32, #tpu.memory_space<smem>>
    %124 = vector.broadcast %123 : f32 to vector<4x64xf32>
    %125 = arith.mulf %33, %124 : vector<4x64xf32>
    %126 = arith.addf %122, %125 : vector<4x64xf32>
    %c19 = arith.constant 19 : index
    %127 = memref.load %arg4[%c19] : memref<64xf32, #tpu.memory_space<smem>>
    %128 = vector.broadcast %127 : f32 to vector<4x64xf32>
    %129 = arith.mulf %35, %128 : vector<4x64xf32>
    %130 = arith.addf %126, %129 : vector<4x64xf32>
    %c4_16 = arith.constant 4 : index
    %131 = memref.load %arg5[%c4_16] : memref<16xf32, #tpu.memory_space<smem>>
    %132 = vector.broadcast %131 : f32 to vector<4x64xf32>
    %133 = arith.addf %130, %132 : vector<4x64xf32>
    %cst_17 = arith.constant 0.000000e+00 : f32
    %134 = vector.broadcast %cst_17 : f32 to vector<4x64xf32>
    %135 = arith.maximumf %133, %134 : vector<4x64xf32>
    %c20 = arith.constant 20 : index
    %136 = memref.load %arg4[%c20] : memref<64xf32, #tpu.memory_space<smem>>
    %137 = vector.broadcast %136 : f32 to vector<4x64xf32>
    %138 = arith.mulf %29, %137 : vector<4x64xf32>
    %c21 = arith.constant 21 : index
    %139 = memref.load %arg4[%c21] : memref<64xf32, #tpu.memory_space<smem>>
    %140 = vector.broadcast %139 : f32 to vector<4x64xf32>
    %141 = arith.mulf %31, %140 : vector<4x64xf32>
    %142 = arith.addf %138, %141 : vector<4x64xf32>
    %c22 = arith.constant 22 : index
    %143 = memref.load %arg4[%c22] : memref<64xf32, #tpu.memory_space<smem>>
    %144 = vector.broadcast %143 : f32 to vector<4x64xf32>
    %145 = arith.mulf %33, %144 : vector<4x64xf32>
    %146 = arith.addf %142, %145 : vector<4x64xf32>
    %c23 = arith.constant 23 : index
    %147 = memref.load %arg4[%c23] : memref<64xf32, #tpu.memory_space<smem>>
    %148 = vector.broadcast %147 : f32 to vector<4x64xf32>
    %149 = arith.mulf %35, %148 : vector<4x64xf32>
    %150 = arith.addf %146, %149 : vector<4x64xf32>
    %c5_18 = arith.constant 5 : index
    %151 = memref.load %arg5[%c5_18] : memref<16xf32, #tpu.memory_space<smem>>
    %152 = vector.broadcast %151 : f32 to vector<4x64xf32>
    %153 = arith.addf %150, %152 : vector<4x64xf32>
    %cst_19 = arith.constant 0.000000e+00 : f32
    %154 = vector.broadcast %cst_19 : f32 to vector<4x64xf32>
    %155 = arith.maximumf %153, %154 : vector<4x64xf32>
    %c24 = arith.constant 24 : index
    %156 = memref.load %arg4[%c24] : memref<64xf32, #tpu.memory_space<smem>>
    %157 = vector.broadcast %156 : f32 to vector<4x64xf32>
    %158 = arith.mulf %29, %157 : vector<4x64xf32>
    %c25 = arith.constant 25 : index
    %159 = memref.load %arg4[%c25] : memref<64xf32, #tpu.memory_space<smem>>
    %160 = vector.broadcast %159 : f32 to vector<4x64xf32>
    %161 = arith.mulf %31, %160 : vector<4x64xf32>
    %162 = arith.addf %158, %161 : vector<4x64xf32>
    %c26 = arith.constant 26 : index
    %163 = memref.load %arg4[%c26] : memref<64xf32, #tpu.memory_space<smem>>
    %164 = vector.broadcast %163 : f32 to vector<4x64xf32>
    %165 = arith.mulf %33, %164 : vector<4x64xf32>
    %166 = arith.addf %162, %165 : vector<4x64xf32>
    %c27 = arith.constant 27 : index
    %167 = memref.load %arg4[%c27] : memref<64xf32, #tpu.memory_space<smem>>
    %168 = vector.broadcast %167 : f32 to vector<4x64xf32>
    %169 = arith.mulf %35, %168 : vector<4x64xf32>
    %170 = arith.addf %166, %169 : vector<4x64xf32>
    %c6_20 = arith.constant 6 : index
    %171 = memref.load %arg5[%c6_20] : memref<16xf32, #tpu.memory_space<smem>>
    %172 = vector.broadcast %171 : f32 to vector<4x64xf32>
    %173 = arith.addf %170, %172 : vector<4x64xf32>
    %cst_21 = arith.constant 0.000000e+00 : f32
    %174 = vector.broadcast %cst_21 : f32 to vector<4x64xf32>
    %175 = arith.maximumf %173, %174 : vector<4x64xf32>
    %c28 = arith.constant 28 : index
    %176 = memref.load %arg4[%c28] : memref<64xf32, #tpu.memory_space<smem>>
    %177 = vector.broadcast %176 : f32 to vector<4x64xf32>
    %178 = arith.mulf %29, %177 : vector<4x64xf32>
    %c29 = arith.constant 29 : index
    %179 = memref.load %arg4[%c29] : memref<64xf32, #tpu.memory_space<smem>>
    %180 = vector.broadcast %179 : f32 to vector<4x64xf32>
    %181 = arith.mulf %31, %180 : vector<4x64xf32>
    %182 = arith.addf %178, %181 : vector<4x64xf32>
    %c30 = arith.constant 30 : index
    %183 = memref.load %arg4[%c30] : memref<64xf32, #tpu.memory_space<smem>>
    %184 = vector.broadcast %183 : f32 to vector<4x64xf32>
    %185 = arith.mulf %33, %184 : vector<4x64xf32>
    %186 = arith.addf %182, %185 : vector<4x64xf32>
    %c31 = arith.constant 31 : index
    %187 = memref.load %arg4[%c31] : memref<64xf32, #tpu.memory_space<smem>>
    %188 = vector.broadcast %187 : f32 to vector<4x64xf32>
    %189 = arith.mulf %35, %188 : vector<4x64xf32>
    %190 = arith.addf %186, %189 : vector<4x64xf32>
    %c7_22 = arith.constant 7 : index
    %191 = memref.load %arg5[%c7_22] : memref<16xf32, #tpu.memory_space<smem>>
    %192 = vector.broadcast %191 : f32 to vector<4x64xf32>
    %193 = arith.addf %190, %192 : vector<4x64xf32>
    %cst_23 = arith.constant 0.000000e+00 : f32
    %194 = vector.broadcast %cst_23 : f32 to vector<4x64xf32>
    %195 = arith.maximumf %193, %194 : vector<4x64xf32>
    %196 = arith.addf %5, %55 : vector<4x64xf32>
    %197 = arith.addf %7, %75 : vector<4x64xf32>
    %198 = arith.addf %9, %95 : vector<4x64xf32>
    %199 = arith.addf %11, %115 : vector<4x64xf32>
    %200 = arith.addf %13, %135 : vector<4x64xf32>
    %201 = arith.addf %15, %155 : vector<4x64xf32>
    %202 = arith.addf %17, %175 : vector<4x64xf32>
    %203 = arith.addf %19, %195 : vector<4x64xf32>
    %c0_24 = arith.constant 0 : index
    %204 = memref.load %arg6[%c0_24] : memref<128xf32, #tpu.memory_space<smem>>
    %205 = vector.broadcast %204 : f32 to vector<4x64xf32>
    %206 = arith.mulf %196, %205 : vector<4x64xf32>
    %c1_25 = arith.constant 1 : index
    %207 = memref.load %arg6[%c1_25] : memref<128xf32, #tpu.memory_space<smem>>
    %208 = vector.broadcast %207 : f32 to vector<4x64xf32>
    %209 = arith.mulf %197, %208 : vector<4x64xf32>
    %210 = arith.addf %206, %209 : vector<4x64xf32>
    %c2_26 = arith.constant 2 : index
    %211 = memref.load %arg6[%c2_26] : memref<128xf32, #tpu.memory_space<smem>>
    %212 = vector.broadcast %211 : f32 to vector<4x64xf32>
    %213 = arith.mulf %198, %212 : vector<4x64xf32>
    %214 = arith.addf %210, %213 : vector<4x64xf32>
    %c3_27 = arith.constant 3 : index
    %215 = memref.load %arg6[%c3_27] : memref<128xf32, #tpu.memory_space<smem>>
    %216 = vector.broadcast %215 : f32 to vector<4x64xf32>
    %217 = arith.mulf %199, %216 : vector<4x64xf32>
    %218 = arith.addf %214, %217 : vector<4x64xf32>
    %c4_28 = arith.constant 4 : index
    %219 = memref.load %arg6[%c4_28] : memref<128xf32, #tpu.memory_space<smem>>
    %220 = vector.broadcast %219 : f32 to vector<4x64xf32>
    %221 = arith.mulf %200, %220 : vector<4x64xf32>
    %222 = arith.addf %218, %221 : vector<4x64xf32>
    %c5_29 = arith.constant 5 : index
    %223 = memref.load %arg6[%c5_29] : memref<128xf32, #tpu.memory_space<smem>>
    %224 = vector.broadcast %223 : f32 to vector<4x64xf32>
    %225 = arith.mulf %201, %224 : vector<4x64xf32>
    %226 = arith.addf %222, %225 : vector<4x64xf32>
    %c6_30 = arith.constant 6 : index
    %227 = memref.load %arg6[%c6_30] : memref<128xf32, #tpu.memory_space<smem>>
    %228 = vector.broadcast %227 : f32 to vector<4x64xf32>
    %229 = arith.mulf %202, %228 : vector<4x64xf32>
    %230 = arith.addf %226, %229 : vector<4x64xf32>
    %c7_31 = arith.constant 7 : index
    %231 = memref.load %arg6[%c7_31] : memref<128xf32, #tpu.memory_space<smem>>
    %232 = vector.broadcast %231 : f32 to vector<4x64xf32>
    %233 = arith.mulf %203, %232 : vector<4x64xf32>
    %234 = arith.addf %230, %233 : vector<4x64xf32>
    %c0_32 = arith.constant 0 : index
    %235 = memref.load %arg7[%c0_32] : memref<16xf32, #tpu.memory_space<smem>>
    %236 = vector.broadcast %235 : f32 to vector<4x64xf32>
    %237 = arith.addf %234, %236 : vector<4x64xf32>
    %cst_33 = arith.constant 0.000000e+00 : f32
    %238 = vector.broadcast %cst_33 : f32 to vector<4x64xf32>
    %239 = arith.maximumf %237, %238 : vector<4x64xf32>
    %c8_34 = arith.constant 8 : index
    %240 = memref.load %arg6[%c8_34] : memref<128xf32, #tpu.memory_space<smem>>
    %241 = vector.broadcast %240 : f32 to vector<4x64xf32>
    %242 = arith.mulf %196, %241 : vector<4x64xf32>
    %c9_35 = arith.constant 9 : index
    %243 = memref.load %arg6[%c9_35] : memref<128xf32, #tpu.memory_space<smem>>
    %244 = vector.broadcast %243 : f32 to vector<4x64xf32>
    %245 = arith.mulf %197, %244 : vector<4x64xf32>
    %246 = arith.addf %242, %245 : vector<4x64xf32>
    %c10_36 = arith.constant 10 : index
    %247 = memref.load %arg6[%c10_36] : memref<128xf32, #tpu.memory_space<smem>>
    %248 = vector.broadcast %247 : f32 to vector<4x64xf32>
    %249 = arith.mulf %198, %248 : vector<4x64xf32>
    %250 = arith.addf %246, %249 : vector<4x64xf32>
    %c11_37 = arith.constant 11 : index
    %251 = memref.load %arg6[%c11_37] : memref<128xf32, #tpu.memory_space<smem>>
    %252 = vector.broadcast %251 : f32 to vector<4x64xf32>
    %253 = arith.mulf %199, %252 : vector<4x64xf32>
    %254 = arith.addf %250, %253 : vector<4x64xf32>
    %c12_38 = arith.constant 12 : index
    %255 = memref.load %arg6[%c12_38] : memref<128xf32, #tpu.memory_space<smem>>
    %256 = vector.broadcast %255 : f32 to vector<4x64xf32>
    %257 = arith.mulf %200, %256 : vector<4x64xf32>
    %258 = arith.addf %254, %257 : vector<4x64xf32>
    %c13_39 = arith.constant 13 : index
    %259 = memref.load %arg6[%c13_39] : memref<128xf32, #tpu.memory_space<smem>>
    %260 = vector.broadcast %259 : f32 to vector<4x64xf32>
    %261 = arith.mulf %201, %260 : vector<4x64xf32>
    %262 = arith.addf %258, %261 : vector<4x64xf32>
    %c14_40 = arith.constant 14 : index
    %263 = memref.load %arg6[%c14_40] : memref<128xf32, #tpu.memory_space<smem>>
    %264 = vector.broadcast %263 : f32 to vector<4x64xf32>
    %265 = arith.mulf %202, %264 : vector<4x64xf32>
    %266 = arith.addf %262, %265 : vector<4x64xf32>
    %c15_41 = arith.constant 15 : index
    %267 = memref.load %arg6[%c15_41] : memref<128xf32, #tpu.memory_space<smem>>
    %268 = vector.broadcast %267 : f32 to vector<4x64xf32>
    %269 = arith.mulf %203, %268 : vector<4x64xf32>
    %270 = arith.addf %266, %269 : vector<4x64xf32>
    %c1_42 = arith.constant 1 : index
    %271 = memref.load %arg7[%c1_42] : memref<16xf32, #tpu.memory_space<smem>>
    %272 = vector.broadcast %271 : f32 to vector<4x64xf32>
    %273 = arith.addf %270, %272 : vector<4x64xf32>
    %cst_43 = arith.constant 0.000000e+00 : f32
    %274 = vector.broadcast %cst_43 : f32 to vector<4x64xf32>
    %275 = arith.maximumf %273, %274 : vector<4x64xf32>
    %c16_44 = arith.constant 16 : index
    %276 = memref.load %arg6[%c16_44] : memref<128xf32, #tpu.memory_space<smem>>
    %277 = vector.broadcast %276 : f32 to vector<4x64xf32>
    %278 = arith.mulf %196, %277 : vector<4x64xf32>
    %c17_45 = arith.constant 17 : index
    %279 = memref.load %arg6[%c17_45] : memref<128xf32, #tpu.memory_space<smem>>
    %280 = vector.broadcast %279 : f32 to vector<4x64xf32>
    %281 = arith.mulf %197, %280 : vector<4x64xf32>
    %282 = arith.addf %278, %281 : vector<4x64xf32>
    %c18_46 = arith.constant 18 : index
    %283 = memref.load %arg6[%c18_46] : memref<128xf32, #tpu.memory_space<smem>>
    %284 = vector.broadcast %283 : f32 to vector<4x64xf32>
    %285 = arith.mulf %198, %284 : vector<4x64xf32>
    %286 = arith.addf %282, %285 : vector<4x64xf32>
    %c19_47 = arith.constant 19 : index
    %287 = memref.load %arg6[%c19_47] : memref<128xf32, #tpu.memory_space<smem>>
    %288 = vector.broadcast %287 : f32 to vector<4x64xf32>
    %289 = arith.mulf %199, %288 : vector<4x64xf32>
    %290 = arith.addf %286, %289 : vector<4x64xf32>
    %c20_48 = arith.constant 20 : index
    %291 = memref.load %arg6[%c20_48] : memref<128xf32, #tpu.memory_space<smem>>
    %292 = vector.broadcast %291 : f32 to vector<4x64xf32>
    %293 = arith.mulf %200, %292 : vector<4x64xf32>
    %294 = arith.addf %290, %293 : vector<4x64xf32>
    %c21_49 = arith.constant 21 : index
    %295 = memref.load %arg6[%c21_49] : memref<128xf32, #tpu.memory_space<smem>>
    %296 = vector.broadcast %295 : f32 to vector<4x64xf32>
    %297 = arith.mulf %201, %296 : vector<4x64xf32>
    %298 = arith.addf %294, %297 : vector<4x64xf32>
    %c22_50 = arith.constant 22 : index
    %299 = memref.load %arg6[%c22_50] : memref<128xf32, #tpu.memory_space<smem>>
    %300 = vector.broadcast %299 : f32 to vector<4x64xf32>
    %301 = arith.mulf %202, %300 : vector<4x64xf32>
    %302 = arith.addf %298, %301 : vector<4x64xf32>
    %c23_51 = arith.constant 23 : index
    %303 = memref.load %arg6[%c23_51] : memref<128xf32, #tpu.memory_space<smem>>
    %304 = vector.broadcast %303 : f32 to vector<4x64xf32>
    %305 = arith.mulf %203, %304 : vector<4x64xf32>
    %306 = arith.addf %302, %305 : vector<4x64xf32>
    %c2_52 = arith.constant 2 : index
    %307 = memref.load %arg7[%c2_52] : memref<16xf32, #tpu.memory_space<smem>>
    %308 = vector.broadcast %307 : f32 to vector<4x64xf32>
    %309 = arith.addf %306, %308 : vector<4x64xf32>
    %cst_53 = arith.constant 0.000000e+00 : f32
    %310 = vector.broadcast %cst_53 : f32 to vector<4x64xf32>
    %311 = arith.maximumf %309, %310 : vector<4x64xf32>
    %c24_54 = arith.constant 24 : index
    %312 = memref.load %arg6[%c24_54] : memref<128xf32, #tpu.memory_space<smem>>
    %313 = vector.broadcast %312 : f32 to vector<4x64xf32>
    %314 = arith.mulf %196, %313 : vector<4x64xf32>
    %c25_55 = arith.constant 25 : index
    %315 = memref.load %arg6[%c25_55] : memref<128xf32, #tpu.memory_space<smem>>
    %316 = vector.broadcast %315 : f32 to vector<4x64xf32>
    %317 = arith.mulf %197, %316 : vector<4x64xf32>
    %318 = arith.addf %314, %317 : vector<4x64xf32>
    %c26_56 = arith.constant 26 : index
    %319 = memref.load %arg6[%c26_56] : memref<128xf32, #tpu.memory_space<smem>>
    %320 = vector.broadcast %319 : f32 to vector<4x64xf32>
    %321 = arith.mulf %198, %320 : vector<4x64xf32>
    %322 = arith.addf %318, %321 : vector<4x64xf32>
    %c27_57 = arith.constant 27 : index
    %323 = memref.load %arg6[%c27_57] : memref<128xf32, #tpu.memory_space<smem>>
    %324 = vector.broadcast %323 : f32 to vector<4x64xf32>
    %325 = arith.mulf %199, %324 : vector<4x64xf32>
    %326 = arith.addf %322, %325 : vector<4x64xf32>
    %c28_58 = arith.constant 28 : index
    %327 = memref.load %arg6[%c28_58] : memref<128xf32, #tpu.memory_space<smem>>
    %328 = vector.broadcast %327 : f32 to vector<4x64xf32>
    %329 = arith.mulf %200, %328 : vector<4x64xf32>
    %330 = arith.addf %326, %329 : vector<4x64xf32>
    %c29_59 = arith.constant 29 : index
    %331 = memref.load %arg6[%c29_59] : memref<128xf32, #tpu.memory_space<smem>>
    %332 = vector.broadcast %331 : f32 to vector<4x64xf32>
    %333 = arith.mulf %201, %332 : vector<4x64xf32>
    %334 = arith.addf %330, %333 : vector<4x64xf32>
    %c30_60 = arith.constant 30 : index
    %335 = memref.load %arg6[%c30_60] : memref<128xf32, #tpu.memory_space<smem>>
    %336 = vector.broadcast %335 : f32 to vector<4x64xf32>
    %337 = arith.mulf %202, %336 : vector<4x64xf32>
    %338 = arith.addf %334, %337 : vector<4x64xf32>
    %c31_61 = arith.constant 31 : index
    %339 = memref.load %arg6[%c31_61] : memref<128xf32, #tpu.memory_space<smem>>
    %340 = vector.broadcast %339 : f32 to vector<4x64xf32>
    %341 = arith.mulf %203, %340 : vector<4x64xf32>
    %342 = arith.addf %338, %341 : vector<4x64xf32>
    %c3_62 = arith.constant 3 : index
    %343 = memref.load %arg7[%c3_62] : memref<16xf32, #tpu.memory_space<smem>>
    %344 = vector.broadcast %343 : f32 to vector<4x64xf32>
    %345 = arith.addf %342, %344 : vector<4x64xf32>
    %cst_63 = arith.constant 0.000000e+00 : f32
    %346 = vector.broadcast %cst_63 : f32 to vector<4x64xf32>
    %347 = arith.maximumf %345, %346 : vector<4x64xf32>
    %c32 = arith.constant 32 : index
    %348 = memref.load %arg6[%c32] : memref<128xf32, #tpu.memory_space<smem>>
    %349 = vector.broadcast %348 : f32 to vector<4x64xf32>
    %350 = arith.mulf %196, %349 : vector<4x64xf32>
    %c33 = arith.constant 33 : index
    %351 = memref.load %arg6[%c33] : memref<128xf32, #tpu.memory_space<smem>>
    %352 = vector.broadcast %351 : f32 to vector<4x64xf32>
    %353 = arith.mulf %197, %352 : vector<4x64xf32>
    %354 = arith.addf %350, %353 : vector<4x64xf32>
    %c34 = arith.constant 34 : index
    %355 = memref.load %arg6[%c34] : memref<128xf32, #tpu.memory_space<smem>>
    %356 = vector.broadcast %355 : f32 to vector<4x64xf32>
    %357 = arith.mulf %198, %356 : vector<4x64xf32>
    %358 = arith.addf %354, %357 : vector<4x64xf32>
    %c35 = arith.constant 35 : index
    %359 = memref.load %arg6[%c35] : memref<128xf32, #tpu.memory_space<smem>>
    %360 = vector.broadcast %359 : f32 to vector<4x64xf32>
    %361 = arith.mulf %199, %360 : vector<4x64xf32>
    %362 = arith.addf %358, %361 : vector<4x64xf32>
    %c36 = arith.constant 36 : index
    %363 = memref.load %arg6[%c36] : memref<128xf32, #tpu.memory_space<smem>>
    %364 = vector.broadcast %363 : f32 to vector<4x64xf32>
    %365 = arith.mulf %200, %364 : vector<4x64xf32>
    %366 = arith.addf %362, %365 : vector<4x64xf32>
    %c37 = arith.constant 37 : index
    %367 = memref.load %arg6[%c37] : memref<128xf32, #tpu.memory_space<smem>>
    %368 = vector.broadcast %367 : f32 to vector<4x64xf32>
    %369 = arith.mulf %201, %368 : vector<4x64xf32>
    %370 = arith.addf %366, %369 : vector<4x64xf32>
    %c38 = arith.constant 38 : index
    %371 = memref.load %arg6[%c38] : memref<128xf32, #tpu.memory_space<smem>>
    %372 = vector.broadcast %371 : f32 to vector<4x64xf32>
    %373 = arith.mulf %202, %372 : vector<4x64xf32>
    %374 = arith.addf %370, %373 : vector<4x64xf32>
    %c39 = arith.constant 39 : index
    %375 = memref.load %arg6[%c39] : memref<128xf32, #tpu.memory_space<smem>>
    %376 = vector.broadcast %375 : f32 to vector<4x64xf32>
    %377 = arith.mulf %203, %376 : vector<4x64xf32>
    %378 = arith.addf %374, %377 : vector<4x64xf32>
    %c4_64 = arith.constant 4 : index
    %379 = memref.load %arg7[%c4_64] : memref<16xf32, #tpu.memory_space<smem>>
    %380 = vector.broadcast %379 : f32 to vector<4x64xf32>
    %381 = arith.addf %378, %380 : vector<4x64xf32>
    %cst_65 = arith.constant 0.000000e+00 : f32
    %382 = vector.broadcast %cst_65 : f32 to vector<4x64xf32>
    %383 = arith.maximumf %381, %382 : vector<4x64xf32>
    %c40 = arith.constant 40 : index
    %384 = memref.load %arg6[%c40] : memref<128xf32, #tpu.memory_space<smem>>
    %385 = vector.broadcast %384 : f32 to vector<4x64xf32>
    %386 = arith.mulf %196, %385 : vector<4x64xf32>
    %c41 = arith.constant 41 : index
    %387 = memref.load %arg6[%c41] : memref<128xf32, #tpu.memory_space<smem>>
    %388 = vector.broadcast %387 : f32 to vector<4x64xf32>
    %389 = arith.mulf %197, %388 : vector<4x64xf32>
    %390 = arith.addf %386, %389 : vector<4x64xf32>
    %c42 = arith.constant 42 : index
    %391 = memref.load %arg6[%c42] : memref<128xf32, #tpu.memory_space<smem>>
    %392 = vector.broadcast %391 : f32 to vector<4x64xf32>
    %393 = arith.mulf %198, %392 : vector<4x64xf32>
    %394 = arith.addf %390, %393 : vector<4x64xf32>
    %c43 = arith.constant 43 : index
    %395 = memref.load %arg6[%c43] : memref<128xf32, #tpu.memory_space<smem>>
    %396 = vector.broadcast %395 : f32 to vector<4x64xf32>
    %397 = arith.mulf %199, %396 : vector<4x64xf32>
    %398 = arith.addf %394, %397 : vector<4x64xf32>
    %c44 = arith.constant 44 : index
    %399 = memref.load %arg6[%c44] : memref<128xf32, #tpu.memory_space<smem>>
    %400 = vector.broadcast %399 : f32 to vector<4x64xf32>
    %401 = arith.mulf %200, %400 : vector<4x64xf32>
    %402 = arith.addf %398, %401 : vector<4x64xf32>
    %c45 = arith.constant 45 : index
    %403 = memref.load %arg6[%c45] : memref<128xf32, #tpu.memory_space<smem>>
    %404 = vector.broadcast %403 : f32 to vector<4x64xf32>
    %405 = arith.mulf %201, %404 : vector<4x64xf32>
    %406 = arith.addf %402, %405 : vector<4x64xf32>
    %c46 = arith.constant 46 : index
    %407 = memref.load %arg6[%c46] : memref<128xf32, #tpu.memory_space<smem>>
    %408 = vector.broadcast %407 : f32 to vector<4x64xf32>
    %409 = arith.mulf %202, %408 : vector<4x64xf32>
    %410 = arith.addf %406, %409 : vector<4x64xf32>
    %c47 = arith.constant 47 : index
    %411 = memref.load %arg6[%c47] : memref<128xf32, #tpu.memory_space<smem>>
    %412 = vector.broadcast %411 : f32 to vector<4x64xf32>
    %413 = arith.mulf %203, %412 : vector<4x64xf32>
    %414 = arith.addf %410, %413 : vector<4x64xf32>
    %c5_66 = arith.constant 5 : index
    %415 = memref.load %arg7[%c5_66] : memref<16xf32, #tpu.memory_space<smem>>
    %416 = vector.broadcast %415 : f32 to vector<4x64xf32>
    %417 = arith.addf %414, %416 : vector<4x64xf32>
    %cst_67 = arith.constant 0.000000e+00 : f32
    %418 = vector.broadcast %cst_67 : f32 to vector<4x64xf32>
    %419 = arith.maximumf %417, %418 : vector<4x64xf32>
    %c48 = arith.constant 48 : index
    %420 = memref.load %arg6[%c48] : memref<128xf32, #tpu.memory_space<smem>>
    %421 = vector.broadcast %420 : f32 to vector<4x64xf32>
    %422 = arith.mulf %196, %421 : vector<4x64xf32>
    %c49 = arith.constant 49 : index
    %423 = memref.load %arg6[%c49] : memref<128xf32, #tpu.memory_space<smem>>
    %424 = vector.broadcast %423 : f32 to vector<4x64xf32>
    %425 = arith.mulf %197, %424 : vector<4x64xf32>
    %426 = arith.addf %422, %425 : vector<4x64xf32>
    %c50 = arith.constant 50 : index
    %427 = memref.load %arg6[%c50] : memref<128xf32, #tpu.memory_space<smem>>
    %428 = vector.broadcast %427 : f32 to vector<4x64xf32>
    %429 = arith.mulf %198, %428 : vector<4x64xf32>
    %430 = arith.addf %426, %429 : vector<4x64xf32>
    %c51 = arith.constant 51 : index
    %431 = memref.load %arg6[%c51] : memref<128xf32, #tpu.memory_space<smem>>
    %432 = vector.broadcast %431 : f32 to vector<4x64xf32>
    %433 = arith.mulf %199, %432 : vector<4x64xf32>
    %434 = arith.addf %430, %433 : vector<4x64xf32>
    %c52 = arith.constant 52 : index
    %435 = memref.load %arg6[%c52] : memref<128xf32, #tpu.memory_space<smem>>
    %436 = vector.broadcast %435 : f32 to vector<4x64xf32>
    %437 = arith.mulf %200, %436 : vector<4x64xf32>
    %438 = arith.addf %434, %437 : vector<4x64xf32>
    %c53 = arith.constant 53 : index
    %439 = memref.load %arg6[%c53] : memref<128xf32, #tpu.memory_space<smem>>
    %440 = vector.broadcast %439 : f32 to vector<4x64xf32>
    %441 = arith.mulf %201, %440 : vector<4x64xf32>
    %442 = arith.addf %438, %441 : vector<4x64xf32>
    %c54 = arith.constant 54 : index
    %443 = memref.load %arg6[%c54] : memref<128xf32, #tpu.memory_space<smem>>
    %444 = vector.broadcast %443 : f32 to vector<4x64xf32>
    %445 = arith.mulf %202, %444 : vector<4x64xf32>
    %446 = arith.addf %442, %445 : vector<4x64xf32>
    %c55 = arith.constant 55 : index
    %447 = memref.load %arg6[%c55] : memref<128xf32, #tpu.memory_space<smem>>
    %448 = vector.broadcast %447 : f32 to vector<4x64xf32>
    %449 = arith.mulf %203, %448 : vector<4x64xf32>
    %450 = arith.addf %446, %449 : vector<4x64xf32>
    %c6_68 = arith.constant 6 : index
    %451 = memref.load %arg7[%c6_68] : memref<16xf32, #tpu.memory_space<smem>>
    %452 = vector.broadcast %451 : f32 to vector<4x64xf32>
    %453 = arith.addf %450, %452 : vector<4x64xf32>
    %cst_69 = arith.constant 0.000000e+00 : f32
    %454 = vector.broadcast %cst_69 : f32 to vector<4x64xf32>
    %455 = arith.maximumf %453, %454 : vector<4x64xf32>
    %c56 = arith.constant 56 : index
    %456 = memref.load %arg6[%c56] : memref<128xf32, #tpu.memory_space<smem>>
    %457 = vector.broadcast %456 : f32 to vector<4x64xf32>
    %458 = arith.mulf %196, %457 : vector<4x64xf32>
    %c57 = arith.constant 57 : index
    %459 = memref.load %arg6[%c57] : memref<128xf32, #tpu.memory_space<smem>>
    %460 = vector.broadcast %459 : f32 to vector<4x64xf32>
    %461 = arith.mulf %197, %460 : vector<4x64xf32>
    %462 = arith.addf %458, %461 : vector<4x64xf32>
    %c58 = arith.constant 58 : index
    %463 = memref.load %arg6[%c58] : memref<128xf32, #tpu.memory_space<smem>>
    %464 = vector.broadcast %463 : f32 to vector<4x64xf32>
    %465 = arith.mulf %198, %464 : vector<4x64xf32>
    %466 = arith.addf %462, %465 : vector<4x64xf32>
    %c59 = arith.constant 59 : index
    %467 = memref.load %arg6[%c59] : memref<128xf32, #tpu.memory_space<smem>>
    %468 = vector.broadcast %467 : f32 to vector<4x64xf32>
    %469 = arith.mulf %199, %468 : vector<4x64xf32>
    %470 = arith.addf %466, %469 : vector<4x64xf32>
    %c60 = arith.constant 60 : index
    %471 = memref.load %arg6[%c60] : memref<128xf32, #tpu.memory_space<smem>>
    %472 = vector.broadcast %471 : f32 to vector<4x64xf32>
    %473 = arith.mulf %200, %472 : vector<4x64xf32>
    %474 = arith.addf %470, %473 : vector<4x64xf32>
    %c61 = arith.constant 61 : index
    %475 = memref.load %arg6[%c61] : memref<128xf32, #tpu.memory_space<smem>>
    %476 = vector.broadcast %475 : f32 to vector<4x64xf32>
    %477 = arith.mulf %201, %476 : vector<4x64xf32>
    %478 = arith.addf %474, %477 : vector<4x64xf32>
    %c62 = arith.constant 62 : index
    %479 = memref.load %arg6[%c62] : memref<128xf32, #tpu.memory_space<smem>>
    %480 = vector.broadcast %479 : f32 to vector<4x64xf32>
    %481 = arith.mulf %202, %480 : vector<4x64xf32>
    %482 = arith.addf %478, %481 : vector<4x64xf32>
    %c63 = arith.constant 63 : index
    %483 = memref.load %arg6[%c63] : memref<128xf32, #tpu.memory_space<smem>>
    %484 = vector.broadcast %483 : f32 to vector<4x64xf32>
    %485 = arith.mulf %203, %484 : vector<4x64xf32>
    %486 = arith.addf %482, %485 : vector<4x64xf32>
    %c7_70 = arith.constant 7 : index
    %487 = memref.load %arg7[%c7_70] : memref<16xf32, #tpu.memory_space<smem>>
    %488 = vector.broadcast %487 : f32 to vector<4x64xf32>
    %489 = arith.addf %486, %488 : vector<4x64xf32>
    %cst_71 = arith.constant 0.000000e+00 : f32
    %490 = vector.broadcast %cst_71 : f32 to vector<4x64xf32>
    %491 = arith.maximumf %489, %490 : vector<4x64xf32>
    %c0_72 = arith.constant 0 : index
    %492 = memref.load %arg8[%c0_72] : memref<32xf32, #tpu.memory_space<smem>>
    %493 = vector.broadcast %492 : f32 to vector<4x4x64xf32>
    %494 = arith.mulf %21, %493 : vector<4x4x64xf32>
    %c1_73 = arith.constant 1 : index
    %495 = memref.load %arg8[%c1_73] : memref<32xf32, #tpu.memory_space<smem>>
    %496 = vector.broadcast %495 : f32 to vector<4x4x64xf32>
    %497 = arith.mulf %23, %496 : vector<4x4x64xf32>
    %498 = arith.addf %494, %497 : vector<4x4x64xf32>
    %c2_74 = arith.constant 2 : index
    %499 = memref.load %arg8[%c2_74] : memref<32xf32, #tpu.memory_space<smem>>
    %500 = vector.broadcast %499 : f32 to vector<4x4x64xf32>
    %501 = arith.mulf %25, %500 : vector<4x4x64xf32>
    %502 = arith.addf %498, %501 : vector<4x4x64xf32>
    %c3_75 = arith.constant 3 : index
    %503 = memref.load %arg8[%c3_75] : memref<32xf32, #tpu.memory_space<smem>>
    %504 = vector.broadcast %503 : f32 to vector<4x4x64xf32>
    %505 = arith.mulf %27, %504 : vector<4x4x64xf32>
    %506 = arith.addf %502, %505 : vector<4x4x64xf32>
    %c0_76 = arith.constant 0 : index
    %507 = memref.load %arg9[%c0_76] : memref<8xf32, #tpu.memory_space<smem>>
    %508 = vector.broadcast %507 : f32 to vector<4x4x64xf32>
    %509 = arith.addf %506, %508 : vector<4x4x64xf32>
    %cst_77 = arith.constant 0.000000e+00 : f32
    %510 = vector.broadcast %cst_77 : f32 to vector<4x4x64xf32>
    %511 = arith.maximumf %509, %510 : vector<4x4x64xf32>
    %c4_78 = arith.constant 4 : index
    %512 = memref.load %arg8[%c4_78] : memref<32xf32, #tpu.memory_space<smem>>
    %513 = vector.broadcast %512 : f32 to vector<4x4x64xf32>
    %514 = arith.mulf %21, %513 : vector<4x4x64xf32>
    %c5_79 = arith.constant 5 : index
    %515 = memref.load %arg8[%c5_79] : memref<32xf32, #tpu.memory_space<smem>>
    %516 = vector.broadcast %515 : f32 to vector<4x4x64xf32>
    %517 = arith.mulf %23, %516 : vector<4x4x64xf32>
    %518 = arith.addf %514, %517 : vector<4x4x64xf32>
    %c6_80 = arith.constant 6 : index
    %519 = memref.load %arg8[%c6_80] : memref<32xf32, #tpu.memory_space<smem>>
    %520 = vector.broadcast %519 : f32 to vector<4x4x64xf32>
    %521 = arith.mulf %25, %520 : vector<4x4x64xf32>
    %522 = arith.addf %518, %521 : vector<4x4x64xf32>
    %c7_81 = arith.constant 7 : index
    %523 = memref.load %arg8[%c7_81] : memref<32xf32, #tpu.memory_space<smem>>
    %524 = vector.broadcast %523 : f32 to vector<4x4x64xf32>
    %525 = arith.mulf %27, %524 : vector<4x4x64xf32>
    %526 = arith.addf %522, %525 : vector<4x4x64xf32>
    %c1_82 = arith.constant 1 : index
    %527 = memref.load %arg9[%c1_82] : memref<8xf32, #tpu.memory_space<smem>>
    %528 = vector.broadcast %527 : f32 to vector<4x4x64xf32>
    %529 = arith.addf %526, %528 : vector<4x4x64xf32>
    %cst_83 = arith.constant 0.000000e+00 : f32
    %530 = vector.broadcast %cst_83 : f32 to vector<4x4x64xf32>
    %531 = arith.maximumf %529, %530 : vector<4x4x64xf32>
    %c8_84 = arith.constant 8 : index
    %532 = memref.load %arg8[%c8_84] : memref<32xf32, #tpu.memory_space<smem>>
    %533 = vector.broadcast %532 : f32 to vector<4x4x64xf32>
    %534 = arith.mulf %21, %533 : vector<4x4x64xf32>
    %c9_85 = arith.constant 9 : index
    %535 = memref.load %arg8[%c9_85] : memref<32xf32, #tpu.memory_space<smem>>
    %536 = vector.broadcast %535 : f32 to vector<4x4x64xf32>
    %537 = arith.mulf %23, %536 : vector<4x4x64xf32>
    %538 = arith.addf %534, %537 : vector<4x4x64xf32>
    %c10_86 = arith.constant 10 : index
    %539 = memref.load %arg8[%c10_86] : memref<32xf32, #tpu.memory_space<smem>>
    %540 = vector.broadcast %539 : f32 to vector<4x4x64xf32>
    %541 = arith.mulf %25, %540 : vector<4x4x64xf32>
    %542 = arith.addf %538, %541 : vector<4x4x64xf32>
    %c11_87 = arith.constant 11 : index
    %543 = memref.load %arg8[%c11_87] : memref<32xf32, #tpu.memory_space<smem>>
    %544 = vector.broadcast %543 : f32 to vector<4x4x64xf32>
    %545 = arith.mulf %27, %544 : vector<4x4x64xf32>
    %546 = arith.addf %542, %545 : vector<4x4x64xf32>
    %c2_88 = arith.constant 2 : index
    %547 = memref.load %arg9[%c2_88] : memref<8xf32, #tpu.memory_space<smem>>
    %548 = vector.broadcast %547 : f32 to vector<4x4x64xf32>
    %549 = arith.addf %546, %548 : vector<4x4x64xf32>
    %cst_89 = arith.constant 0.000000e+00 : f32
    %550 = vector.broadcast %cst_89 : f32 to vector<4x4x64xf32>
    %551 = arith.maximumf %549, %550 : vector<4x4x64xf32>
    %c12_90 = arith.constant 12 : index
    %552 = memref.load %arg8[%c12_90] : memref<32xf32, #tpu.memory_space<smem>>
    %553 = vector.broadcast %552 : f32 to vector<4x4x64xf32>
    %554 = arith.mulf %21, %553 : vector<4x4x64xf32>
    %c13_91 = arith.constant 13 : index
    %555 = memref.load %arg8[%c13_91] : memref<32xf32, #tpu.memory_space<smem>>
    %556 = vector.broadcast %555 : f32 to vector<4x4x64xf32>
    %557 = arith.mulf %23, %556 : vector<4x4x64xf32>
    %558 = arith.addf %554, %557 : vector<4x4x64xf32>
    %c14_92 = arith.constant 14 : index
    %559 = memref.load %arg8[%c14_92] : memref<32xf32, #tpu.memory_space<smem>>
    %560 = vector.broadcast %559 : f32 to vector<4x4x64xf32>
    %561 = arith.mulf %25, %560 : vector<4x4x64xf32>
    %562 = arith.addf %558, %561 : vector<4x4x64xf32>
    %c15_93 = arith.constant 15 : index
    %563 = memref.load %arg8[%c15_93] : memref<32xf32, #tpu.memory_space<smem>>
    %564 = vector.broadcast %563 : f32 to vector<4x4x64xf32>
    %565 = arith.mulf %27, %564 : vector<4x4x64xf32>
    %566 = arith.addf %562, %565 : vector<4x4x64xf32>
    %c3_94 = arith.constant 3 : index
    %567 = memref.load %arg9[%c3_94] : memref<8xf32, #tpu.memory_space<smem>>
    %568 = vector.broadcast %567 : f32 to vector<4x4x64xf32>
    %569 = arith.addf %566, %568 : vector<4x4x64xf32>
    %cst_95 = arith.constant 0.000000e+00 : f32
    %570 = vector.broadcast %cst_95 : f32 to vector<4x4x64xf32>
    %571 = arith.maximumf %569, %570 : vector<4x4x64xf32>
    %572 = vector.extract_strided_slice %511 {offsets = [0, 0, 0], sizes = [4, 1, 64], strides = [1, 1, 1]} : vector<4x4x64xf32> to vector<4x1x64xf32>
    %573 = vector.shape_cast %572 : vector<4x1x64xf32> to vector<4x64xf32>
    %574 = vector.extract_strided_slice %531 {offsets = [0, 0, 0], sizes = [4, 1, 64], strides = [1, 1, 1]} : vector<4x4x64xf32> to vector<4x1x64xf32>
    %575 = vector.shape_cast %574 : vector<4x1x64xf32> to vector<4x64xf32>
    %576 = vector.extract_strided_slice %551 {offsets = [0, 0, 0], sizes = [4, 1, 64], strides = [1, 1, 1]} : vector<4x4x64xf32> to vector<4x1x64xf32>
    %577 = vector.shape_cast %576 : vector<4x1x64xf32> to vector<4x64xf32>
    %578 = vector.extract_strided_slice %571 {offsets = [0, 0, 0], sizes = [4, 1, 64], strides = [1, 1, 1]} : vector<4x4x64xf32> to vector<4x1x64xf32>
    %579 = vector.shape_cast %578 : vector<4x1x64xf32> to vector<4x64xf32>
    %c32_96 = arith.constant 32 : index
    %580 = memref.load %arg4[%c32_96] : memref<64xf32, #tpu.memory_space<smem>>
    %581 = vector.broadcast %580 : f32 to vector<4x64xf32>
    %582 = arith.mulf %573, %581 : vector<4x64xf32>
    %c33_97 = arith.constant 33 : index
    %583 = memref.load %arg4[%c33_97] : memref<64xf32, #tpu.memory_space<smem>>
    %584 = vector.broadcast %583 : f32 to vector<4x64xf32>
    %585 = arith.mulf %575, %584 : vector<4x64xf32>
    %586 = arith.addf %582, %585 : vector<4x64xf32>
    %c34_98 = arith.constant 34 : index
    %587 = memref.load %arg4[%c34_98] : memref<64xf32, #tpu.memory_space<smem>>
    %588 = vector.broadcast %587 : f32 to vector<4x64xf32>
    %589 = arith.mulf %577, %588 : vector<4x64xf32>
    %590 = arith.addf %586, %589 : vector<4x64xf32>
    %c35_99 = arith.constant 35 : index
    %591 = memref.load %arg4[%c35_99] : memref<64xf32, #tpu.memory_space<smem>>
    %592 = vector.broadcast %591 : f32 to vector<4x64xf32>
    %593 = arith.mulf %579, %592 : vector<4x64xf32>
    %594 = arith.addf %590, %593 : vector<4x64xf32>
    %c8_100 = arith.constant 8 : index
    %595 = memref.load %arg5[%c8_100] : memref<16xf32, #tpu.memory_space<smem>>
    %596 = vector.broadcast %595 : f32 to vector<4x64xf32>
    %597 = arith.addf %594, %596 : vector<4x64xf32>
    %cst_101 = arith.constant 0.000000e+00 : f32
    %598 = vector.broadcast %cst_101 : f32 to vector<4x64xf32>
    %599 = arith.maximumf %597, %598 : vector<4x64xf32>
    %c36_102 = arith.constant 36 : index
    %600 = memref.load %arg4[%c36_102] : memref<64xf32, #tpu.memory_space<smem>>
    %601 = vector.broadcast %600 : f32 to vector<4x64xf32>
    %602 = arith.mulf %573, %601 : vector<4x64xf32>
    %c37_103 = arith.constant 37 : index
    %603 = memref.load %arg4[%c37_103] : memref<64xf32, #tpu.memory_space<smem>>
    %604 = vector.broadcast %603 : f32 to vector<4x64xf32>
    %605 = arith.mulf %575, %604 : vector<4x64xf32>
    %606 = arith.addf %602, %605 : vector<4x64xf32>
    %c38_104 = arith.constant 38 : index
    %607 = memref.load %arg4[%c38_104] : memref<64xf32, #tpu.memory_space<smem>>
    %608 = vector.broadcast %607 : f32 to vector<4x64xf32>
    %609 = arith.mulf %577, %608 : vector<4x64xf32>
    %610 = arith.addf %606, %609 : vector<4x64xf32>
    %c39_105 = arith.constant 39 : index
    %611 = memref.load %arg4[%c39_105] : memref<64xf32, #tpu.memory_space<smem>>
    %612 = vector.broadcast %611 : f32 to vector<4x64xf32>
    %613 = arith.mulf %579, %612 : vector<4x64xf32>
    %614 = arith.addf %610, %613 : vector<4x64xf32>
    %c9_106 = arith.constant 9 : index
    %615 = memref.load %arg5[%c9_106] : memref<16xf32, #tpu.memory_space<smem>>
    %616 = vector.broadcast %615 : f32 to vector<4x64xf32>
    %617 = arith.addf %614, %616 : vector<4x64xf32>
    %cst_107 = arith.constant 0.000000e+00 : f32
    %618 = vector.broadcast %cst_107 : f32 to vector<4x64xf32>
    %619 = arith.maximumf %617, %618 : vector<4x64xf32>
    %c40_108 = arith.constant 40 : index
    %620 = memref.load %arg4[%c40_108] : memref<64xf32, #tpu.memory_space<smem>>
    %621 = vector.broadcast %620 : f32 to vector<4x64xf32>
    %622 = arith.mulf %573, %621 : vector<4x64xf32>
    %c41_109 = arith.constant 41 : index
    %623 = memref.load %arg4[%c41_109] : memref<64xf32, #tpu.memory_space<smem>>
    %624 = vector.broadcast %623 : f32 to vector<4x64xf32>
    %625 = arith.mulf %575, %624 : vector<4x64xf32>
    %626 = arith.addf %622, %625 : vector<4x64xf32>
    %c42_110 = arith.constant 42 : index
    %627 = memref.load %arg4[%c42_110] : memref<64xf32, #tpu.memory_space<smem>>
    %628 = vector.broadcast %627 : f32 to vector<4x64xf32>
    %629 = arith.mulf %577, %628 : vector<4x64xf32>
    %630 = arith.addf %626, %629 : vector<4x64xf32>
    %c43_111 = arith.constant 43 : index
    %631 = memref.load %arg4[%c43_111] : memref<64xf32, #tpu.memory_space<smem>>
    %632 = vector.broadcast %631 : f32 to vector<4x64xf32>
    %633 = arith.mulf %579, %632 : vector<4x64xf32>
    %634 = arith.addf %630, %633 : vector<4x64xf32>
    %c10_112 = arith.constant 10 : index
    %635 = memref.load %arg5[%c10_112] : memref<16xf32, #tpu.memory_space<smem>>
    %636 = vector.broadcast %635 : f32 to vector<4x64xf32>
    %637 = arith.addf %634, %636 : vector<4x64xf32>
    %cst_113 = arith.constant 0.000000e+00 : f32
    %638 = vector.broadcast %cst_113 : f32 to vector<4x64xf32>
    %639 = arith.maximumf %637, %638 : vector<4x64xf32>
    %c44_114 = arith.constant 44 : index
    %640 = memref.load %arg4[%c44_114] : memref<64xf32, #tpu.memory_space<smem>>
    %641 = vector.broadcast %640 : f32 to vector<4x64xf32>
    %642 = arith.mulf %573, %641 : vector<4x64xf32>
    %c45_115 = arith.constant 45 : index
    %643 = memref.load %arg4[%c45_115] : memref<64xf32, #tpu.memory_space<smem>>
    %644 = vector.broadcast %643 : f32 to vector<4x64xf32>
    %645 = arith.mulf %575, %644 : vector<4x64xf32>
    %646 = arith.addf %642, %645 : vector<4x64xf32>
    %c46_116 = arith.constant 46 : index
    %647 = memref.load %arg4[%c46_116] : memref<64xf32, #tpu.memory_space<smem>>
    %648 = vector.broadcast %647 : f32 to vector<4x64xf32>
    %649 = arith.mulf %577, %648 : vector<4x64xf32>
    %650 = arith.addf %646, %649 : vector<4x64xf32>
    %c47_117 = arith.constant 47 : index
    %651 = memref.load %arg4[%c47_117] : memref<64xf32, #tpu.memory_space<smem>>
    %652 = vector.broadcast %651 : f32 to vector<4x64xf32>
    %653 = arith.mulf %579, %652 : vector<4x64xf32>
    %654 = arith.addf %650, %653 : vector<4x64xf32>
    %c11_118 = arith.constant 11 : index
    %655 = memref.load %arg5[%c11_118] : memref<16xf32, #tpu.memory_space<smem>>
    %656 = vector.broadcast %655 : f32 to vector<4x64xf32>
    %657 = arith.addf %654, %656 : vector<4x64xf32>
    %cst_119 = arith.constant 0.000000e+00 : f32
    %658 = vector.broadcast %cst_119 : f32 to vector<4x64xf32>
    %659 = arith.maximumf %657, %658 : vector<4x64xf32>
    %c48_120 = arith.constant 48 : index
    %660 = memref.load %arg4[%c48_120] : memref<64xf32, #tpu.memory_space<smem>>
    %661 = vector.broadcast %660 : f32 to vector<4x64xf32>
    %662 = arith.mulf %573, %661 : vector<4x64xf32>
    %c49_121 = arith.constant 49 : index
    %663 = memref.load %arg4[%c49_121] : memref<64xf32, #tpu.memory_space<smem>>
    %664 = vector.broadcast %663 : f32 to vector<4x64xf32>
    %665 = arith.mulf %575, %664 : vector<4x64xf32>
    %666 = arith.addf %662, %665 : vector<4x64xf32>
    %c50_122 = arith.constant 50 : index
    %667 = memref.load %arg4[%c50_122] : memref<64xf32, #tpu.memory_space<smem>>
    %668 = vector.broadcast %667 : f32 to vector<4x64xf32>
    %669 = arith.mulf %577, %668 : vector<4x64xf32>
    %670 = arith.addf %666, %669 : vector<4x64xf32>
    %c51_123 = arith.constant 51 : index
    %671 = memref.load %arg4[%c51_123] : memref<64xf32, #tpu.memory_space<smem>>
    %672 = vector.broadcast %671 : f32 to vector<4x64xf32>
    %673 = arith.mulf %579, %672 : vector<4x64xf32>
    %674 = arith.addf %670, %673 : vector<4x64xf32>
    %c12_124 = arith.constant 12 : index
    %675 = memref.load %arg5[%c12_124] : memref<16xf32, #tpu.memory_space<smem>>
    %676 = vector.broadcast %675 : f32 to vector<4x64xf32>
    %677 = arith.addf %674, %676 : vector<4x64xf32>
    %cst_125 = arith.constant 0.000000e+00 : f32
    %678 = vector.broadcast %cst_125 : f32 to vector<4x64xf32>
    %679 = arith.maximumf %677, %678 : vector<4x64xf32>
    %c52_126 = arith.constant 52 : index
    %680 = memref.load %arg4[%c52_126] : memref<64xf32, #tpu.memory_space<smem>>
    %681 = vector.broadcast %680 : f32 to vector<4x64xf32>
    %682 = arith.mulf %573, %681 : vector<4x64xf32>
    %c53_127 = arith.constant 53 : index
    %683 = memref.load %arg4[%c53_127] : memref<64xf32, #tpu.memory_space<smem>>
    %684 = vector.broadcast %683 : f32 to vector<4x64xf32>
    %685 = arith.mulf %575, %684 : vector<4x64xf32>
    %686 = arith.addf %682, %685 : vector<4x64xf32>
    %c54_128 = arith.constant 54 : index
    %687 = memref.load %arg4[%c54_128] : memref<64xf32, #tpu.memory_space<smem>>
    %688 = vector.broadcast %687 : f32 to vector<4x64xf32>
    %689 = arith.mulf %577, %688 : vector<4x64xf32>
    %690 = arith.addf %686, %689 : vector<4x64xf32>
    %c55_129 = arith.constant 55 : index
    %691 = memref.load %arg4[%c55_129] : memref<64xf32, #tpu.memory_space<smem>>
    %692 = vector.broadcast %691 : f32 to vector<4x64xf32>
    %693 = arith.mulf %579, %692 : vector<4x64xf32>
    %694 = arith.addf %690, %693 : vector<4x64xf32>
    %c13_130 = arith.constant 13 : index
    %695 = memref.load %arg5[%c13_130] : memref<16xf32, #tpu.memory_space<smem>>
    %696 = vector.broadcast %695 : f32 to vector<4x64xf32>
    %697 = arith.addf %694, %696 : vector<4x64xf32>
    %cst_131 = arith.constant 0.000000e+00 : f32
    %698 = vector.broadcast %cst_131 : f32 to vector<4x64xf32>
    %699 = arith.maximumf %697, %698 : vector<4x64xf32>
    %c56_132 = arith.constant 56 : index
    %700 = memref.load %arg4[%c56_132] : memref<64xf32, #tpu.memory_space<smem>>
    %701 = vector.broadcast %700 : f32 to vector<4x64xf32>
    %702 = arith.mulf %573, %701 : vector<4x64xf32>
    %c57_133 = arith.constant 57 : index
    %703 = memref.load %arg4[%c57_133] : memref<64xf32, #tpu.memory_space<smem>>
    %704 = vector.broadcast %703 : f32 to vector<4x64xf32>
    %705 = arith.mulf %575, %704 : vector<4x64xf32>
    %706 = arith.addf %702, %705 : vector<4x64xf32>
    %c58_134 = arith.constant 58 : index
    %707 = memref.load %arg4[%c58_134] : memref<64xf32, #tpu.memory_space<smem>>
    %708 = vector.broadcast %707 : f32 to vector<4x64xf32>
    %709 = arith.mulf %577, %708 : vector<4x64xf32>
    %710 = arith.addf %706, %709 : vector<4x64xf32>
    %c59_135 = arith.constant 59 : index
    %711 = memref.load %arg4[%c59_135] : memref<64xf32, #tpu.memory_space<smem>>
    %712 = vector.broadcast %711 : f32 to vector<4x64xf32>
    %713 = arith.mulf %579, %712 : vector<4x64xf32>
    %714 = arith.addf %710, %713 : vector<4x64xf32>
    %c14_136 = arith.constant 14 : index
    %715 = memref.load %arg5[%c14_136] : memref<16xf32, #tpu.memory_space<smem>>
    %716 = vector.broadcast %715 : f32 to vector<4x64xf32>
    %717 = arith.addf %714, %716 : vector<4x64xf32>
    %cst_137 = arith.constant 0.000000e+00 : f32
    %718 = vector.broadcast %cst_137 : f32 to vector<4x64xf32>
    %719 = arith.maximumf %717, %718 : vector<4x64xf32>
    %c60_138 = arith.constant 60 : index
    %720 = memref.load %arg4[%c60_138] : memref<64xf32, #tpu.memory_space<smem>>
    %721 = vector.broadcast %720 : f32 to vector<4x64xf32>
    %722 = arith.mulf %573, %721 : vector<4x64xf32>
    %c61_139 = arith.constant 61 : index
    %723 = memref.load %arg4[%c61_139] : memref<64xf32, #tpu.memory_space<smem>>
    %724 = vector.broadcast %723 : f32 to vector<4x64xf32>
    %725 = arith.mulf %575, %724 : vector<4x64xf32>
    %726 = arith.addf %722, %725 : vector<4x64xf32>
    %c62_140 = arith.constant 62 : index
    %727 = memref.load %arg4[%c62_140] : memref<64xf32, #tpu.memory_space<smem>>
    %728 = vector.broadcast %727 : f32 to vector<4x64xf32>
    %729 = arith.mulf %577, %728 : vector<4x64xf32>
    %730 = arith.addf %726, %729 : vector<4x64xf32>
    %c63_141 = arith.constant 63 : index
    %731 = memref.load %arg4[%c63_141] : memref<64xf32, #tpu.memory_space<smem>>
    %732 = vector.broadcast %731 : f32 to vector<4x64xf32>
    %733 = arith.mulf %579, %732 : vector<4x64xf32>
    %734 = arith.addf %730, %733 : vector<4x64xf32>
    %c15_142 = arith.constant 15 : index
    %735 = memref.load %arg5[%c15_142] : memref<16xf32, #tpu.memory_space<smem>>
    %736 = vector.broadcast %735 : f32 to vector<4x64xf32>
    %737 = arith.addf %734, %736 : vector<4x64xf32>
    %cst_143 = arith.constant 0.000000e+00 : f32
    %738 = vector.broadcast %cst_143 : f32 to vector<4x64xf32>
    %739 = arith.maximumf %737, %738 : vector<4x64xf32>
    %740 = arith.addf %239, %599 : vector<4x64xf32>
    %741 = arith.addf %275, %619 : vector<4x64xf32>
    %742 = arith.addf %311, %639 : vector<4x64xf32>
    %743 = arith.addf %347, %659 : vector<4x64xf32>
    %744 = arith.addf %383, %679 : vector<4x64xf32>
    %745 = arith.addf %419, %699 : vector<4x64xf32>
    %746 = arith.addf %455, %719 : vector<4x64xf32>
    %747 = arith.addf %491, %739 : vector<4x64xf32>
    %c64 = arith.constant 64 : index
    %748 = memref.load %arg6[%c64] : memref<128xf32, #tpu.memory_space<smem>>
    %749 = vector.broadcast %748 : f32 to vector<4x64xf32>
    %750 = arith.mulf %740, %749 : vector<4x64xf32>
    %c65 = arith.constant 65 : index
    %751 = memref.load %arg6[%c65] : memref<128xf32, #tpu.memory_space<smem>>
    %752 = vector.broadcast %751 : f32 to vector<4x64xf32>
    %753 = arith.mulf %741, %752 : vector<4x64xf32>
    %754 = arith.addf %750, %753 : vector<4x64xf32>
    %c66 = arith.constant 66 : index
    %755 = memref.load %arg6[%c66] : memref<128xf32, #tpu.memory_space<smem>>
    %756 = vector.broadcast %755 : f32 to vector<4x64xf32>
    %757 = arith.mulf %742, %756 : vector<4x64xf32>
    %758 = arith.addf %754, %757 : vector<4x64xf32>
    %c67 = arith.constant 67 : index
    %759 = memref.load %arg6[%c67] : memref<128xf32, #tpu.memory_space<smem>>
    %760 = vector.broadcast %759 : f32 to vector<4x64xf32>
    %761 = arith.mulf %743, %760 : vector<4x64xf32>
    %762 = arith.addf %758, %761 : vector<4x64xf32>
    %c68 = arith.constant 68 : index
    %763 = memref.load %arg6[%c68] : memref<128xf32, #tpu.memory_space<smem>>
    %764 = vector.broadcast %763 : f32 to vector<4x64xf32>
    %765 = arith.mulf %744, %764 : vector<4x64xf32>
    %766 = arith.addf %762, %765 : vector<4x64xf32>
    %c69 = arith.constant 69 : index
    %767 = memref.load %arg6[%c69] : memref<128xf32, #tpu.memory_space<smem>>
    %768 = vector.broadcast %767 : f32 to vector<4x64xf32>
    %769 = arith.mulf %745, %768 : vector<4x64xf32>
    %770 = arith.addf %766, %769 : vector<4x64xf32>
    %c70 = arith.constant 70 : index
    %771 = memref.load %arg6[%c70] : memref<128xf32, #tpu.memory_space<smem>>
    %772 = vector.broadcast %771 : f32 to vector<4x64xf32>
    %773 = arith.mulf %746, %772 : vector<4x64xf32>
    %774 = arith.addf %770, %773 : vector<4x64xf32>
    %c71 = arith.constant 71 : index
    %775 = memref.load %arg6[%c71] : memref<128xf32, #tpu.memory_space<smem>>
    %776 = vector.broadcast %775 : f32 to vector<4x64xf32>
    %777 = arith.mulf %747, %776 : vector<4x64xf32>
    %778 = arith.addf %774, %777 : vector<4x64xf32>
    %c8_144 = arith.constant 8 : index
    %779 = memref.load %arg7[%c8_144] : memref<16xf32, #tpu.memory_space<smem>>
    %780 = vector.broadcast %779 : f32 to vector<4x64xf32>
    %781 = arith.addf %778, %780 : vector<4x64xf32>
    %cst_145 = arith.constant 0.000000e+00 : f32
    %782 = vector.broadcast %cst_145 : f32 to vector<4x64xf32>
    %783 = arith.maximumf %781, %782 : vector<4x64xf32>
    %c72 = arith.constant 72 : index
    %784 = memref.load %arg6[%c72] : memref<128xf32, #tpu.memory_space<smem>>
    %785 = vector.broadcast %784 : f32 to vector<4x64xf32>
    %786 = arith.mulf %740, %785 : vector<4x64xf32>
    %c73 = arith.constant 73 : index
    %787 = memref.load %arg6[%c73] : memref<128xf32, #tpu.memory_space<smem>>
    %788 = vector.broadcast %787 : f32 to vector<4x64xf32>
    %789 = arith.mulf %741, %788 : vector<4x64xf32>
    %790 = arith.addf %786, %789 : vector<4x64xf32>
    %c74 = arith.constant 74 : index
    %791 = memref.load %arg6[%c74] : memref<128xf32, #tpu.memory_space<smem>>
    %792 = vector.broadcast %791 : f32 to vector<4x64xf32>
    %793 = arith.mulf %742, %792 : vector<4x64xf32>
    %794 = arith.addf %790, %793 : vector<4x64xf32>
    %c75 = arith.constant 75 : index
    %795 = memref.load %arg6[%c75] : memref<128xf32, #tpu.memory_space<smem>>
    %796 = vector.broadcast %795 : f32 to vector<4x64xf32>
    %797 = arith.mulf %743, %796 : vector<4x64xf32>
    %798 = arith.addf %794, %797 : vector<4x64xf32>
    %c76 = arith.constant 76 : index
    %799 = memref.load %arg6[%c76] : memref<128xf32, #tpu.memory_space<smem>>
    %800 = vector.broadcast %799 : f32 to vector<4x64xf32>
    %801 = arith.mulf %744, %800 : vector<4x64xf32>
    %802 = arith.addf %798, %801 : vector<4x64xf32>
    %c77 = arith.constant 77 : index
    %803 = memref.load %arg6[%c77] : memref<128xf32, #tpu.memory_space<smem>>
    %804 = vector.broadcast %803 : f32 to vector<4x64xf32>
    %805 = arith.mulf %745, %804 : vector<4x64xf32>
    %806 = arith.addf %802, %805 : vector<4x64xf32>
    %c78 = arith.constant 78 : index
    %807 = memref.load %arg6[%c78] : memref<128xf32, #tpu.memory_space<smem>>
    %808 = vector.broadcast %807 : f32 to vector<4x64xf32>
    %809 = arith.mulf %746, %808 : vector<4x64xf32>
    %810 = arith.addf %806, %809 : vector<4x64xf32>
    %c79 = arith.constant 79 : index
    %811 = memref.load %arg6[%c79] : memref<128xf32, #tpu.memory_space<smem>>
    %812 = vector.broadcast %811 : f32 to vector<4x64xf32>
    %813 = arith.mulf %747, %812 : vector<4x64xf32>
    %814 = arith.addf %810, %813 : vector<4x64xf32>
    %c9_146 = arith.constant 9 : index
    %815 = memref.load %arg7[%c9_146] : memref<16xf32, #tpu.memory_space<smem>>
    %816 = vector.broadcast %815 : f32 to vector<4x64xf32>
    %817 = arith.addf %814, %816 : vector<4x64xf32>
    %cst_147 = arith.constant 0.000000e+00 : f32
    %818 = vector.broadcast %cst_147 : f32 to vector<4x64xf32>
    %819 = arith.maximumf %817, %818 : vector<4x64xf32>
    %c80 = arith.constant 80 : index
    %820 = memref.load %arg6[%c80] : memref<128xf32, #tpu.memory_space<smem>>
    %821 = vector.broadcast %820 : f32 to vector<4x64xf32>
    %822 = arith.mulf %740, %821 : vector<4x64xf32>
    %c81 = arith.constant 81 : index
    %823 = memref.load %arg6[%c81] : memref<128xf32, #tpu.memory_space<smem>>
    %824 = vector.broadcast %823 : f32 to vector<4x64xf32>
    %825 = arith.mulf %741, %824 : vector<4x64xf32>
    %826 = arith.addf %822, %825 : vector<4x64xf32>
    %c82 = arith.constant 82 : index
    %827 = memref.load %arg6[%c82] : memref<128xf32, #tpu.memory_space<smem>>
    %828 = vector.broadcast %827 : f32 to vector<4x64xf32>
    %829 = arith.mulf %742, %828 : vector<4x64xf32>
    %830 = arith.addf %826, %829 : vector<4x64xf32>
    %c83 = arith.constant 83 : index
    %831 = memref.load %arg6[%c83] : memref<128xf32, #tpu.memory_space<smem>>
    %832 = vector.broadcast %831 : f32 to vector<4x64xf32>
    %833 = arith.mulf %743, %832 : vector<4x64xf32>
    %834 = arith.addf %830, %833 : vector<4x64xf32>
    %c84 = arith.constant 84 : index
    %835 = memref.load %arg6[%c84] : memref<128xf32, #tpu.memory_space<smem>>
    %836 = vector.broadcast %835 : f32 to vector<4x64xf32>
    %837 = arith.mulf %744, %836 : vector<4x64xf32>
    %838 = arith.addf %834, %837 : vector<4x64xf32>
    %c85 = arith.constant 85 : index
    %839 = memref.load %arg6[%c85] : memref<128xf32, #tpu.memory_space<smem>>
    %840 = vector.broadcast %839 : f32 to vector<4x64xf32>
    %841 = arith.mulf %745, %840 : vector<4x64xf32>
    %842 = arith.addf %838, %841 : vector<4x64xf32>
    %c86 = arith.constant 86 : index
    %843 = memref.load %arg6[%c86] : memref<128xf32, #tpu.memory_space<smem>>
    %844 = vector.broadcast %843 : f32 to vector<4x64xf32>
    %845 = arith.mulf %746, %844 : vector<4x64xf32>
    %846 = arith.addf %842, %845 : vector<4x64xf32>
    %c87 = arith.constant 87 : index
    %847 = memref.load %arg6[%c87] : memref<128xf32, #tpu.memory_space<smem>>
    %848 = vector.broadcast %847 : f32 to vector<4x64xf32>
    %849 = arith.mulf %747, %848 : vector<4x64xf32>
    %850 = arith.addf %846, %849 : vector<4x64xf32>
    %c10_148 = arith.constant 10 : index
    %851 = memref.load %arg7[%c10_148] : memref<16xf32, #tpu.memory_space<smem>>
    %852 = vector.broadcast %851 : f32 to vector<4x64xf32>
    %853 = arith.addf %850, %852 : vector<4x64xf32>
    %cst_149 = arith.constant 0.000000e+00 : f32
    %854 = vector.broadcast %cst_149 : f32 to vector<4x64xf32>
    %855 = arith.maximumf %853, %854 : vector<4x64xf32>
    %c88 = arith.constant 88 : index
    %856 = memref.load %arg6[%c88] : memref<128xf32, #tpu.memory_space<smem>>
    %857 = vector.broadcast %856 : f32 to vector<4x64xf32>
    %858 = arith.mulf %740, %857 : vector<4x64xf32>
    %c89 = arith.constant 89 : index
    %859 = memref.load %arg6[%c89] : memref<128xf32, #tpu.memory_space<smem>>
    %860 = vector.broadcast %859 : f32 to vector<4x64xf32>
    %861 = arith.mulf %741, %860 : vector<4x64xf32>
    %862 = arith.addf %858, %861 : vector<4x64xf32>
    %c90 = arith.constant 90 : index
    %863 = memref.load %arg6[%c90] : memref<128xf32, #tpu.memory_space<smem>>
    %864 = vector.broadcast %863 : f32 to vector<4x64xf32>
    %865 = arith.mulf %742, %864 : vector<4x64xf32>
    %866 = arith.addf %862, %865 : vector<4x64xf32>
    %c91 = arith.constant 91 : index
    %867 = memref.load %arg6[%c91] : memref<128xf32, #tpu.memory_space<smem>>
    %868 = vector.broadcast %867 : f32 to vector<4x64xf32>
    %869 = arith.mulf %743, %868 : vector<4x64xf32>
    %870 = arith.addf %866, %869 : vector<4x64xf32>
    %c92 = arith.constant 92 : index
    %871 = memref.load %arg6[%c92] : memref<128xf32, #tpu.memory_space<smem>>
    %872 = vector.broadcast %871 : f32 to vector<4x64xf32>
    %873 = arith.mulf %744, %872 : vector<4x64xf32>
    %874 = arith.addf %870, %873 : vector<4x64xf32>
    %c93 = arith.constant 93 : index
    %875 = memref.load %arg6[%c93] : memref<128xf32, #tpu.memory_space<smem>>
    %876 = vector.broadcast %875 : f32 to vector<4x64xf32>
    %877 = arith.mulf %745, %876 : vector<4x64xf32>
    %878 = arith.addf %874, %877 : vector<4x64xf32>
    %c94 = arith.constant 94 : index
    %879 = memref.load %arg6[%c94] : memref<128xf32, #tpu.memory_space<smem>>
    %880 = vector.broadcast %879 : f32 to vector<4x64xf32>
    %881 = arith.mulf %746, %880 : vector<4x64xf32>
    %882 = arith.addf %878, %881 : vector<4x64xf32>
    %c95 = arith.constant 95 : index
    %883 = memref.load %arg6[%c95] : memref<128xf32, #tpu.memory_space<smem>>
    %884 = vector.broadcast %883 : f32 to vector<4x64xf32>
    %885 = arith.mulf %747, %884 : vector<4x64xf32>
    %886 = arith.addf %882, %885 : vector<4x64xf32>
    %c11_150 = arith.constant 11 : index
    %887 = memref.load %arg7[%c11_150] : memref<16xf32, #tpu.memory_space<smem>>
    %888 = vector.broadcast %887 : f32 to vector<4x64xf32>
    %889 = arith.addf %886, %888 : vector<4x64xf32>
    %cst_151 = arith.constant 0.000000e+00 : f32
    %890 = vector.broadcast %cst_151 : f32 to vector<4x64xf32>
    %891 = arith.maximumf %889, %890 : vector<4x64xf32>
    %c96 = arith.constant 96 : index
    %892 = memref.load %arg6[%c96] : memref<128xf32, #tpu.memory_space<smem>>
    %893 = vector.broadcast %892 : f32 to vector<4x64xf32>
    %894 = arith.mulf %740, %893 : vector<4x64xf32>
    %c97 = arith.constant 97 : index
    %895 = memref.load %arg6[%c97] : memref<128xf32, #tpu.memory_space<smem>>
    %896 = vector.broadcast %895 : f32 to vector<4x64xf32>
    %897 = arith.mulf %741, %896 : vector<4x64xf32>
    %898 = arith.addf %894, %897 : vector<4x64xf32>
    %c98 = arith.constant 98 : index
    %899 = memref.load %arg6[%c98] : memref<128xf32, #tpu.memory_space<smem>>
    %900 = vector.broadcast %899 : f32 to vector<4x64xf32>
    %901 = arith.mulf %742, %900 : vector<4x64xf32>
    %902 = arith.addf %898, %901 : vector<4x64xf32>
    %c99 = arith.constant 99 : index
    %903 = memref.load %arg6[%c99] : memref<128xf32, #tpu.memory_space<smem>>
    %904 = vector.broadcast %903 : f32 to vector<4x64xf32>
    %905 = arith.mulf %743, %904 : vector<4x64xf32>
    %906 = arith.addf %902, %905 : vector<4x64xf32>
    %c100 = arith.constant 100 : index
    %907 = memref.load %arg6[%c100] : memref<128xf32, #tpu.memory_space<smem>>
    %908 = vector.broadcast %907 : f32 to vector<4x64xf32>
    %909 = arith.mulf %744, %908 : vector<4x64xf32>
    %910 = arith.addf %906, %909 : vector<4x64xf32>
    %c101 = arith.constant 101 : index
    %911 = memref.load %arg6[%c101] : memref<128xf32, #tpu.memory_space<smem>>
    %912 = vector.broadcast %911 : f32 to vector<4x64xf32>
    %913 = arith.mulf %745, %912 : vector<4x64xf32>
    %914 = arith.addf %910, %913 : vector<4x64xf32>
    %c102 = arith.constant 102 : index
    %915 = memref.load %arg6[%c102] : memref<128xf32, #tpu.memory_space<smem>>
    %916 = vector.broadcast %915 : f32 to vector<4x64xf32>
    %917 = arith.mulf %746, %916 : vector<4x64xf32>
    %918 = arith.addf %914, %917 : vector<4x64xf32>
    %c103 = arith.constant 103 : index
    %919 = memref.load %arg6[%c103] : memref<128xf32, #tpu.memory_space<smem>>
    %920 = vector.broadcast %919 : f32 to vector<4x64xf32>
    %921 = arith.mulf %747, %920 : vector<4x64xf32>
    %922 = arith.addf %918, %921 : vector<4x64xf32>
    %c12_152 = arith.constant 12 : index
    %923 = memref.load %arg7[%c12_152] : memref<16xf32, #tpu.memory_space<smem>>
    %924 = vector.broadcast %923 : f32 to vector<4x64xf32>
    %925 = arith.addf %922, %924 : vector<4x64xf32>
    %cst_153 = arith.constant 0.000000e+00 : f32
    %926 = vector.broadcast %cst_153 : f32 to vector<4x64xf32>
    %927 = arith.maximumf %925, %926 : vector<4x64xf32>
    %c104 = arith.constant 104 : index
    %928 = memref.load %arg6[%c104] : memref<128xf32, #tpu.memory_space<smem>>
    %929 = vector.broadcast %928 : f32 to vector<4x64xf32>
    %930 = arith.mulf %740, %929 : vector<4x64xf32>
    %c105 = arith.constant 105 : index
    %931 = memref.load %arg6[%c105] : memref<128xf32, #tpu.memory_space<smem>>
    %932 = vector.broadcast %931 : f32 to vector<4x64xf32>
    %933 = arith.mulf %741, %932 : vector<4x64xf32>
    %934 = arith.addf %930, %933 : vector<4x64xf32>
    %c106 = arith.constant 106 : index
    %935 = memref.load %arg6[%c106] : memref<128xf32, #tpu.memory_space<smem>>
    %936 = vector.broadcast %935 : f32 to vector<4x64xf32>
    %937 = arith.mulf %742, %936 : vector<4x64xf32>
    %938 = arith.addf %934, %937 : vector<4x64xf32>
    %c107 = arith.constant 107 : index
    %939 = memref.load %arg6[%c107] : memref<128xf32, #tpu.memory_space<smem>>
    %940 = vector.broadcast %939 : f32 to vector<4x64xf32>
    %941 = arith.mulf %743, %940 : vector<4x64xf32>
    %942 = arith.addf %938, %941 : vector<4x64xf32>
    %c108 = arith.constant 108 : index
    %943 = memref.load %arg6[%c108] : memref<128xf32, #tpu.memory_space<smem>>
    %944 = vector.broadcast %943 : f32 to vector<4x64xf32>
    %945 = arith.mulf %744, %944 : vector<4x64xf32>
    %946 = arith.addf %942, %945 : vector<4x64xf32>
    %c109 = arith.constant 109 : index
    %947 = memref.load %arg6[%c109] : memref<128xf32, #tpu.memory_space<smem>>
    %948 = vector.broadcast %947 : f32 to vector<4x64xf32>
    %949 = arith.mulf %745, %948 : vector<4x64xf32>
    %950 = arith.addf %946, %949 : vector<4x64xf32>
    %c110 = arith.constant 110 : index
    %951 = memref.load %arg6[%c110] : memref<128xf32, #tpu.memory_space<smem>>
    %952 = vector.broadcast %951 : f32 to vector<4x64xf32>
    %953 = arith.mulf %746, %952 : vector<4x64xf32>
    %954 = arith.addf %950, %953 : vector<4x64xf32>
    %c111 = arith.constant 111 : index
    %955 = memref.load %arg6[%c111] : memref<128xf32, #tpu.memory_space<smem>>
    %956 = vector.broadcast %955 : f32 to vector<4x64xf32>
    %957 = arith.mulf %747, %956 : vector<4x64xf32>
    %958 = arith.addf %954, %957 : vector<4x64xf32>
    %c13_154 = arith.constant 13 : index
    %959 = memref.load %arg7[%c13_154] : memref<16xf32, #tpu.memory_space<smem>>
    %960 = vector.broadcast %959 : f32 to vector<4x64xf32>
    %961 = arith.addf %958, %960 : vector<4x64xf32>
    %cst_155 = arith.constant 0.000000e+00 : f32
    %962 = vector.broadcast %cst_155 : f32 to vector<4x64xf32>
    %963 = arith.maximumf %961, %962 : vector<4x64xf32>
    %c112 = arith.constant 112 : index
    %964 = memref.load %arg6[%c112] : memref<128xf32, #tpu.memory_space<smem>>
    %965 = vector.broadcast %964 : f32 to vector<4x64xf32>
    %966 = arith.mulf %740, %965 : vector<4x64xf32>
    %c113 = arith.constant 113 : index
    %967 = memref.load %arg6[%c113] : memref<128xf32, #tpu.memory_space<smem>>
    %968 = vector.broadcast %967 : f32 to vector<4x64xf32>
    %969 = arith.mulf %741, %968 : vector<4x64xf32>
    %970 = arith.addf %966, %969 : vector<4x64xf32>
    %c114 = arith.constant 114 : index
    %971 = memref.load %arg6[%c114] : memref<128xf32, #tpu.memory_space<smem>>
    %972 = vector.broadcast %971 : f32 to vector<4x64xf32>
    %973 = arith.mulf %742, %972 : vector<4x64xf32>
    %974 = arith.addf %970, %973 : vector<4x64xf32>
    %c115 = arith.constant 115 : index
    %975 = memref.load %arg6[%c115] : memref<128xf32, #tpu.memory_space<smem>>
    %976 = vector.broadcast %975 : f32 to vector<4x64xf32>
    %977 = arith.mulf %743, %976 : vector<4x64xf32>
    %978 = arith.addf %974, %977 : vector<4x64xf32>
    %c116 = arith.constant 116 : index
    %979 = memref.load %arg6[%c116] : memref<128xf32, #tpu.memory_space<smem>>
    %980 = vector.broadcast %979 : f32 to vector<4x64xf32>
    %981 = arith.mulf %744, %980 : vector<4x64xf32>
    %982 = arith.addf %978, %981 : vector<4x64xf32>
    %c117 = arith.constant 117 : index
    %983 = memref.load %arg6[%c117] : memref<128xf32, #tpu.memory_space<smem>>
    %984 = vector.broadcast %983 : f32 to vector<4x64xf32>
    %985 = arith.mulf %745, %984 : vector<4x64xf32>
    %986 = arith.addf %982, %985 : vector<4x64xf32>
    %c118 = arith.constant 118 : index
    %987 = memref.load %arg6[%c118] : memref<128xf32, #tpu.memory_space<smem>>
    %988 = vector.broadcast %987 : f32 to vector<4x64xf32>
    %989 = arith.mulf %746, %988 : vector<4x64xf32>
    %990 = arith.addf %986, %989 : vector<4x64xf32>
    %c119 = arith.constant 119 : index
    %991 = memref.load %arg6[%c119] : memref<128xf32, #tpu.memory_space<smem>>
    %992 = vector.broadcast %991 : f32 to vector<4x64xf32>
    %993 = arith.mulf %747, %992 : vector<4x64xf32>
    %994 = arith.addf %990, %993 : vector<4x64xf32>
    %c14_156 = arith.constant 14 : index
    %995 = memref.load %arg7[%c14_156] : memref<16xf32, #tpu.memory_space<smem>>
    %996 = vector.broadcast %995 : f32 to vector<4x64xf32>
    %997 = arith.addf %994, %996 : vector<4x64xf32>
    %cst_157 = arith.constant 0.000000e+00 : f32
    %998 = vector.broadcast %cst_157 : f32 to vector<4x64xf32>
    %999 = arith.maximumf %997, %998 : vector<4x64xf32>
    %c120 = arith.constant 120 : index
    %1000 = memref.load %arg6[%c120] : memref<128xf32, #tpu.memory_space<smem>>
    %1001 = vector.broadcast %1000 : f32 to vector<4x64xf32>
    %1002 = arith.mulf %740, %1001 : vector<4x64xf32>
    %c121 = arith.constant 121 : index
    %1003 = memref.load %arg6[%c121] : memref<128xf32, #tpu.memory_space<smem>>
    %1004 = vector.broadcast %1003 : f32 to vector<4x64xf32>
    %1005 = arith.mulf %741, %1004 : vector<4x64xf32>
    %1006 = arith.addf %1002, %1005 : vector<4x64xf32>
    %c122 = arith.constant 122 : index
    %1007 = memref.load %arg6[%c122] : memref<128xf32, #tpu.memory_space<smem>>
    %1008 = vector.broadcast %1007 : f32 to vector<4x64xf32>
    %1009 = arith.mulf %742, %1008 : vector<4x64xf32>
    %1010 = arith.addf %1006, %1009 : vector<4x64xf32>
    %c123 = arith.constant 123 : index
    %1011 = memref.load %arg6[%c123] : memref<128xf32, #tpu.memory_space<smem>>
    %1012 = vector.broadcast %1011 : f32 to vector<4x64xf32>
    %1013 = arith.mulf %743, %1012 : vector<4x64xf32>
    %1014 = arith.addf %1010, %1013 : vector<4x64xf32>
    %c124 = arith.constant 124 : index
    %1015 = memref.load %arg6[%c124] : memref<128xf32, #tpu.memory_space<smem>>
    %1016 = vector.broadcast %1015 : f32 to vector<4x64xf32>
    %1017 = arith.mulf %744, %1016 : vector<4x64xf32>
    %1018 = arith.addf %1014, %1017 : vector<4x64xf32>
    %c125 = arith.constant 125 : index
    %1019 = memref.load %arg6[%c125] : memref<128xf32, #tpu.memory_space<smem>>
    %1020 = vector.broadcast %1019 : f32 to vector<4x64xf32>
    %1021 = arith.mulf %745, %1020 : vector<4x64xf32>
    %1022 = arith.addf %1018, %1021 : vector<4x64xf32>
    %c126 = arith.constant 126 : index
    %1023 = memref.load %arg6[%c126] : memref<128xf32, #tpu.memory_space<smem>>
    %1024 = vector.broadcast %1023 : f32 to vector<4x64xf32>
    %1025 = arith.mulf %746, %1024 : vector<4x64xf32>
    %1026 = arith.addf %1022, %1025 : vector<4x64xf32>
    %c127 = arith.constant 127 : index
    %1027 = memref.load %arg6[%c127] : memref<128xf32, #tpu.memory_space<smem>>
    %1028 = vector.broadcast %1027 : f32 to vector<4x64xf32>
    %1029 = arith.mulf %747, %1028 : vector<4x64xf32>
    %1030 = arith.addf %1026, %1029 : vector<4x64xf32>
    %c15_158 = arith.constant 15 : index
    %1031 = memref.load %arg7[%c15_158] : memref<16xf32, #tpu.memory_space<smem>>
    %1032 = vector.broadcast %1031 : f32 to vector<4x64xf32>
    %1033 = arith.addf %1030, %1032 : vector<4x64xf32>
    %cst_159 = arith.constant 0.000000e+00 : f32
    %1034 = vector.broadcast %cst_159 : f32 to vector<4x64xf32>
    %1035 = arith.maximumf %1033, %1034 : vector<4x64xf32>
    %c16_160 = arith.constant 16 : index
    %1036 = memref.load %arg8[%c16_160] : memref<32xf32, #tpu.memory_space<smem>>
    %1037 = vector.broadcast %1036 : f32 to vector<4x4x64xf32>
    %1038 = arith.mulf %511, %1037 : vector<4x4x64xf32>
    %c17_161 = arith.constant 17 : index
    %1039 = memref.load %arg8[%c17_161] : memref<32xf32, #tpu.memory_space<smem>>
    %1040 = vector.broadcast %1039 : f32 to vector<4x4x64xf32>
    %1041 = arith.mulf %531, %1040 : vector<4x4x64xf32>
    %1042 = arith.addf %1038, %1041 : vector<4x4x64xf32>
    %c18_162 = arith.constant 18 : index
    %1043 = memref.load %arg8[%c18_162] : memref<32xf32, #tpu.memory_space<smem>>
    %1044 = vector.broadcast %1043 : f32 to vector<4x4x64xf32>
    %1045 = arith.mulf %551, %1044 : vector<4x4x64xf32>
    %1046 = arith.addf %1042, %1045 : vector<4x4x64xf32>
    %c19_163 = arith.constant 19 : index
    %1047 = memref.load %arg8[%c19_163] : memref<32xf32, #tpu.memory_space<smem>>
    %1048 = vector.broadcast %1047 : f32 to vector<4x4x64xf32>
    %1049 = arith.mulf %571, %1048 : vector<4x4x64xf32>
    %1050 = arith.addf %1046, %1049 : vector<4x4x64xf32>
    %c4_164 = arith.constant 4 : index
    %1051 = memref.load %arg9[%c4_164] : memref<8xf32, #tpu.memory_space<smem>>
    %1052 = vector.broadcast %1051 : f32 to vector<4x4x64xf32>
    %1053 = arith.addf %1050, %1052 : vector<4x4x64xf32>
    %cst_165 = arith.constant 0.000000e+00 : f32
    %1054 = vector.broadcast %cst_165 : f32 to vector<4x4x64xf32>
    %1055 = arith.maximumf %1053, %1054 : vector<4x4x64xf32>
    %c20_166 = arith.constant 20 : index
    %1056 = memref.load %arg8[%c20_166] : memref<32xf32, #tpu.memory_space<smem>>
    %1057 = vector.broadcast %1056 : f32 to vector<4x4x64xf32>
    %1058 = arith.mulf %511, %1057 : vector<4x4x64xf32>
    %c21_167 = arith.constant 21 : index
    %1059 = memref.load %arg8[%c21_167] : memref<32xf32, #tpu.memory_space<smem>>
    %1060 = vector.broadcast %1059 : f32 to vector<4x4x64xf32>
    %1061 = arith.mulf %531, %1060 : vector<4x4x64xf32>
    %1062 = arith.addf %1058, %1061 : vector<4x4x64xf32>
    %c22_168 = arith.constant 22 : index
    %1063 = memref.load %arg8[%c22_168] : memref<32xf32, #tpu.memory_space<smem>>
    %1064 = vector.broadcast %1063 : f32 to vector<4x4x64xf32>
    %1065 = arith.mulf %551, %1064 : vector<4x4x64xf32>
    %1066 = arith.addf %1062, %1065 : vector<4x4x64xf32>
    %c23_169 = arith.constant 23 : index
    %1067 = memref.load %arg8[%c23_169] : memref<32xf32, #tpu.memory_space<smem>>
    %1068 = vector.broadcast %1067 : f32 to vector<4x4x64xf32>
    %1069 = arith.mulf %571, %1068 : vector<4x4x64xf32>
    %1070 = arith.addf %1066, %1069 : vector<4x4x64xf32>
    %c5_170 = arith.constant 5 : index
    %1071 = memref.load %arg9[%c5_170] : memref<8xf32, #tpu.memory_space<smem>>
    %1072 = vector.broadcast %1071 : f32 to vector<4x4x64xf32>
    %1073 = arith.addf %1070, %1072 : vector<4x4x64xf32>
    %cst_171 = arith.constant 0.000000e+00 : f32
    %1074 = vector.broadcast %cst_171 : f32 to vector<4x4x64xf32>
    %1075 = arith.maximumf %1073, %1074 : vector<4x4x64xf32>
    %c24_172 = arith.constant 24 : index
    %1076 = memref.load %arg8[%c24_172] : memref<32xf32, #tpu.memory_space<smem>>
    %1077 = vector.broadcast %1076 : f32 to vector<4x4x64xf32>
    %1078 = arith.mulf %511, %1077 : vector<4x4x64xf32>
    %c25_173 = arith.constant 25 : index
    %1079 = memref.load %arg8[%c25_173] : memref<32xf32, #tpu.memory_space<smem>>
    %1080 = vector.broadcast %1079 : f32 to vector<4x4x64xf32>
    %1081 = arith.mulf %531, %1080 : vector<4x4x64xf32>
    %1082 = arith.addf %1078, %1081 : vector<4x4x64xf32>
    %c26_174 = arith.constant 26 : index
    %1083 = memref.load %arg8[%c26_174] : memref<32xf32, #tpu.memory_space<smem>>
    %1084 = vector.broadcast %1083 : f32 to vector<4x4x64xf32>
    %1085 = arith.mulf %551, %1084 : vector<4x4x64xf32>
    %1086 = arith.addf %1082, %1085 : vector<4x4x64xf32>
    %c27_175 = arith.constant 27 : index
    %1087 = memref.load %arg8[%c27_175] : memref<32xf32, #tpu.memory_space<smem>>
    %1088 = vector.broadcast %1087 : f32 to vector<4x4x64xf32>
    %1089 = arith.mulf %571, %1088 : vector<4x4x64xf32>
    %1090 = arith.addf %1086, %1089 : vector<4x4x64xf32>
    %c6_176 = arith.constant 6 : index
    %1091 = memref.load %arg9[%c6_176] : memref<8xf32, #tpu.memory_space<smem>>
    %1092 = vector.broadcast %1091 : f32 to vector<4x4x64xf32>
    %1093 = arith.addf %1090, %1092 : vector<4x4x64xf32>
    %cst_177 = arith.constant 0.000000e+00 : f32
    %1094 = vector.broadcast %cst_177 : f32 to vector<4x4x64xf32>
    %1095 = arith.maximumf %1093, %1094 : vector<4x4x64xf32>
    %c28_178 = arith.constant 28 : index
    %1096 = memref.load %arg8[%c28_178] : memref<32xf32, #tpu.memory_space<smem>>
    %1097 = vector.broadcast %1096 : f32 to vector<4x4x64xf32>
    %1098 = arith.mulf %511, %1097 : vector<4x4x64xf32>
    %c29_179 = arith.constant 29 : index
    %1099 = memref.load %arg8[%c29_179] : memref<32xf32, #tpu.memory_space<smem>>
    %1100 = vector.broadcast %1099 : f32 to vector<4x4x64xf32>
    %1101 = arith.mulf %531, %1100 : vector<4x4x64xf32>
    %1102 = arith.addf %1098, %1101 : vector<4x4x64xf32>
    %c30_180 = arith.constant 30 : index
    %1103 = memref.load %arg8[%c30_180] : memref<32xf32, #tpu.memory_space<smem>>
    %1104 = vector.broadcast %1103 : f32 to vector<4x4x64xf32>
    %1105 = arith.mulf %551, %1104 : vector<4x4x64xf32>
    %1106 = arith.addf %1102, %1105 : vector<4x4x64xf32>
    %c31_181 = arith.constant 31 : index
    %1107 = memref.load %arg8[%c31_181] : memref<32xf32, #tpu.memory_space<smem>>
    %1108 = vector.broadcast %1107 : f32 to vector<4x4x64xf32>
    %1109 = arith.mulf %571, %1108 : vector<4x4x64xf32>
    %1110 = arith.addf %1106, %1109 : vector<4x4x64xf32>
    %c7_182 = arith.constant 7 : index
    %1111 = memref.load %arg9[%c7_182] : memref<8xf32, #tpu.memory_space<smem>>
    %1112 = vector.broadcast %1111 : f32 to vector<4x4x64xf32>
    %1113 = arith.addf %1110, %1112 : vector<4x4x64xf32>
    %cst_183 = arith.constant 0.000000e+00 : f32
    %1114 = vector.broadcast %cst_183 : f32 to vector<4x4x64xf32>
    %1115 = arith.maximumf %1113, %1114 : vector<4x4x64xf32>
    %c0_184 = arith.constant 0 : index
    %c0_185 = arith.constant 0 : index
    %c0_186 = arith.constant 0 : index
    %c0_187 = arith.constant 0 : index
    %1116 = vector.load %arg10[%c0_184, %c0_185, %c0_186, %c0_187] : memref<1x12x4x64xf32, #tpu.memory_space<vmem>>, vector<1x1x4x64xf32>
    %1117 = vector.shape_cast %1116 : vector<1x1x4x64xf32> to vector<4x64xf32>
    %1118 = vector.shape_cast %783 : vector<4x64xf32> to vector<1x1x4x64xf32>
    tpu.vector_store %arg10[%c0_184, %c0_185, %c0_186, %c0_187], %1118 {strides = array<i32>} : memref<1x12x4x64xf32, #tpu.memory_space<vmem>>, vector<1x1x4x64xf32>,
    %c0_188 = arith.constant 0 : index
    %c1_189 = arith.constant 1 : index
    %c0_190 = arith.constant 0 : index
    %c0_191 = arith.constant 0 : index
    %1119 = vector.load %arg10[%c0_188, %c1_189, %c0_190, %c0_191] : memref<1x12x4x64xf32, #tpu.memory_space<vmem>>, vector<1x1x4x64xf32>
    %1120 = vector.shape_cast %1119 : vector<1x1x4x64xf32> to vector<4x64xf32>
    %1121 = vector.shape_cast %819 : vector<4x64xf32> to vector<1x1x4x64xf32>
    tpu.vector_store %arg10[%c0_188, %c1_189, %c0_190, %c0_191], %1121 {strides = array<i32>} : memref<1x12x4x64xf32, #tpu.memory_space<vmem>>, vector<1x1x4x64xf32>,
    %c0_192 = arith.constant 0 : index
    %c2_193 = arith.constant 2 : index
    %c0_194 = arith.constant 0 : index
    %c0_195 = arith.constant 0 : index
    %1122 = vector.load %arg10[%c0_192, %c2_193, %c0_194, %c0_195] : memref<1x12x4x64xf32, #tpu.memory_space<vmem>>, vector<1x1x4x64xf32>
    %1123 = vector.shape_cast %1122 : vector<1x1x4x64xf32> to vector<4x64xf32>
    %1124 = vector.shape_cast %855 : vector<4x64xf32> to vector<1x1x4x64xf32>
    tpu.vector_store %arg10[%c0_192, %c2_193, %c0_194, %c0_195], %1124 {strides = array<i32>} : memref<1x12x4x64xf32, #tpu.memory_space<vmem>>, vector<1x1x4x64xf32>,
    %c0_196 = arith.constant 0 : index
    %c3_197 = arith.constant 3 : index
    %c0_198 = arith.constant 0 : index
    %c0_199 = arith.constant 0 : index
    %1125 = vector.load %arg10[%c0_196, %c3_197, %c0_198, %c0_199] : memref<1x12x4x64xf32, #tpu.memory_space<vmem>>, vector<1x1x4x64xf32>
    %1126 = vector.shape_cast %1125 : vector<1x1x4x64xf32> to vector<4x64xf32>
    %1127 = vector.shape_cast %891 : vector<4x64xf32> to vector<1x1x4x64xf32>
    tpu.vector_store %arg10[%c0_196, %c3_197, %c0_198, %c0_199], %1127 {strides = array<i32>} : memref<1x12x4x64xf32, #tpu.memory_space<vmem>>, vector<1x1x4x64xf32>,
    %c0_200 = arith.constant 0 : index
    %c4_201 = arith.constant 4 : index
    %c0_202 = arith.constant 0 : index
    %c0_203 = arith.constant 0 : index
    %1128 = vector.load %arg10[%c0_200, %c4_201, %c0_202, %c0_203] : memref<1x12x4x64xf32, #tpu.memory_space<vmem>>, vector<1x1x4x64xf32>
    %1129 = vector.shape_cast %1128 : vector<1x1x4x64xf32> to vector<4x64xf32>
    %1130 = vector.shape_cast %927 : vector<4x64xf32> to vector<1x1x4x64xf32>
    tpu.vector_store %arg10[%c0_200, %c4_201, %c0_202, %c0_203], %1130 {strides = array<i32>} : memref<1x12x4x64xf32, #tpu.memory_space<vmem>>, vector<1x1x4x64xf32>,
    %c0_204 = arith.constant 0 : index
    %c5_205 = arith.constant 5 : index
    %c0_206 = arith.constant 0 : index
    %c0_207 = arith.constant 0 : index
    %1131 = vector.load %arg10[%c0_204, %c5_205, %c0_206, %c0_207] : memref<1x12x4x64xf32, #tpu.memory_space<vmem>>, vector<1x1x4x64xf32>
    %1132 = vector.shape_cast %1131 : vector<1x1x4x64xf32> to vector<4x64xf32>
    %1133 = vector.shape_cast %963 : vector<4x64xf32> to vector<1x1x4x64xf32>
    tpu.vector_store %arg10[%c0_204, %c5_205, %c0_206, %c0_207], %1133 {strides = array<i32>} : memref<1x12x4x64xf32, #tpu.memory_space<vmem>>, vector<1x1x4x64xf32>,
    %c0_208 = arith.constant 0 : index
    %c6_209 = arith.constant 6 : index
    %c0_210 = arith.constant 0 : index
    %c0_211 = arith.constant 0 : index
    %1134 = vector.load %arg10[%c0_208, %c6_209, %c0_210, %c0_211] : memref<1x12x4x64xf32, #tpu.memory_space<vmem>>, vector<1x1x4x64xf32>
    %1135 = vector.shape_cast %1134 : vector<1x1x4x64xf32> to vector<4x64xf32>
    %1136 = vector.shape_cast %999 : vector<4x64xf32> to vector<1x1x4x64xf32>
    tpu.vector_store %arg10[%c0_208, %c6_209, %c0_210, %c0_211], %1136 {strides = array<i32>} : memref<1x12x4x64xf32, #tpu.memory_space<vmem>>, vector<1x1x4x64xf32>,
    %c0_212 = arith.constant 0 : index
    %c7_213 = arith.constant 7 : index
    %c0_214 = arith.constant 0 : index
    %c0_215 = arith.constant 0 : index
    %1137 = vector.load %arg10[%c0_212, %c7_213, %c0_214, %c0_215] : memref<1x12x4x64xf32, #tpu.memory_space<vmem>>, vector<1x1x4x64xf32>
    %1138 = vector.shape_cast %1137 : vector<1x1x4x64xf32> to vector<4x64xf32>
    %1139 = vector.shape_cast %1035 : vector<4x64xf32> to vector<1x1x4x64xf32>
    tpu.vector_store %arg10[%c0_212, %c7_213, %c0_214, %c0_215], %1139 {strides = array<i32>} : memref<1x12x4x64xf32, #tpu.memory_space<vmem>>, vector<1x1x4x64xf32>,
    %1140 = vector.extract_strided_slice %1055 {offsets = [0, 0, 0], sizes = [4, 1, 64], strides = [1, 1, 1]} : vector<4x4x64xf32> to vector<4x1x64xf32>
    %1141 = vector.shape_cast %1140 : vector<4x1x64xf32> to vector<4x64xf32>
    %1142 = vector.extract_strided_slice %1055 {offsets = [0, 1, 0], sizes = [4, 1, 64], strides = [1, 1, 1]} : vector<4x4x64xf32> to vector<4x1x64xf32>
    %1143 = vector.shape_cast %1142 : vector<4x1x64xf32> to vector<4x64xf32>
    %1144 = arith.addf %1141, %1143 : vector<4x64xf32>
    %1145 = vector.extract_strided_slice %1055 {offsets = [0, 2, 0], sizes = [4, 1, 64], strides = [1, 1, 1]} : vector<4x4x64xf32> to vector<4x1x64xf32>
    %1146 = vector.shape_cast %1145 : vector<4x1x64xf32> to vector<4x64xf32>
    %1147 = arith.addf %1144, %1146 : vector<4x64xf32>
    %1148 = vector.extract_strided_slice %1055 {offsets = [0, 3, 0], sizes = [4, 1, 64], strides = [1, 1, 1]} : vector<4x4x64xf32> to vector<4x1x64xf32>
    %1149 = vector.shape_cast %1148 : vector<4x1x64xf32> to vector<4x64xf32>
    %1150 = arith.addf %1147, %1149 : vector<4x64xf32>
    %cst_216 = arith.constant 2.500000e-01 : f32
    %1151 = vector.broadcast %cst_216 : f32 to vector<4x64xf32>
    %1152 = arith.mulf %1150, %1151 : vector<4x64xf32>
    %c0_217 = arith.constant 0 : index
    %c8_218 = arith.constant 8 : index
    %c0_219 = arith.constant 0 : index
    %c0_220 = arith.constant 0 : index
    %1153 = vector.load %arg10[%c0_217, %c8_218, %c0_219, %c0_220] : memref<1x12x4x64xf32, #tpu.memory_space<vmem>>, vector<1x1x4x64xf32>
    %1154 = vector.shape_cast %1153 : vector<1x1x4x64xf32> to vector<4x64xf32>
    %1155 = vector.shape_cast %1152 : vector<4x64xf32> to vector<1x1x4x64xf32>
    tpu.vector_store %arg10[%c0_217, %c8_218, %c0_219, %c0_220], %1155 {strides = array<i32>} : memref<1x12x4x64xf32, #tpu.memory_space<vmem>>, vector<1x1x4x64xf32>,
    %1156 = vector.extract_strided_slice %1075 {offsets = [0, 0, 0], sizes = [4, 1, 64], strides = [1, 1, 1]} : vector<4x4x64xf32> to vector<4x1x64xf32>
    %1157 = vector.shape_cast %1156 : vector<4x1x64xf32> to vector<4x64xf32>
    %1158 = vector.extract_strided_slice %1075 {offsets = [0, 1, 0], sizes = [4, 1, 64], strides = [1, 1, 1]} : vector<4x4x64xf32> to vector<4x1x64xf32>
    %1159 = vector.shape_cast %1158 : vector<4x1x64xf32> to vector<4x64xf32>
    %1160 = arith.addf %1157, %1159 : vector<4x64xf32>
    %1161 = vector.extract_strided_slice %1075 {offsets = [0, 2, 0], sizes = [4, 1, 64], strides = [1, 1, 1]} : vector<4x4x64xf32> to vector<4x1x64xf32>
    %1162 = vector.shape_cast %1161 : vector<4x1x64xf32> to vector<4x64xf32>
    %1163 = arith.addf %1160, %1162 : vector<4x64xf32>
    %1164 = vector.extract_strided_slice %1075 {offsets = [0, 3, 0], sizes = [4, 1, 64], strides = [1, 1, 1]} : vector<4x4x64xf32> to vector<4x1x64xf32>
    %1165 = vector.shape_cast %1164 : vector<4x1x64xf32> to vector<4x64xf32>
    %1166 = arith.addf %1163, %1165 : vector<4x64xf32>
    %cst_221 = arith.constant 2.500000e-01 : f32
    %1167 = vector.broadcast %cst_221 : f32 to vector<4x64xf32>
    %1168 = arith.mulf %1166, %1167 : vector<4x64xf32>
    %c0_222 = arith.constant 0 : index
    %c9_223 = arith.constant 9 : index
    %c0_224 = arith.constant 0 : index
    %c0_225 = arith.constant 0 : index
    %1169 = vector.load %arg10[%c0_222, %c9_223, %c0_224, %c0_225] : memref<1x12x4x64xf32, #tpu.memory_space<vmem>>, vector<1x1x4x64xf32>
    %1170 = vector.shape_cast %1169 : vector<1x1x4x64xf32> to vector<4x64xf32>
    %1171 = vector.shape_cast %1168 : vector<4x64xf32> to vector<1x1x4x64xf32>
    tpu.vector_store %arg10[%c0_222, %c9_223, %c0_224, %c0_225], %1171 {strides = array<i32>} : memref<1x12x4x64xf32, #tpu.memory_space<vmem>>, vector<1x1x4x64xf32>,
    %1172 = vector.extract_strided_slice %1095 {offsets = [0, 0, 0], sizes = [4, 1, 64], strides = [1, 1, 1]} : vector<4x4x64xf32> to vector<4x1x64xf32>
    %1173 = vector.shape_cast %1172 : vector<4x1x64xf32> to vector<4x64xf32>
    %1174 = vector.extract_strided_slice %1095 {offsets = [0, 1, 0], sizes = [4, 1, 64], strides = [1, 1, 1]} : vector<4x4x64xf32> to vector<4x1x64xf32>
    %1175 = vector.shape_cast %1174 : vector<4x1x64xf32> to vector<4x64xf32>
    %1176 = arith.addf %1173, %1175 : vector<4x64xf32>
    %1177 = vector.extract_strided_slice %1095 {offsets = [0, 2, 0], sizes = [4, 1, 64], strides = [1, 1, 1]} : vector<4x4x64xf32> to vector<4x1x64xf32>
    %1178 = vector.shape_cast %1177 : vector<4x1x64xf32> to vector<4x64xf32>
    %1179 = arith.addf %1176, %1178 : vector<4x64xf32>
    %1180 = vector.extract_strided_slice %1095 {offsets = [0, 3, 0], sizes = [4, 1, 64], strides = [1, 1, 1]} : vector<4x4x64xf32> to vector<4x1x64xf32>
    %1181 = vector.shape_cast %1180 : vector<4x1x64xf32> to vector<4x64xf32>
    %1182 = arith.addf %1179, %1181 : vector<4x64xf32>
    %cst_226 = arith.constant 2.500000e-01 : f32
    %1183 = vector.broadcast %cst_226 : f32 to vector<4x64xf32>
    %1184 = arith.mulf %1182, %1183 : vector<4x64xf32>
    %c0_227 = arith.constant 0 : index
    %c10_228 = arith.constant 10 : index
    %c0_229 = arith.constant 0 : index
    %c0_230 = arith.constant 0 : index
    %1185 = vector.load %arg10[%c0_227, %c10_228, %c0_229, %c0_230] : memref<1x12x4x64xf32, #tpu.memory_space<vmem>>, vector<1x1x4x64xf32>
    %1186 = vector.shape_cast %1185 : vector<1x1x4x64xf32> to vector<4x64xf32>
    %1187 = vector.shape_cast %1184 : vector<4x64xf32> to vector<1x1x4x64xf32>
    tpu.vector_store %arg10[%c0_227, %c10_228, %c0_229, %c0_230], %1187 {strides = array<i32>} : memref<1x12x4x64xf32, #tpu.memory_space<vmem>>, vector<1x1x4x64xf32>,
    %1188 = vector.extract_strided_slice %1115 {offsets = [0, 0, 0], sizes = [4, 1, 64], strides = [1, 1, 1]} : vector<4x4x64xf32> to vector<4x1x64xf32>
    %1189 = vector.shape_cast %1188 : vector<4x1x64xf32> to vector<4x64xf32>
    %1190 = vector.extract_strided_slice %1115 {offsets = [0, 1, 0], sizes = [4, 1, 64], strides = [1, 1, 1]} : vector<4x4x64xf32> to vector<4x1x64xf32>
    %1191 = vector.shape_cast %1190 : vector<4x1x64xf32> to vector<4x64xf32>
    %1192 = arith.addf %1189, %1191 : vector<4x64xf32>
    %1193 = vector.extract_strided_slice %1115 {offsets = [0, 2, 0], sizes = [4, 1, 64], strides = [1, 1, 1]} : vector<4x4x64xf32> to vector<4x1x64xf32>
    %1194 = vector.shape_cast %1193 : vector<4x1x64xf32> to vector<4x64xf32>
    %1195 = arith.addf %1192, %1194 : vector<4x64xf32>
    %1196 = vector.extract_strided_slice %1115 {offsets = [0, 3, 0], sizes = [4, 1, 64], strides = [1, 1, 1]} : vector<4x4x64xf32> to vector<4x1x64xf32>
    %1197 = vector.shape_cast %1196 : vector<4x1x64xf32> to vector<4x64xf32>
    %1198 = arith.addf %1195, %1197 : vector<4x64xf32>
    %cst_231 = arith.constant 2.500000e-01 : f32
    %1199 = vector.broadcast %cst_231 : f32 to vector<4x64xf32>
    %1200 = arith.mulf %1198, %1199 : vector<4x64xf32>
    %c0_232 = arith.constant 0 : index
    %c11_233 = arith.constant 11 : index
    %c0_234 = arith.constant 0 : index
    %c0_235 = arith.constant 0 : index
    %1201 = vector.load %arg10[%c0_232, %c11_233, %c0_234, %c0_235] : memref<1x12x4x64xf32, #tpu.memory_space<vmem>>, vector<1x1x4x64xf32>
    %1202 = vector.shape_cast %1201 : vector<1x1x4x64xf32> to vector<4x64xf32>
    %1203 = vector.shape_cast %1200 : vector<4x64xf32> to vector<1x1x4x64xf32>
    tpu.vector_store %arg10[%c0_232, %c11_233, %c0_234, %c0_235], %1203 {strides = array<i32>} : memref<1x12x4x64xf32, #tpu.memory_space<vmem>>, vector<1x1x4x64xf32>,
    return
  }
  func.func @transform_0(%arg0: i32, %arg1: i32) -> (i32, i32, i32, i32) {
    %c0_i32 = arith.constant 0 : i32
    %c0_i32_0 = arith.constant 0 : i32
    %c0_i32_1 = arith.constant 0 : i32
    return %arg0, %c0_i32, %c0_i32_0, %arg1 : i32, i32, i32, i32
  }
  func.func @transform_1(%arg0: i32, %arg1: i32) -> (i32, i32, i32, i32, i32) {
    %c0_i32 = arith.constant 0 : i32
    %c0_i32_0 = arith.constant 0 : i32
    %c0_i32_1 = arith.constant 0 : i32
    %c0_i32_2 = arith.constant 0 : i32
    return %arg0, %c0_i32, %c0_i32_0, %c0_i32_1, %arg1 : i32, i32, i32, i32, i32
  }
  func.func @transform_2(%arg0: i32, %arg1: i32) -> i32 {
    %c0_i32 = arith.constant 0 : i32
    %c0_i32_0 = arith.constant 0 : i32
    return %c0_i32 : i32
  }
  func.func @transform_3(%arg0: i32, %arg1: i32) -> i32 {
    %c0_i32 = arith.constant 0 : i32
    %c0_i32_0 = arith.constant 0 : i32
    return %c0_i32 : i32
  }
  func.func @transform_4(%arg0: i32, %arg1: i32) -> i32 {
    %c0_i32 = arith.constant 0 : i32
    %c0_i32_0 = arith.constant 0 : i32
    return %c0_i32 : i32
  }
  func.func @transform_5(%arg0: i32, %arg1: i32) -> i32 {
    %c0_i32 = arith.constant 0 : i32
    %c0_i32_0 = arith.constant 0 : i32
    return %c0_i32 : i32
  }
  func.func @transform_6(%arg0: i32, %arg1: i32) -> i32 {
    %c0_i32 = arith.constant 0 : i32
    %c0_i32_0 = arith.constant 0 : i32
    return %c0_i32 : i32
  }
  func.func @transform_7(%arg0: i32, %arg1: i32) -> i32 {
    %c0_i32 = arith.constant 0 : i32
    %c0_i32_0 = arith.constant 0 : i32
    return %c0_i32 : i32
  }
  func.func @transform_8(%arg0: i32, %arg1: i32) -> (i32, i32, i32, i32) {
    %c0_i32 = arith.constant 0 : i32
    %c0_i32_0 = arith.constant 0 : i32
    %c0_i32_1 = arith.constant 0 : i32
    return %arg0, %c0_i32, %c0_i32_0, %arg1 : i32, i32, i32, i32
  }
}

</mosaic_0001>

<llo_original>
// kernel: tpu_custom_call.1
$region0: #{tpu_custom_call.1}
  #allocation0 [shape = 'u32[]', space=smem, size = 0x4, offset = 0x4, fixed_abs, tag = 'smem constant byte address 0x4 - core index']
  #allocation1 [shape = 'u32[144,128]{1,0:T(1,128)}', space=vmem, size = 0x12000, scoped, tag = 'internal scratch']
  %s0 = inlined_call_operand.hbm [shape: f32[2,8,4,64], index: 0, kind: input, shape index: {}]
  %s1 = inlined_call_operand.hbm [shape: f32[2,4,4,4,64], index: 1, kind: input, shape index: {}]
  %s2 = inlined_call_operand.vmem [shape: f32[64], index: 2, kind: input, shape index: {}]
  %s3 = inlined_call_operand.vmem [shape: f32[16], index: 3, kind: input, shape index: {}]
  %s4 = inlined_call_operand.vmem [shape: f32[128], index: 4, kind: input, shape index: {}]
  %s5 = inlined_call_operand.vmem [shape: f32[16], index: 5, kind: input, shape index: {}]
  %s6 = inlined_call_operand.vmem [shape: f32[32], index: 6, kind: input, shape index: {}]
  %s7 = inlined_call_operand.vmem [shape: f32[8], index: 7, kind: input, shape index: {}]
  %s8 = inlined_call_operand.hbm [shape: f32[2,12,4,64], index: 8, kind: output, shape index: {}]
  %s9 = sld [smem:[#allocation0]]
  $region97: #{tpu_custom_call.1} parent=0
    _
  %s11 = ssub.s32 1, %s9
  %s12 = scalar_select 0, %s11, %s9
  $region1: #{tpu_custom_call.1} parent=0
    #allocation2 [shape = 'u8[32768]{0}', space=vmem, size = 0x8000, scoped, tag = 'input window, operand 0']
    #allocation3 [shape = 's32[2]{0}', space=sflag, size = 0x8, scoped, tag = 'scoped memory for tpu_custom_call.1']
    #allocation4 [shape = 's32[2]{0}', space=sflag, size = 0x8, scoped, tag = 'scoped memory for tpu_custom_call.1']
    #allocation5 [shape = 's32[2]{0}', space=sflag, size = 0x8, scoped, tag = 'scoped memory for tpu_custom_call.1']
    #allocation6 [shape = 'u8[65536]{0}', space=vmem, size = 0x10000, scoped, tag = 'input window, operand 1']
    #allocation7 [shape = 's32[2]{0}', space=sflag, size = 0x8, scoped, tag = 'scoped memory for tpu_custom_call.1']
    #allocation8 [shape = 'u8[512]{0}', space=smem, size = 0x200, scoped, tag = 'input window, operand 2, single buffered']
    #allocation9 [shape = 'u8[512]{0}', space=smem, size = 0x200, scoped, tag = 'input window, operand 3, single buffered']
    #allocation10 [shape = 's32[1]{0}', space=sflag, size = 0x4, scoped, tag = 'scoped memory for tpu_custom_call.1']
    #allocation11 [shape = 'u8[512]{0}', space=smem, size = 0x200, scoped, tag = 'input window, operand 4, single buffered']
    #allocation12 [shape = 'u8[512]{0}', space=smem, size = 0x200, scoped, tag = 'input window, operand 5, single buffered']
    #allocation13 [shape = 's32[1]{0}', space=sflag, size = 0x4, scoped, tag = 'scoped memory for tpu_custom_call.1']
    #allocation14 [shape = 'u8[512]{0}', space=smem, size = 0x200, scoped, tag = 'input window, operand 6, single buffered']
    #allocation15 [shape = 'u8[512]{0}', space=smem, size = 0x200, scoped, tag = 'input window, operand 7, single buffered']
    #allocation16 [shape = 's32[1]{0}', space=sflag, size = 0x4, scoped, tag = 'scoped memory for tpu_custom_call.1']
    #allocation17 [shape = 'u8[49152]{0}', space=vmem, size = 0xc000, scoped, tag = 'output window, operand 0']
    %13 = vsyncpa [#allocation3], 0
    %s14 = scalar_lea.sflag [#allocation3], 1
    %15 = vsyncpa %s14, 0
    %16 = vsyncpa [#allocation7], 0
    %s17 = scalar_lea.sflag [#allocation7], 1
    %18 = vsyncpa %s17, 0
    %19 = vsyncpa [#allocation5], 0
    %20 = vsyncpa [#allocation10], 0
    %21 = vsyncpa [#allocation13], 0
    %22 = vsyncpa [#allocation16], 0
    %23 = vsyncpa [#allocation4], 0
    %s24 = scalar_lea.sflag [#allocation4], 1
    %25 = vsyncpa %s24, 0
    loop: start=0, step=1, limit=4
    $region2: #{tpu_custom_call.1} parent=1 // loop_pre_header
      _
    $region3: #{tpu_custom_call.1} parent=1 // loop_header
      %s27 = sphi 0, %s31
      %p28 = scmp.ge.s32.totalorder %s27, 4
      %s34 = sphi 0, %s46
      %s35 = sphi 0, %s42
      %s36 = sphi 0, %s34
      %s37 = sphi 0, %s35
      %s38 = sphi 0, %s36
      %s39 = sphi 0, %s37
      %s51 = sphi 0, %s53
      %s54 = sphi 0, %s51
      %s55 = sphi 0, %s54
      %s71 = sphi 0, %s55
      %s79 = sphi 0, %s81
      %s82 = sphi 0, %s79
      %s83 = sphi 0, %s82
      %s99 = sphi 0, %s83
      %s103 = sphi 0, %s103
      %s105 = sphi 0, %s103
      %s106 = sphi 0, %s105
      %s120 = sphi 0, %s106
      %s124 = sphi 0, %s124
      %s126 = sphi 0, %s124
      %s127 = sphi 0, %s126
      %s141 = sphi 0, %s127
      %s145 = sphi 0, %s145
      %s147 = sphi 0, %s145
      %s148 = sphi 0, %s147
      %s162 = sphi 0, %s148
      %s166 = sphi 0, %s166
      %s168 = sphi 0, %s166
      %s169 = sphi 0, %s168
      %s183 = sphi 0, %s169
      %s187 = sphi 0, %s187
      %s189 = sphi 0, %s187
      %s190 = sphi 0, %s189
      %s204 = sphi 0, %s190
      %s208 = sphi 0, %s208
      %s210 = sphi 0, %s208
      %s211 = sphi 0, %s210
      %s225 = sphi 0, %s211
      %s233 = sphi 0, %s235
      %s236 = sphi 0, %s233
      %s237 = sphi 0, %s236
      %s253 = sphi 0, %s237
    $region4: #{tpu_custom_call.1} parent=1 // loop_header_branch
      %30 = sbr.rel (%p28) target = $region8
    $region5: #{tpu_custom_call.1} parent=1 // loop_body
      %s32 = ssub.s32 %s27, 1
      %s33 = ssub.s32 %s27, 2
      %s40 = sadd.s32 1, %s35
      %p41 = scmp.ge.s32.totalorder %s40, 1
      %s42 = scalar_select %p41, 0, %s40
      %s43 = sadd.s32 1, %s34
      %s44 = scalar_select %p41, %s43, %s34
      %p45 = scmp.ge.s32.totalorder %s44, 2
      %s46 = scalar_select %p45, 0, %s44
      %s47 = ssub.s32 %s34, %s46
      %s48 = ssub.s32 %s35, %s42
      %s49 = sor.u32 %s47, %s48
      %p50 = scmp.eq.s32.totalorder %s49, 0
      %s52 = sadd.s32 %s51, 1
      %s53 = scalar_select %p50, %s51, %s52
      %p56 = pneg %p50
      %p57 = scmp.eq.s32.totalorder %s27, 1
      %p58 = por %p56, %p57
      %p59 = scmp.ne.s32.totalorder %s51, %s54
      %p60 = scmp.eq.s32.totalorder %s27, 0
      %p61 = por %p59, %p60
      %p62 = scmp.ne.s32.totalorder %s51, %s54
      %p63 = scmp.eq.s32.totalorder %s32, 1
      %p64 = por %p62, %p63
      %p65 = scmp.ne.s32.totalorder %s54, %s55
      %p66 = scmp.eq.s32.totalorder %s32, 0
      %p67 = por %p65, %p66
      %p68 = scmp.ne.s32.totalorder %s54, %s55
      %p69 = scmp.eq.s32.totalorder %s33, 1
      %p70 = por %p68, %p69
      %p72 = scmp.ne.s32.totalorder %s55, %s71
      %p73 = scmp.eq.s32.totalorder %s33, 0
      %p74 = por %p72, %p73
      %s75 = ssub.s32 %s34, %s46
      %s76 = ssub.s32 %s35, %s42
      %s77 = sor.u32 %s75, %s76
      %p78 = scmp.eq.s32.totalorder %s77, 0
      %s80 = sadd.s32 %s79, 1
      %s81 = scalar_select %p78, %s79, %s80
      %p84 = pneg %p78
      %p85 = scmp.eq.s32.totalorder %s27, 1
      %p86 = por %p84, %p85
      %p87 = scmp.ne.s32.totalorder %s79, %s82
      %p88 = scmp.eq.s32.totalorder %s27, 0
      %p89 = por %p87, %p88
      %p90 = scmp.ne.s32.totalorder %s79, %s82
      %p91 = scmp.eq.s32.totalorder %s32, 1
      %p92 = por %p90, %p91
      %p93 = scmp.ne.s32.totalorder %s82, %s83
      %p94 = scmp.eq.s32.totalorder %s32, 0
      %p95 = por %p93, %p94
      %p96 = scmp.ne.s32.totalorder %s82, %s83
      %p97 = scmp.eq.s32.totalorder %s33, 1
      %p98 = por %p96, %p97
      %p100 = scmp.ne.s32.totalorder %s83, %s99
      %p101 = scmp.eq.s32.totalorder %s33, 0
      %p102 = por %p100, %p101
      %s104 = sadd.s32 %s103, 1
      %p107 = scmp.eq.s32.totalorder %s27, 1
      %p108 = scmp.ne.s32.totalorder %s103, %s105
      %p109 = scmp.eq.s32.totalorder %s27, 0
      %p110 = por %p108, %p109
      %p111 = scmp.ne.s32.totalorder %s103, %s105
      %p112 = scmp.eq.s32.totalorder %s32, 1
      %p113 = por %p111, %p112
      %p114 = scmp.ne.s32.totalorder %s105, %s106
      %p115 = scmp.eq.s32.totalorder %s32, 0
      %p116 = por %p114, %p115
      %p117 = scmp.ne.s32.totalorder %s105, %s106
      %p118 = scmp.eq.s32.totalorder %s33, 1
      %p119 = por %p117, %p118
      %p121 = scmp.ne.s32.totalorder %s106, %s120
      %p122 = scmp.eq.s32.totalorder %s33, 0
      %p123 = por %p121, %p122
      %s125 = sadd.s32 %s124, 1
      %p128 = scmp.eq.s32.totalorder %s27, 1
      %p129 = scmp.ne.s32.totalorder %s124, %s126
      %p130 = scmp.eq.s32.totalorder %s27, 0
      %p131 = por %p129, %p130
      %p132 = scmp.ne.s32.totalorder %s124, %s126
      %p133 = scmp.eq.s32.totalorder %s32, 1
      %p134 = por %p132, %p133
      %p135 = scmp.ne.s32.totalorder %s126, %s127
      %p136 = scmp.eq.s32.totalorder %s32, 0
      %p137 = por %p135, %p136
      %p138 = scmp.ne.s32.totalorder %s126, %s127
      %p139 = scmp.eq.s32.totalorder %s33, 1
      %p140 = por %p138, %p139
      %p142 = scmp.ne.s32.totalorder %s127, %s141
      %p143 = scmp.eq.s32.totalorder %s33, 0
      %p144 = por %p142, %p143
      %s146 = sadd.s32 %s145, 1
      %p149 = scmp.eq.s32.totalorder %s27, 1
      %p150 = scmp.ne.s32.totalorder %s145, %s147
      %p151 = scmp.eq.s32.totalorder %s27, 0
      %p152 = por %p150, %p151
      %p153 = scmp.ne.s32.totalorder %s145, %s147
      %p154 = scmp.eq.s32.totalorder %s32, 1
      %p155 = por %p153, %p154
      %p156 = scmp.ne.s32.totalorder %s147, %s148
      %p157 = scmp.eq.s32.totalorder %s32, 0
      %p158 = por %p156, %p157
      %p159 = scmp.ne.s32.totalorder %s147, %s148
      %p160 = scmp.eq.s32.totalorder %s33, 1
      %p161 = por %p159, %p160
      %p163 = scmp.ne.s32.totalorder %s148, %s162
      %p164 = scmp.eq.s32.totalorder %s33, 0
      %p165 = por %p163, %p164
      %s167 = sadd.s32 %s166, 1
      %p170 = scmp.eq.s32.totalorder %s27, 1
      %p171 = scmp.ne.s32.totalorder %s166, %s168
      %p172 = scmp.eq.s32.totalorder %s27, 0
      %p173 = por %p171, %p172
      %p174 = scmp.ne.s32.totalorder %s166, %s168
      %p175 = scmp.eq.s32.totalorder %s32, 1
      %p176 = por %p174, %p175
      %p177 = scmp.ne.s32.totalorder %s168, %s169
      %p178 = scmp.eq.s32.totalorder %s32, 0
      %p179 = por %p177, %p178
      %p180 = scmp.ne.s32.totalorder %s168, %s169
      %p181 = scmp.eq.s32.totalorder %s33, 1
      %p182 = por %p180, %p181
      %p184 = scmp.ne.s32.totalorder %s169, %s183
      %p185 = scmp.eq.s32.totalorder %s33, 0
      %p186 = por %p184, %p185
      %s188 = sadd.s32 %s187, 1
      %p191 = scmp.eq.s32.totalorder %s27, 1
      %p192 = scmp.ne.s32.totalorder %s187, %s189
      %p193 = scmp.eq.s32.totalorder %s27, 0
      %p194 = por %p192, %p193
      %p195 = scmp.ne.s32.totalorder %s187, %s189
      %p196 = scmp.eq.s32.totalorder %s32, 1
      %p197 = por %p195, %p196
      %p198 = scmp.ne.s32.totalorder %s189, %s190
      %p199 = scmp.eq.s32.totalorder %s32, 0
      %p200 = por %p198, %p199
      %p201 = scmp.ne.s32.totalorder %s189, %s190
      %p202 = scmp.eq.s32.totalorder %s33, 1
      %p203 = por %p201, %p202
      %p205 = scmp.ne.s32.totalorder %s190, %s204
      %p206 = scmp.eq.s32.totalorder %s33, 0
      %p207 = por %p205, %p206
      %s209 = sadd.s32 %s208, 1
      %p212 = scmp.eq.s32.totalorder %s27, 1
      %p213 = scmp.ne.s32.totalorder %s208, %s210
      %p214 = scmp.eq.s32.totalorder %s27, 0
      %p215 = por %p213, %p214
      %p216 = scmp.ne.s32.totalorder %s208, %s210
      %p217 = scmp.eq.s32.totalorder %s32, 1
      %p218 = por %p216, %p217
      %p219 = scmp.ne.s32.totalorder %s210, %s211
      %p220 = scmp.eq.s32.totalorder %s32, 0
      %p221 = por %p219, %p220
      %p222 = scmp.ne.s32.totalorder %s210, %s211
      %p223 = scmp.eq.s32.totalorder %s33, 1
      %p224 = por %p222, %p223
      %p226 = scmp.ne.s32.totalorder %s211, %s225
      %p227 = scmp.eq.s32.totalorder %s33, 0
      %p228 = por %p226, %p227
      %s229 = ssub.s32 %s34, %s46
      %s230 = ssub.s32 %s35, %s42
      %s231 = sor.u32 %s229, %s230
      %p232 = scmp.eq.s32.totalorder %s231, 0
      %s234 = sadd.s32 %s233, 1
      %s235 = scalar_select %p232, %s233, %s234
      %p238 = pneg %p232
      %p239 = scmp.eq.s32.totalorder %s27, 1
      %p240 = por %p238, %p239
      %p241 = scmp.ne.s32.totalorder %s233, %s236
      %p242 = scmp.eq.s32.totalorder %s27, 0
      %p243 = por %p241, %p242
      %p244 = scmp.ne.s32.totalorder %s233, %s236
      %p245 = scmp.eq.s32.totalorder %s32, 1
      %p246 = por %p244, %p245
      %p247 = scmp.ne.s32.totalorder %s236, %s237
      %p248 = scmp.eq.s32.totalorder %s32, 0
      %p249 = por %p247, %p248
      %p250 = scmp.ne.s32.totalorder %s236, %s237
      %p251 = scmp.eq.s32.totalorder %s33, 1
      %p252 = por %p250, %p251
      %p254 = scmp.ne.s32.totalorder %s237, %s253
      %p255 = scmp.eq.s32.totalorder %s33, 0
      %p256 = por %p254, %p255
      %p257 = scmp.le.s32.totalorder 1, %s27
      %p258 = scmp.lt.s32.totalorder %s27, 3
      %p259 = pnand %p257, %p258
      %p260 = pneg %p259
      // Predicated region
      $region9: #{tpu_custom_call.1} parent=5 // pred_check
        _
      $region10: #{tpu_custom_call.1} parent=5 // pred_check_branch
        %262 = sbr.rel (%p259) target = $region12
      $region11: #{tpu_custom_call.1} parent=5 // pred_region
        %s263 = ssub.s32 %s27, 1
        // Predicated region
        $region13: #{tpu_custom_call.1} parent=11 // pred_check
          %p264 = pneg %p116
        $region14: #{tpu_custom_call.1} parent=11 // pred_check_branch
          %266 = sbr.rel (%p264) target = $region16
        $region15: #{tpu_custom_call.1} parent=11 // pred_region
          %s268 = ssub.s32 16, 16
          %269 = vsyncadd [#allocation5], %s268
          %s271 = sshll.u32 %s2, 4
          %s272 = int_to_ptr.vmem [resolvable:$true] %s271
          %274 = dma.vmem_to_smem %s272, 16, [#allocation8], [#allocation5]
        $region16: #{tpu_custom_call.1} parent=11 // pred_fallthru
          _
        // Predicated region
        $region17: #{tpu_custom_call.1} parent=11 // pred_check
          %p275 = pneg %p137
        $region18: #{tpu_custom_call.1} parent=11 // pred_check_branch
          %277 = sbr.rel (%p275) target = $region20
        $region19: #{tpu_custom_call.1} parent=11 // pred_region
          %s279 = ssub.s32 16, 16
          %280 = vsyncadd [#allocation10], %s279
          %s282 = sshll.u32 %s3, 4
          %s283 = int_to_ptr.vmem [resolvable:$true] %s282
          %285 = dma.vmem_to_smem %s283, 16, [#allocation9], [#allocation10]
        $region20: #{tpu_custom_call.1} parent=11 // pred_fallthru
          _
        // Predicated region
        $region21: #{tpu_custom_call.1} parent=11 // pred_check
          %p286 = pneg %p158
        $region22: #{tpu_custom_call.1} parent=11 // pred_check_branch
          %288 = sbr.rel (%p286) target = $region24
        $region23: #{tpu_custom_call.1} parent=11 // pred_region
          %s290 = ssub.s32 16, 16
          %291 = vsyncadd [#allocation10], %s290
          %s293 = sshll.u32 %s4, 4
          %s294 = int_to_ptr.vmem [resolvable:$true] %s293
          %296 = dma.vmem_to_smem %s294, 16, [#allocation11], [#allocation10]
        $region24: #{tpu_custom_call.1} parent=11 // pred_fallthru
          _
        // Predicated region
        $region25: #{tpu_custom_call.1} parent=11 // pred_check
          %p297 = pneg %p179
        $region26: #{tpu_custom_call.1} parent=11 // pred_check_branch
          %299 = sbr.rel (%p297) target = $region28
        $region27: #{tpu_custom_call.1} parent=11 // pred_region
          %s301 = ssub.s32 16, 16
          %302 = vsyncadd [#allocation13], %s301
          %s304 = sshll.u32 %s5, 4
          %s305 = int_to_ptr.vmem [resolvable:$true] %s304
          %307 = dma.vmem_to_smem %s305, 16, [#allocation12], [#allocation13]
        $region28: #{tpu_custom_call.1} parent=11 // pred_fallthru
          _
        // Predicated region
        $region29: #{tpu_custom_call.1} parent=11 // pred_check
          %p308 = pneg %p200
        $region30: #{tpu_custom_call.1} parent=11 // pred_check_branch
          %310 = sbr.rel (%p308) target = $region32
        $region31: #{tpu_custom_call.1} parent=11 // pred_region
          %s312 = ssub.s32 16, 16
          %313 = vsyncadd [#allocation13], %s312
          %s315 = sshll.u32 %s6, 4
          %s316 = int_to_ptr.vmem [resolvable:$true] %s315
          %318 = dma.vmem_to_smem %s316, 16, [#allocation14], [#allocation13]
        $region32: #{tpu_custom_call.1} parent=11 // pred_fallthru
          _
        // Predicated region
        $region33: #{tpu_custom_call.1} parent=11 // pred_check
          %p319 = pneg %p221
        $region34: #{tpu_custom_call.1} parent=11 // pred_check_branch
          %321 = sbr.rel (%p319) target = $region36
        $region35: #{tpu_custom_call.1} parent=11 // pred_region
          %s323 = ssub.s32 16, 16
          %324 = vsyncadd [#allocation16], %s323
          %s326 = sshll.u32 %s7, 4
          %s327 = int_to_ptr.vmem [resolvable:$true] %s326
          %329 = dma.vmem_to_smem %s327, 16, [#allocation15], [#allocation16]
        $region36: #{tpu_custom_call.1} parent=11 // pred_fallthru
          _
      $region12: #{tpu_custom_call.1} parent=5 // pred_fallthru
        _
      %p330 = scmp.lt.s32.totalorder %s27, 2
      // Predicated region
      $region37: #{tpu_custom_call.1} parent=5 // pred_check
        %p331 = pneg %p330
      $region38: #{tpu_custom_call.1} parent=5 // pred_check_branch
        %333 = sbr.rel (%p331) target = $region40
      $region39: #{tpu_custom_call.1} parent=5 // pred_region
        // Predicated region
        $region41: #{tpu_custom_call.1} parent=39 // pred_check
          %p334 = pneg %p61
        $region42: #{tpu_custom_call.1} parent=39 // pred_check_branch
          %336 = sbr.rel (%p334) target = $region44
        $region43: #{tpu_custom_call.1} parent=39 // pred_region
          %s337 = sand.u32 %s51, 1
          %s338 = scalar_lea.sflag [#allocation3], %s337
          %s339 = sand.u32 %s51, 1
          %s340 = smul.addr %s339, 32
          %s341 = scalar_lea.vmem [#allocation2], %s340
          %s343 = ssub.s32 512, 512
          %344 = vsyncadd %s338, %s343
          %s345 = smul.addr %s34, 8
          %s346 = sadd.s32 %s35, %s345
          %s347 = smul.addr %s346, 64
          %s348 = scalar_lea.hbm %s0, %s347
          %s349 = sshll.u32 %s341, 4
          %s350 = int_to_ptr.vmem [resolvable:$true] %s349
          %355 = dma.hbm_to_vmem [thread:$0]  %s348, 512, %s350, %s338, 64, 64, 4
        $region44: #{tpu_custom_call.1} parent=39 // pred_fallthru
          _
        // Predicated region
        $region45: #{tpu_custom_call.1} parent=39 // pred_check
          %p356 = pneg %p89
        $region46: #{tpu_custom_call.1} parent=39 // pred_check_branch
          %358 = sbr.rel (%p356) target = $region48
        $region47: #{tpu_custom_call.1} parent=39 // pred_region
          %s359 = sand.u32 %s79, 1
          %s360 = scalar_lea.sflag [#allocation7], %s359
          %s361 = sand.u32 %s79, 1
          %s362 = smul.addr %s361, 64
          %s363 = scalar_lea.vmem [#allocation6], %s362
          %s365 = ssub.s32 1024, 1024
          %366 = vsyncadd %s360, %s365
          %s367 = smul.addr %s34, 16
          %s368 = sadd.s32 %s35, %s367
          %s369 = smul.addr %s368, 64
          %s370 = scalar_lea.hbm %s1, %s369
          %s371 = sshll.u32 %s363, 4
          %s372 = int_to_ptr.vmem [resolvable:$true] %s371
          %377 = dma.hbm_to_vmem [thread:$0]  %s370, 1024, %s372, %s360, 64, 64, 4
        $region48: #{tpu_custom_call.1} parent=39 // pred_fallthru
          _
      $region40: #{tpu_custom_call.1} parent=5 // pred_fallthru
        _
      %p378 = scmp.le.s32.totalorder 1, %s27
      %p379 = scmp.lt.s32.totalorder %s27, 3
      %p380 = pnand %p378, %p379
      %p381 = pneg %p380
      // Predicated region
      $region49: #{tpu_custom_call.1} parent=5 // pred_check
        _
      $region50: #{tpu_custom_call.1} parent=5 // pred_check_branch
        %383 = sbr.rel (%p380) target = $region52
      $region51: #{tpu_custom_call.1} parent=5 // pred_region
        %s384 = ssub.s32 %s27, 1
        %s385 = sand.u32 %s54, 1
        %s386 = scalar_lea.sflag [#allocation3], %s385
        %s387 = sand.u32 %s54, 1
        %s388 = smul.addr %s387, 32
        %s389 = scalar_lea.vmem [#allocation2], %s388
        // Predicated region
        $region53: #{tpu_custom_call.1} parent=51 // pred_check
          %p390 = pneg %p67
        $region54: #{tpu_custom_call.1} parent=51 // pred_check_branch
          %392 = sbr.rel (%p390) target = $region56
        $region55: #{tpu_custom_call.1} parent=51 // pred_region
          %393 = dma.done %s386, 512
        $region56: #{tpu_custom_call.1} parent=51 // pred_fallthru
          _
        %s394 = sand.u32 %s82, 1
        %s395 = scalar_lea.sflag [#allocation7], %s394
        %s396 = sand.u32 %s82, 1
        %s397 = smul.addr %s396, 64
        %s398 = scalar_lea.vmem [#allocation6], %s397
        // Predicated region
        $region57: #{tpu_custom_call.1} parent=51 // pred_check
          %p399 = pneg %p95
        $region58: #{tpu_custom_call.1} parent=51 // pred_check_branch
          %401 = sbr.rel (%p399) target = $region60
        $region59: #{tpu_custom_call.1} parent=51 // pred_region
          %402 = dma.done %s395, 1024
        $region60: #{tpu_custom_call.1} parent=51 // pred_fallthru
          _
        // Predicated region
        $region61: #{tpu_custom_call.1} parent=51 // pred_check
          %p403 = pneg %p116
        $region62: #{tpu_custom_call.1} parent=51 // pred_check_branch
          %405 = sbr.rel (%p403) target = $region64
        $region63: #{tpu_custom_call.1} parent=51 // pred_region
          %406 = dma.done [#allocation5], 16
        $region64: #{tpu_custom_call.1} parent=51 // pred_fallthru
          _
        // Predicated region
        $region65: #{tpu_custom_call.1} parent=51 // pred_check
          %p407 = pneg %p137
        $region66: #{tpu_custom_call.1} parent=51 // pred_check_branch
          %409 = sbr.rel (%p407) target = $region68
        $region67: #{tpu_custom_call.1} parent=51 // pred_region
          %410 = dma.done [#allocation10], 16
        $region68: #{tpu_custom_call.1} parent=51 // pred_fallthru
          _
        // Predicated region
        $region69: #{tpu_custom_call.1} parent=51 // pred_check
          %p411 = pneg %p158
        $region70: #{tpu_custom_call.1} parent=51 // pred_check_branch
          %413 = sbr.rel (%p411) target = $region72
        $region71: #{tpu_custom_call.1} parent=51 // pred_region
          %414 = dma.done [#allocation10], 16
        $region72: #{tpu_custom_call.1} parent=51 // pred_fallthru
          _
        // Predicated region
        $region73: #{tpu_custom_call.1} parent=51 // pred_check
          %p415 = pneg %p179
        $region74: #{tpu_custom_call.1} parent=51 // pred_check_branch
          %417 = sbr.rel (%p415) target = $region76
        $region75: #{tpu_custom_call.1} parent=51 // pred_region
          %418 = dma.done [#allocation13], 16
        $region76: #{tpu_custom_call.1} parent=51 // pred_fallthru
          _
        // Predicated region
        $region77: #{tpu_custom_call.1} parent=51 // pred_check
          %p419 = pneg %p200
        $region78: #{tpu_custom_call.1} parent=51 // pred_check_branch
          %421 = sbr.rel (%p419) target = $region80
        $region79: #{tpu_custom_call.1} parent=51 // pred_region
          %422 = dma.done [#allocation13], 16
        $region80: #{tpu_custom_call.1} parent=51 // pred_fallthru
          _
        // Predicated region
        $region81: #{tpu_custom_call.1} parent=51 // pred_check
          %p423 = pneg %p221
        $region82: #{tpu_custom_call.1} parent=51 // pred_check_branch
          %425 = sbr.rel (%p423) target = $region84
        $region83: #{tpu_custom_call.1} parent=51 // pred_region
          %426 = dma.done [#allocation16], 16
        $region84: #{tpu_custom_call.1} parent=51 // pred_fallthru
          _
        %427 = sfence
        %s428 = sand.u32 %s54, 1
        %s429 = scalar_lea.sflag [#allocation3], %s428
        %s430 = sand.u32 %s54, 1
        %s431 = smul.addr %s430, 32
        %s432 = scalar_lea.vmem [#allocation2], %s431
        %p433 = pneg %p67
        %p434 = pneg %p64
        %s435 = sand.u32 %s82, 1
        %s436 = scalar_lea.sflag [#allocation7], %s435
        %s437 = sand.u32 %s82, 1
        %s438 = smul.addr %s437, 64
        %s439 = scalar_lea.vmem [#allocation6], %s438
        %p440 = pneg %p95
        %p441 = pneg %p92
        %p442 = pneg %p116
        %p443 = pneg %p113
        %p444 = pneg %p137
        %p445 = pneg %p134
        %p446 = pneg %p158
        %p447 = pneg %p155
        %p448 = pneg %p179
        %p449 = pneg %p176
        %p450 = pneg %p200
        %p451 = pneg %p197
        %p452 = pneg %p221
        %p453 = pneg %p218
        %p454 = pneg %p249
        %p455 = pneg %p246
        %s456 = sand.u32 %s236, 1
        %s457 = scalar_lea.sflag [#allocation4], %s456
        %s458 = sand.u32 %s236, 1
        %s459 = smul.addr %s458, 48
        %s460 = scalar_lea.vmem [#allocation17], %s459
        %v461 = vld [vmem:[%s389] sm:$0xf]
        %v462 = vld [vmem:[%s389 + $0x4] sm:$0xf]
        %v463 = vld [vmem:[%s389 + $0x8] sm:$0xf]
        %v464 = vld [vmem:[%s389 + $0xc] sm:$0xf]
        %v465 = vld [vmem:[%s389 + $0x10] sm:$0xf]
        %v466 = vld [vmem:[%s389 + $0x14] sm:$0xf]
        %v467 = vld [vmem:[%s389 + $0x18] sm:$0xf]
        %v468 = vld [vmem:[%s389 + $0x1c] sm:$0xf]
        %v469 = vld [vmem:[%s398] sm:$0xf]
        %v470 = vld [vmem:[%s398 + $0x4] sm:$0xf]
        %v471 = vld [vmem:[%s398 + $0x8] sm:$0xf]
        %v472 = vld [vmem:[%s398 + $0xc] sm:$0xf]
        %v473 = vld [vmem:[%s398 + $0x10] sm:$0xf]
        %v474 = vld [vmem:[%s398 + $0x14] sm:$0xf]
        %v475 = vld [vmem:[%s398 + $0x18] sm:$0xf]
        %v476 = vld [vmem:[%s398 + $0x1c] sm:$0xf]
        %v477 = vld [vmem:[%s398 + $0x20] sm:$0xf]
        %v478 = vld [vmem:[%s398 + $0x24] sm:$0xf]
        %v479 = vld [vmem:[%s398 + $0x28] sm:$0xf]
        %v480 = vld [vmem:[%s398 + $0x2c] sm:$0xf]
        %v481 = vld [vmem:[%s398 + $0x30] sm:$0xf]
        %v482 = vld [vmem:[%s398 + $0x34] sm:$0xf]
        %v483 = vld [vmem:[%s398 + $0x38] sm:$0xf]
        %v484 = vld [vmem:[%s398 + $0x3c] sm:$0xf]
        %s485 = sld [smem:[#allocation8]]
        %v486 = vstv %s485
        %v487 = vmul.f32 %v469, %v486
        %v488 = vmul.f32 %v470, %v486
        %v489 = vmul.f32 %v471, %v486
        %v490 = vmul.f32 %v472, %v486
        %s491 = sld [smem:[#allocation8 + $0x1]]
        %v492 = vstv %s491
        %v493 = vmul.f32 %v473, %v492
        %v494 = vmul.f32 %v474, %v492
        %v495 = vmul.f32 %v475, %v492
        %v496 = vmul.f32 %v476, %v492
        %v497 = vadd.f32 %v487, %v493
        %v498 = vadd.f32 %v488, %v494
        %v499 = vadd.f32 %v489, %v495
        %v500 = vadd.f32 %v490, %v496
        %s501 = sld [smem:[#allocation8 + $0x2]]
        %v502 = vstv %s501
        %v503 = vmul.f32 %v477, %v502
        %v504 = vmul.f32 %v478, %v502
        %v505 = vmul.f32 %v479, %v502
        %v506 = vmul.f32 %v480, %v502
        %v507 = vadd.f32 %v497, %v503
        %v508 = vadd.f32 %v498, %v504
        %v509 = vadd.f32 %v499, %v505
        %v510 = vadd.f32 %v500, %v506
        %s511 = sld [smem:[#allocation8 + $0x3]]
        %v512 = vstv %s511
        %v513 = vmul.f32 %v481, %v512
        %v514 = vmul.f32 %v482, %v512
        %v515 = vmul.f32 %v483, %v512
        %v516 = vmul.f32 %v484, %v512
        %v517 = vadd.f32 %v507, %v513
        %v518 = vadd.f32 %v508, %v514
        %v519 = vadd.f32 %v509, %v515
        %v520 = vadd.f32 %v510, %v516
        %s521 = sld [smem:[#allocation9]]
        %v522 = vstv %s521
        %v523 = vadd.f32 %v517, %v522
        %v524 = vadd.f32 %v518, %v522
        %v525 = vadd.f32 %v519, %v522
        %v526 = vadd.f32 %v520, %v522
        %v527 = vmax.f32 %v523, 0.0
        %v528 = vmax.f32 %v524, 0.0
        %v529 = vmax.f32 %v525, 0.0
        %v530 = vmax.f32 %v526, 0.0
        %s531 = sld [smem:[#allocation8 + $0x4]]
        %v532 = vstv %s531
        %v533 = vmul.f32 %v469, %v532
        %v534 = vmul.f32 %v470, %v532
        %v535 = vmul.f32 %v471, %v532
        %v536 = vmul.f32 %v472, %v532
        %s537 = sld [smem:[#allocation8 + $0x5]]
        %v538 = vstv %s537
        %v539 = vmul.f32 %v473, %v538
        %v540 = vmul.f32 %v474, %v538
        %v541 = vmul.f32 %v475, %v538
        %v542 = vmul.f32 %v476, %v538
        %v543 = vadd.f32 %v533, %v539
        %v544 = vadd.f32 %v534, %v540
        %v545 = vadd.f32 %v535, %v541
        %v546 = vadd.f32 %v536, %v542
        %s547 = sld [smem:[#allocation8 + $0x6]]
        %v548 = vstv %s547
        %v549 = vmul.f32 %v477, %v548
        %v550 = vmul.f32 %v478, %v548
        %v551 = vmul.f32 %v479, %v548
        %v552 = vmul.f32 %v480, %v548
        %v553 = vadd.f32 %v543, %v549
        %v554 = vadd.f32 %v544, %v550
        %v555 = vadd.f32 %v545, %v551
        %v556 = vadd.f32 %v546, %v552
        %s557 = sld [smem:[#allocation8 + $0x7]]
        %v558 = vstv %s557
        %v559 = vmul.f32 %v481, %v558
        %v560 = vmul.f32 %v482, %v558
        %v561 = vmul.f32 %v483, %v558
        %v562 = vmul.f32 %v484, %v558
        %v563 = vadd.f32 %v553, %v559
        %v564 = vadd.f32 %v554, %v560
        %v565 = vadd.f32 %v555, %v561
        %v566 = vadd.f32 %v556, %v562
        %s567 = sld [smem:[#allocation9 + $0x1]]
        %v568 = vstv %s567
        %v569 = vadd.f32 %v563, %v568
        %v570 = vadd.f32 %v564, %v568
        %v571 = vadd.f32 %v565, %v568
        %v572 = vadd.f32 %v566, %v568
        %v573 = vmax.f32 %v569, 0.0
        %v574 = vmax.f32 %v570, 0.0
        %v575 = vmax.f32 %v571, 0.0
        %v576 = vmax.f32 %v572, 0.0
        %s577 = sld [smem:[#allocation8 + $0x8]]
        %v578 = vstv %s577
        %v579 = vmul.f32 %v469, %v578
        %v580 = vmul.f32 %v470, %v578
        %v581 = vmul.f32 %v471, %v578
        %v582 = vmul.f32 %v472, %v578
        %s583 = sld [smem:[#allocation8 + $0x9]]
        %v584 = vstv %s583
        %v585 = vmul.f32 %v473, %v584
        %v586 = vmul.f32 %v474, %v584
        %v587 = vmul.f32 %v475, %v584
        %v588 = vmul.f32 %v476, %v584
        %v589 = vadd.f32 %v579, %v585
        %v590 = vadd.f32 %v580, %v586
        %v591 = vadd.f32 %v581, %v587
        %v592 = vadd.f32 %v582, %v588
        %s593 = sld [smem:[#allocation8 + $0xa]]
        %v594 = vstv %s593
        %v595 = vmul.f32 %v477, %v594
        %v596 = vmul.f32 %v478, %v594
        %v597 = vmul.f32 %v479, %v594
        %v598 = vmul.f32 %v480, %v594
        %v599 = vadd.f32 %v589, %v595
        %v600 = vadd.f32 %v590, %v596
        %v601 = vadd.f32 %v591, %v597
        %v602 = vadd.f32 %v592, %v598
        %s603 = sld [smem:[#allocation8 + $0xb]]
        %v604 = vstv %s603
        %v605 = vmul.f32 %v481, %v604
        %v606 = vmul.f32 %v482, %v604
        %v607 = vmul.f32 %v483, %v604
        %v608 = vmul.f32 %v484, %v604
        %v609 = vadd.f32 %v599, %v605
        %v610 = vadd.f32 %v600, %v606
        %v611 = vadd.f32 %v601, %v607
        %v612 = vadd.f32 %v602, %v608
        %s613 = sld [smem:[#allocation9 + $0x2]]
        %v614 = vstv %s613
        %v615 = vadd.f32 %v609, %v614
        %v616 = vadd.f32 %v610, %v614
        %v617 = vadd.f32 %v611, %v614
        %v618 = vadd.f32 %v612, %v614
        %v619 = vmax.f32 %v615, 0.0
        %v620 = vmax.f32 %v616, 0.0
        %v621 = vmax.f32 %v617, 0.0
        %v622 = vmax.f32 %v618, 0.0
        %s623 = sld [smem:[#allocation8 + $0xc]]
        %v624 = vstv %s623
        %v625 = vmul.f32 %v469, %v624
        %v626 = vmul.f32 %v470, %v624
        %v627 = vmul.f32 %v471, %v624
        %v628 = vmul.f32 %v472, %v624
        %s629 = sld [smem:[#allocation8 + $0xd]]
        %v630 = vstv %s629
        %v631 = vmul.f32 %v473, %v630
        %v632 = vmul.f32 %v474, %v630
        %v633 = vmul.f32 %v475, %v630
        %v634 = vmul.f32 %v476, %v630
        %v635 = vadd.f32 %v625, %v631
        %v636 = vadd.f32 %v626, %v632
        %v637 = vadd.f32 %v627, %v633
        %v638 = vadd.f32 %v628, %v634
        %s639 = sld [smem:[#allocation8 + $0xe]]
        %v640 = vstv %s639
        %v641 = vmul.f32 %v477, %v640
        %v642 = vmul.f32 %v478, %v640
        %v643 = vmul.f32 %v479, %v640
        %v644 = vmul.f32 %v480, %v640
        %v645 = vadd.f32 %v635, %v641
        %v646 = vadd.f32 %v636, %v642
        %v647 = vadd.f32 %v637, %v643
        %v648 = vadd.f32 %v638, %v644
        %s649 = sld [smem:[#allocation8 + $0xf]]
        %v650 = vstv %s649
        %v651 = vmul.f32 %v481, %v650
        %v652 = vmul.f32 %v482, %v650
        %v653 = vmul.f32 %v483, %v650
        %v654 = vmul.f32 %v484, %v650
        %v655 = vadd.f32 %v645, %v651
        %v656 = vadd.f32 %v646, %v652
        %v657 = vadd.f32 %v647, %v653
        %v658 = vadd.f32 %v648, %v654
        %s659 = sld [smem:[#allocation9 + $0x3]]
        %v660 = vstv %s659
        %v661 = vadd.f32 %v655, %v660
        %v662 = vadd.f32 %v656, %v660
        %v663 = vadd.f32 %v657, %v660
        %v664 = vadd.f32 %v658, %v660
        %v665 = vmax.f32 %v661, 0.0
        %v666 = vmax.f32 %v662, 0.0
        %v667 = vmax.f32 %v663, 0.0
        %v668 = vmax.f32 %v664, 0.0
        %s669 = sld [smem:[#allocation8 + $0x10]]
        %v670 = vstv %s669
        %v671 = vmul.f32 %v469, %v670
        %v672 = vmul.f32 %v470, %v670
        %v673 = vmul.f32 %v471, %v670
        %v674 = vmul.f32 %v472, %v670
        %s675 = sld [smem:[#allocation8 + $0x11]]
        %v676 = vstv %s675
        %v677 = vmul.f32 %v473, %v676
        %v678 = vmul.f32 %v474, %v676
        %v679 = vmul.f32 %v475, %v676
        %v680 = vmul.f32 %v476, %v676
        %v681 = vadd.f32 %v671, %v677
        %v682 = vadd.f32 %v672, %v678
        %v683 = vadd.f32 %v673, %v679
        %v684 = vadd.f32 %v674, %v680
        %s685 = sld [smem:[#allocation8 + $0x12]]
        %v686 = vstv %s685
        %v687 = vmul.f32 %v477, %v686
        %v688 = vmul.f32 %v478, %v686
        %v689 = vmul.f32 %v479, %v686
        %v690 = vmul.f32 %v480, %v686
        %v691 = vadd.f32 %v681, %v687
        %v692 = vadd.f32 %v682, %v688
        %v693 = vadd.f32 %v683, %v689
        %v694 = vadd.f32 %v684, %v690
        %s695 = sld [smem:[#allocation8 + $0x13]]
        %v696 = vstv %s695
        %v697 = vmul.f32 %v481, %v696
        %v698 = vmul.f32 %v482, %v696
        %v699 = vmul.f32 %v483, %v696
        %v700 = vmul.f32 %v484, %v696
        %v701 = vadd.f32 %v691, %v697
        %v702 = vadd.f32 %v692, %v698
        %v703 = vadd.f32 %v693, %v699
        %v704 = vadd.f32 %v694, %v700
        %s705 = sld [smem:[#allocation9 + $0x4]]
        %v706 = vstv %s705
        %v707 = vadd.f32 %v701, %v706
        %v708 = vadd.f32 %v702, %v706
        %v709 = vadd.f32 %v703, %v706
        %v710 = vadd.f32 %v704, %v706
        %v711 = vmax.f32 %v707, 0.0
        %v712 = vmax.f32 %v708, 0.0
        %v713 = vmax.f32 %v709, 0.0
        %v714 = vmax.f32 %v710, 0.0
        %s715 = sld [smem:[#allocation8 + $0x14]]
        %v716 = vstv %s715
        %v717 = vmul.f32 %v469, %v716
        %v718 = vmul.f32 %v470, %v716
        %v719 = vmul.f32 %v471, %v716
        %v720 = vmul.f32 %v472, %v716
        %s721 = sld [smem:[#allocation8 + $0x15]]
        %v722 = vstv %s721
        %v723 = vmul.f32 %v473, %v722
        %v724 = vmul.f32 %v474, %v722
        %v725 = vmul.f32 %v475, %v722
        %v726 = vmul.f32 %v476, %v722
        %v727 = vadd.f32 %v717, %v723
        %v728 = vadd.f32 %v718, %v724
        %v729 = vadd.f32 %v719, %v725
        %v730 = vadd.f32 %v720, %v726
        %s731 = sld [smem:[#allocation8 + $0x16]]
        %v732 = vstv %s731
        %v733 = vmul.f32 %v477, %v732
        %v734 = vmul.f32 %v478, %v732
        %v735 = vmul.f32 %v479, %v732
        %v736 = vmul.f32 %v480, %v732
        %v737 = vadd.f32 %v727, %v733
        %v738 = vadd.f32 %v728, %v734
        %v739 = vadd.f32 %v729, %v735
        %v740 = vadd.f32 %v730, %v736
        %s741 = sld [smem:[#allocation8 + $0x17]]
        %v742 = vstv %s741
        %v743 = vmul.f32 %v481, %v742
        %v744 = vmul.f32 %v482, %v742
        %v745 = vmul.f32 %v483, %v742
        %v746 = vmul.f32 %v484, %v742
        %v747 = vadd.f32 %v737, %v743
        %v748 = vadd.f32 %v738, %v744
        %v749 = vadd.f32 %v739, %v745
        %v750 = vadd.f32 %v740, %v746
        %s751 = sld [smem:[#allocation9 + $0x5]]
        %v752 = vstv %s751
        %v753 = vadd.f32 %v747, %v752
        %v754 = vadd.f32 %v748, %v752
        %v755 = vadd.f32 %v749, %v752
        %v756 = vadd.f32 %v750, %v752
        %v757 = vmax.f32 %v753, 0.0
        %v758 = vmax.f32 %v754, 0.0
        %v759 = vmax.f32 %v755, 0.0
        %v760 = vmax.f32 %v756, 0.0
        %s761 = sld [smem:[#allocation8 + $0x18]]
        %v762 = vstv %s761
        %v763 = vmul.f32 %v469, %v762
        %v764 = vmul.f32 %v470, %v762
        %v765 = vmul.f32 %v471, %v762
        %v766 = vmul.f32 %v472, %v762
        %s767 = sld [smem:[#allocation8 + $0x19]]
        %v768 = vstv %s767
        %v769 = vmul.f32 %v473, %v768
        %v770 = vmul.f32 %v474, %v768
        %v771 = vmul.f32 %v475, %v768
        %v772 = vmul.f32 %v476, %v768
        %v773 = vadd.f32 %v763, %v769
        %v774 = vadd.f32 %v764, %v770
        %v775 = vadd.f32 %v765, %v771
        %v776 = vadd.f32 %v766, %v772
        %s777 = sld [smem:[#allocation8 + $0x1a]]
        %v778 = vstv %s777
        %v779 = vmul.f32 %v477, %v778
        %v780 = vmul.f32 %v478, %v778
        %v781 = vmul.f32 %v479, %v778
        %v782 = vmul.f32 %v480, %v778
        %v783 = vadd.f32 %v773, %v779
        %v784 = vadd.f32 %v774, %v780
        %v785 = vadd.f32 %v775, %v781
        %v786 = vadd.f32 %v776, %v782
        %s787 = sld [smem:[#allocation8 + $0x1b]]
        %v788 = vstv %s787
        %v789 = vmul.f32 %v481, %v788
        %v790 = vmul.f32 %v482, %v788
        %v791 = vmul.f32 %v483, %v788
        %v792 = vmul.f32 %v484, %v788
        %v793 = vadd.f32 %v783, %v789
        %v794 = vadd.f32 %v784, %v790
        %v795 = vadd.f32 %v785, %v791
        %v796 = vadd.f32 %v786, %v792
        %s797 = sld [smem:[#allocation9 + $0x6]]
        %v798 = vstv %s797
        %v799 = vadd.f32 %v793, %v798
        %v800 = vadd.f32 %v794, %v798
        %v801 = vadd.f32 %v795, %v798
        %v802 = vadd.f32 %v796, %v798
        %v803 = vmax.f32 %v799, 0.0
        %v804 = vmax.f32 %v800, 0.0
        %v805 = vmax.f32 %v801, 0.0
        %v806 = vmax.f32 %v802, 0.0
        %s807 = sld [smem:[#allocation8 + $0x1c]]
        %v808 = vstv %s807
        %v809 = vmul.f32 %v469, %v808
        %v810 = vmul.f32 %v470, %v808
        %v811 = vmul.f32 %v471, %v808
        %v812 = vmul.f32 %v472, %v808
        %s813 = sld [smem:[#allocation8 + $0x1d]]
        %v814 = vstv %s813
        %v815 = vmul.f32 %v473, %v814
        %v816 = vmul.f32 %v474, %v814
        %v817 = vmul.f32 %v475, %v814
        %v818 = vmul.f32 %v476, %v814
        %v819 = vadd.f32 %v809, %v815
        %v820 = vadd.f32 %v810, %v816
        %v821 = vadd.f32 %v811, %v817
        %v822 = vadd.f32 %v812, %v818
        %s823 = sld [smem:[#allocation8 + $0x1e]]
        %v824 = vstv %s823
        %v825 = vmul.f32 %v477, %v824
        %v826 = vmul.f32 %v478, %v824
        %v827 = vmul.f32 %v479, %v824
        %v828 = vmul.f32 %v480, %v824
        %v829 = vadd.f32 %v819, %v825
        %v830 = vadd.f32 %v820, %v826
        %v831 = vadd.f32 %v821, %v827
        %v832 = vadd.f32 %v822, %v828
        %s833 = sld [smem:[#allocation8 + $0x1f]]
        %v834 = vstv %s833
        %v835 = vmul.f32 %v481, %v834
        %v836 = vmul.f32 %v482, %v834
        %v837 = vmul.f32 %v483, %v834
        %v838 = vmul.f32 %v484, %v834
        %v839 = vadd.f32 %v829, %v835
        %v840 = vadd.f32 %v830, %v836
        %v841 = vadd.f32 %v831, %v837
        %v842 = vadd.f32 %v832, %v838
        %s843 = sld [smem:[#allocation9 + $0x7]]
        %v844 = vstv %s843
        %v845 = vadd.f32 %v839, %v844
        %v846 = vadd.f32 %v840, %v844
        %v847 = vadd.f32 %v841, %v844
        %v848 = vadd.f32 %v842, %v844
        %v849 = vmax.f32 %v845, 0.0
        %v850 = vmax.f32 %v846, 0.0
        %v851 = vmax.f32 %v847, 0.0
        %v852 = vmax.f32 %v848, 0.0
        %v857 = vrot.slane %v528, 7
        %vm858 = vcmask 1041409
        %v859 = vsel %vm858, %v857, %v527
        %v860 = vrot.slane %v529, 6
        %vm861 = vcmask 1042434
        %v862 = vsel %vm861, %v860, %v859
        %v863 = vrot.slane %v530, 5
        %vm864 = vcmask 1043459
        %v865 = vsel %vm864, %v863, %v862
        %v867 = vadd.f32 %v461, %v865
        %v872 = vrot.slane %v574, 7
        %v873 = vsel %vm858, %v872, %v573
        %v874 = vrot.slane %v575, 6
        %v875 = vsel %vm861, %v874, %v873
        %v876 = vrot.slane %v576, 5
        %v877 = vsel %vm864, %v876, %v875
        %v879 = vadd.f32 %v462, %v877
        %v884 = vrot.slane %v620, 7
        %v885 = vsel %vm858, %v884, %v619
        %v886 = vrot.slane %v621, 6
        %v887 = vsel %vm861, %v886, %v885
        %v888 = vrot.slane %v622, 5
        %v889 = vsel %vm864, %v888, %v887
        %v891 = vadd.f32 %v463, %v889
        %v896 = vrot.slane %v666, 7
        %v897 = vsel %vm858, %v896, %v665
        %v898 = vrot.slane %v667, 6
        %v899 = vsel %vm861, %v898, %v897
        %v900 = vrot.slane %v668, 5
        %v901 = vsel %vm864, %v900, %v899
        %v903 = vadd.f32 %v464, %v901
        %v908 = vrot.slane %v712, 7
        %v909 = vsel %vm858, %v908, %v711
        %v910 = vrot.slane %v713, 6
        %v911 = vsel %vm861, %v910, %v909
        %v912 = vrot.slane %v714, 5
        %v913 = vsel %vm864, %v912, %v911
        %v915 = vadd.f32 %v465, %v913
        %v920 = vrot.slane %v758, 7
        %v921 = vsel %vm858, %v920, %v757
        %v922 = vrot.slane %v759, 6
        %v923 = vsel %vm861, %v922, %v921
        %v924 = vrot.slane %v760, 5
        %v925 = vsel %vm864, %v924, %v923
        %v927 = vadd.f32 %v466, %v925
        %v932 = vrot.slane %v804, 7
        %v933 = vsel %vm858, %v932, %v803
        %v934 = vrot.slane %v805, 6
        %v935 = vsel %vm861, %v934, %v933
        %v936 = vrot.slane %v806, 5
        %v937 = vsel %vm864, %v936, %v935
        %v939 = vadd.f32 %v467, %v937
        %v944 = vrot.slane %v850, 7
        %v945 = vsel %vm858, %v944, %v849
        %v946 = vrot.slane %v851, 6
        %v947 = vsel %vm861, %v946, %v945
        %v948 = vrot.slane %v852, 5
        %v949 = vsel %vm864, %v948, %v947
        %v951 = vadd.f32 %v468, %v949
        %s952 = sld [smem:[#allocation11]]
        %v953 = vstv %s952
        %v954 = vmul.f32 %v867, %v953
        %s955 = sld [smem:[#allocation11 + $0x1]]
        %v956 = vstv %s955
        %v957 = vmul.f32 %v879, %v956
        %v958 = vadd.f32 %v954, %v957
        %s959 = sld [smem:[#allocation11 + $0x2]]
        %v960 = vstv %s959
        %v961 = vmul.f32 %v891, %v960
        %v962 = vadd.f32 %v958, %v961
        %s963 = sld [smem:[#allocation11 + $0x3]]
        %v964 = vstv %s963
        %v965 = vmul.f32 %v903, %v964
        %v966 = vadd.f32 %v962, %v965
        %s967 = sld [smem:[#allocation11 + $0x4]]
        %v968 = vstv %s967
        %v969 = vmul.f32 %v915, %v968
        %v970 = vadd.f32 %v966, %v969
        %s971 = sld [smem:[#allocation11 + $0x5]]
        %v972 = vstv %s971
        %v973 = vmul.f32 %v927, %v972
        %v974 = vadd.f32 %v970, %v973
        %s975 = sld [smem:[#allocation11 + $0x6]]
        %v976 = vstv %s975
        %v977 = vmul.f32 %v939, %v976
        %v978 = vadd.f32 %v974, %v977
        %s979 = sld [smem:[#allocation11 + $0x7]]
        %v980 = vstv %s979
        %v981 = vmul.f32 %v951, %v980
        %v982 = vadd.f32 %v978, %v981
        %s983 = sld [smem:[#allocation12]]
        %v984 = vstv %s983
        %v985 = vadd.f32 %v982, %v984
        %v986 = vmax.f32 %v985, 0.0
        %s987 = sld [smem:[#allocation11 + $0x8]]
        %v988 = vstv %s987
        %v989 = vmul.f32 %v867, %v988
        %s990 = sld [smem:[#allocation11 + $0x9]]
        %v991 = vstv %s990
        %v992 = vmul.f32 %v879, %v991
        %v993 = vadd.f32 %v989, %v992
        %s994 = sld [smem:[#allocation11 + $0xa]]
        %v995 = vstv %s994
        %v996 = vmul.f32 %v891, %v995
        %v997 = vadd.f32 %v993, %v996
        %s998 = sld [smem:[#allocation11 + $0xb]]
        %v999 = vstv %s998
        %v1000 = vmul.f32 %v903, %v999
        %v1001 = vadd.f32 %v997, %v1000
        %s1002 = sld [smem:[#allocation11 + $0xc]]
        %v1003 = vstv %s1002
        %v1004 = vmul.f32 %v915, %v1003
        %v1005 = vadd.f32 %v1001, %v1004
        %s1006 = sld [smem:[#allocation11 + $0xd]]
        %v1007 = vstv %s1006
        %v1008 = vmul.f32 %v927, %v1007
        %v1009 = vadd.f32 %v1005, %v1008
        %s1010 = sld [smem:[#allocation11 + $0xe]]
        %v1011 = vstv %s1010
        %v1012 = vmul.f32 %v939, %v1011
        %v1013 = vadd.f32 %v1009, %v1012
        %s1014 = sld [smem:[#allocation11 + $0xf]]
        %v1015 = vstv %s1014
        %v1016 = vmul.f32 %v951, %v1015
        %v1017 = vadd.f32 %v1013, %v1016
        %s1018 = sld [smem:[#allocation12 + $0x1]]
        %v1019 = vstv %s1018
        %v1020 = vadd.f32 %v1017, %v1019
        %v1021 = vmax.f32 %v1020, 0.0
        %s1022 = sld [smem:[#allocation11 + $0x10]]
        %v1023 = vstv %s1022
        %v1024 = vmul.f32 %v867, %v1023
        %s1025 = sld [smem:[#allocation11 + $0x11]]
        %v1026 = vstv %s1025
        %v1027 = vmul.f32 %v879, %v1026
        %v1028 = vadd.f32 %v1024, %v1027
        %s1029 = sld [smem:[#allocation11 + $0x12]]
        %v1030 = vstv %s1029
        %v1031 = vmul.f32 %v891, %v1030
        %v1032 = vadd.f32 %v1028, %v1031
        %s1033 = sld [smem:[#allocation11 + $0x13]]
        %v1034 = vstv %s1033
        %v1035 = vmul.f32 %v903, %v1034
        %v1036 = vadd.f32 %v1032, %v1035
        %s1037 = sld [smem:[#allocation11 + $0x14]]
        %v1038 = vstv %s1037
        %v1039 = vmul.f32 %v915, %v1038
        %v1040 = vadd.f32 %v1036, %v1039
        %s1041 = sld [smem:[#allocation11 + $0x15]]
        %v1042 = vstv %s1041
        %v1043 = vmul.f32 %v927, %v1042
        %v1044 = vadd.f32 %v1040, %v1043
        %s1045 = sld [smem:[#allocation11 + $0x16]]
        %v1046 = vstv %s1045
        %v1047 = vmul.f32 %v939, %v1046
        %v1048 = vadd.f32 %v1044, %v1047
        %s1049 = sld [smem:[#allocation11 + $0x17]]
        %v1050 = vstv %s1049
        %v1051 = vmul.f32 %v951, %v1050
        %v1052 = vadd.f32 %v1048, %v1051
        %s1053 = sld [smem:[#allocation12 + $0x2]]
        %v1054 = vstv %s1053
        %v1055 = vadd.f32 %v1052, %v1054
        %v1056 = vmax.f32 %v1055, 0.0
        %s1057 = sld [smem:[#allocation11 + $0x18]]
        %v1058 = vstv %s1057
        %v1059 = vmul.f32 %v867, %v1058
        %s1060 = sld [smem:[#allocation11 + $0x19]]
        %v1061 = vstv %s1060
        %v1062 = vmul.f32 %v879, %v1061
        %v1063 = vadd.f32 %v1059, %v1062
        %s1064 = sld [smem:[#allocation11 + $0x1a]]
        %v1065 = vstv %s1064
        %v1066 = vmul.f32 %v891, %v1065
        %v1067 = vadd.f32 %v1063, %v1066
        %s1068 = sld [smem:[#allocation11 + $0x1b]]
        %v1069 = vstv %s1068
        %v1070 = vmul.f32 %v903, %v1069
        %v1071 = vadd.f32 %v1067, %v1070
        %s1072 = sld [smem:[#allocation11 + $0x1c]]
        %v1073 = vstv %s1072
        %v1074 = vmul.f32 %v915, %v1073
        %v1075 = vadd.f32 %v1071, %v1074
        %s1076 = sld [smem:[#allocation11 + $0x1d]]
        %v1077 = vstv %s1076
        %v1078 = vmul.f32 %v927, %v1077
        %v1079 = vadd.f32 %v1075, %v1078
        %s1080 = sld [smem:[#allocation11 + $0x1e]]
        %v1081 = vstv %s1080
        %v1082 = vmul.f32 %v939, %v1081
        %v1083 = vadd.f32 %v1079, %v1082
        %s1084 = sld [smem:[#allocation11 + $0x1f]]
        %v1085 = vstv %s1084
        %v1086 = vmul.f32 %v951, %v1085
        %v1087 = vadd.f32 %v1083, %v1086
        %s1088 = sld [smem:[#allocation12 + $0x3]]
        %v1089 = vstv %s1088
        %v1090 = vadd.f32 %v1087, %v1089
        %v1091 = vmax.f32 %v1090, 0.0
        %s1092 = sld [smem:[#allocation11 + $0x20]]
        %v1093 = vstv %s1092
        %v1094 = vmul.f32 %v867, %v1093
        %s1095 = sld [smem:[#allocation11 + $0x21]]
        %v1096 = vstv %s1095
        %v1097 = vmul.f32 %v879, %v1096
        %v1098 = vadd.f32 %v1094, %v1097
        %s1099 = sld [smem:[#allocation11 + $0x22]]
        %v1100 = vstv %s1099
        %v1101 = vmul.f32 %v891, %v1100
        %v1102 = vadd.f32 %v1098, %v1101
        %s1103 = sld [smem:[#allocation11 + $0x23]]
        %v1104 = vstv %s1103
        %v1105 = vmul.f32 %v903, %v1104
        %v1106 = vadd.f32 %v1102, %v1105
        %s1107 = sld [smem:[#allocation11 + $0x24]]
        %v1108 = vstv %s1107
        %v1109 = vmul.f32 %v915, %v1108
        %v1110 = vadd.f32 %v1106, %v1109
        %s1111 = sld [smem:[#allocation11 + $0x25]]
        %v1112 = vstv %s1111
        %v1113 = vmul.f32 %v927, %v1112
        %v1114 = vadd.f32 %v1110, %v1113
        %s1115 = sld [smem:[#allocation11 + $0x26]]
        %v1116 = vstv %s1115
        %v1117 = vmul.f32 %v939, %v1116
        %v1118 = vadd.f32 %v1114, %v1117
        %s1119 = sld [smem:[#allocation11 + $0x27]]
        %v1120 = vstv %s1119
        %v1121 = vmul.f32 %v951, %v1120
        %v1122 = vadd.f32 %v1118, %v1121
        %s1123 = sld [smem:[#allocation12 + $0x4]]
        %v1124 = vstv %s1123
        %v1125 = vadd.f32 %v1122, %v1124
        %v1126 = vmax.f32 %v1125, 0.0
        %s1127 = sld [smem:[#allocation11 + $0x28]]
        %v1128 = vstv %s1127
        %v1129 = vmul.f32 %v867, %v1128
        %s1130 = sld [smem:[#allocation11 + $0x29]]
        %v1131 = vstv %s1130
        %v1132 = vmul.f32 %v879, %v1131
        %v1133 = vadd.f32 %v1129, %v1132
        %s1134 = sld [smem:[#allocation11 + $0x2a]]
        %v1135 = vstv %s1134
        %v1136 = vmul.f32 %v891, %v1135
        %v1137 = vadd.f32 %v1133, %v1136
        %s1138 = sld [smem:[#allocation11 + $0x2b]]
        %v1139 = vstv %s1138
        %v1140 = vmul.f32 %v903, %v1139
        %v1141 = vadd.f32 %v1137, %v1140
        %s1142 = sld [smem:[#allocation11 + $0x2c]]
        %v1143 = vstv %s1142
        %v1144 = vmul.f32 %v915, %v1143
        %v1145 = vadd.f32 %v1141, %v1144
        %s1146 = sld [smem:[#allocation11 + $0x2d]]
        %v1147 = vstv %s1146
        %v1148 = vmul.f32 %v927, %v1147
        %v1149 = vadd.f32 %v1145, %v1148
        %s1150 = sld [smem:[#allocation11 + $0x2e]]
        %v1151 = vstv %s1150
        %v1152 = vmul.f32 %v939, %v1151
        %v1153 = vadd.f32 %v1149, %v1152
        %s1154 = sld [smem:[#allocation11 + $0x2f]]
        %v1155 = vstv %s1154
        %v1156 = vmul.f32 %v951, %v1155
        %v1157 = vadd.f32 %v1153, %v1156
        %s1158 = sld [smem:[#allocation12 + $0x5]]
        %v1159 = vstv %s1158
        %v1160 = vadd.f32 %v1157, %v1159
        %v1161 = vmax.f32 %v1160, 0.0
        %s1162 = sld [smem:[#allocation11 + $0x30]]
        %v1163 = vstv %s1162
        %v1164 = vmul.f32 %v867, %v1163
        %s1165 = sld [smem:[#allocation11 + $0x31]]
        %v1166 = vstv %s1165
        %v1167 = vmul.f32 %v879, %v1166
        %v1168 = vadd.f32 %v1164, %v1167
        %s1169 = sld [smem:[#allocation11 + $0x32]]
        %v1170 = vstv %s1169
        %v1171 = vmul.f32 %v891, %v1170
        %v1172 = vadd.f32 %v1168, %v1171
        %s1173 = sld [smem:[#allocation11 + $0x33]]
        %v1174 = vstv %s1173
        %v1175 = vmul.f32 %v903, %v1174
        %v1176 = vadd.f32 %v1172, %v1175
        %s1177 = sld [smem:[#allocation11 + $0x34]]
        %v1178 = vstv %s1177
        %v1179 = vmul.f32 %v915, %v1178
        %v1180 = vadd.f32 %v1176, %v1179
        %s1181 = sld [smem:[#allocation11 + $0x35]]
        %v1182 = vstv %s1181
        %v1183 = vmul.f32 %v927, %v1182
        %v1184 = vadd.f32 %v1180, %v1183
        %s1185 = sld [smem:[#allocation11 + $0x36]]
        %v1186 = vstv %s1185
        %v1187 = vmul.f32 %v939, %v1186
        %v1188 = vadd.f32 %v1184, %v1187
        %s1189 = sld [smem:[#allocation11 + $0x37]]
        %v1190 = vstv %s1189
        %v1191 = vmul.f32 %v951, %v1190
        %v1192 = vadd.f32 %v1188, %v1191
        %s1193 = sld [smem:[#allocation12 + $0x6]]
        %v1194 = vstv %s1193
        %v1195 = vadd.f32 %v1192, %v1194
        %v1196 = vmax.f32 %v1195, 0.0
        %s1197 = sld [smem:[#allocation11 + $0x38]]
        %v1198 = vstv %s1197
        %v1199 = vmul.f32 %v867, %v1198
        %s1200 = sld [smem:[#allocation11 + $0x39]]
        %v1201 = vstv %s1200
        %v1202 = vmul.f32 %v879, %v1201
        %v1203 = vadd.f32 %v1199, %v1202
        %s1204 = sld [smem:[#allocation11 + $0x3a]]
        %v1205 = vstv %s1204
        %v1206 = vmul.f32 %v891, %v1205
        %v1207 = vadd.f32 %v1203, %v1206
        %s1208 = sld [smem:[#allocation11 + $0x3b]]
        %v1209 = vstv %s1208
        %v1210 = vmul.f32 %v903, %v1209
        %v1211 = vadd.f32 %v1207, %v1210
        %s1212 = sld [smem:[#allocation11 + $0x3c]]
        %v1213 = vstv %s1212
        %v1214 = vmul.f32 %v915, %v1213
        %v1215 = vadd.f32 %v1211, %v1214
        %s1216 = sld [smem:[#allocation11 + $0x3d]]
        %v1217 = vstv %s1216
        %v1218 = vmul.f32 %v927, %v1217
        %v1219 = vadd.f32 %v1215, %v1218
        %s1220 = sld [smem:[#allocation11 + $0x3e]]
        %v1221 = vstv %s1220
        %v1222 = vmul.f32 %v939, %v1221
        %v1223 = vadd.f32 %v1219, %v1222
        %s1224 = sld [smem:[#allocation11 + $0x3f]]
        %v1225 = vstv %s1224
        %v1226 = vmul.f32 %v951, %v1225
        %v1227 = vadd.f32 %v1223, %v1226
        %s1228 = sld [smem:[#allocation12 + $0x7]]
        %v1229 = vstv %s1228
        %v1230 = vadd.f32 %v1227, %v1229
        %v1231 = vmax.f32 %v1230, 0.0
        %s1232 = sld [smem:[#allocation14]]
        %v1233 = vstv %s1232
        %v1234 = vmul.f32 %v469, %v1233
        %v1235 = vmul.f32 %v470, %v1233
        %v1236 = vmul.f32 %v471, %v1233
        %v1237 = vmul.f32 %v472, %v1233
        %s1238 = sld [smem:[#allocation14 + $0x1]]
        %v1239 = vstv %s1238
        %v1240 = vmul.f32 %v473, %v1239
        %v1241 = vmul.f32 %v474, %v1239
        %v1242 = vmul.f32 %v475, %v1239
        %v1243 = vmul.f32 %v476, %v1239
        %v1244 = vadd.f32 %v1234, %v1240
        %v1245 = vadd.f32 %v1235, %v1241
        %v1246 = vadd.f32 %v1236, %v1242
        %v1247 = vadd.f32 %v1237, %v1243
        %s1248 = sld [smem:[#allocation14 + $0x2]]
        %v1249 = vstv %s1248
        %v1250 = vmul.f32 %v477, %v1249
        %v1251 = vmul.f32 %v478, %v1249
        %v1252 = vmul.f32 %v479, %v1249
        %v1253 = vmul.f32 %v480, %v1249
        %v1254 = vadd.f32 %v1244, %v1250
        %v1255 = vadd.f32 %v1245, %v1251
        %v1256 = vadd.f32 %v1246, %v1252
        %v1257 = vadd.f32 %v1247, %v1253
        %s1258 = sld [smem:[#allocation14 + $0x3]]
        %v1259 = vstv %s1258
        %v1260 = vmul.f32 %v481, %v1259
        %v1261 = vmul.f32 %v482, %v1259
        %v1262 = vmul.f32 %v483, %v1259
        %v1263 = vmul.f32 %v484, %v1259
        %v1264 = vadd.f32 %v1254, %v1260
        %v1265 = vadd.f32 %v1255, %v1261
        %v1266 = vadd.f32 %v1256, %v1262
        %v1267 = vadd.f32 %v1257, %v1263
        %s1268 = sld [smem:[#allocation15]]
        %v1269 = vstv %s1268
        %v1270 = vadd.f32 %v1264, %v1269
        %v1271 = vadd.f32 %v1265, %v1269
        %v1272 = vadd.f32 %v1266, %v1269
        %v1273 = vadd.f32 %v1267, %v1269
        %v1274 = vmax.f32 %v1270, 0.0
        %v1275 = vmax.f32 %v1271, 0.0
        %v1276 = vmax.f32 %v1272, 0.0
        %v1277 = vmax.f32 %v1273, 0.0
        %s1278 = sld [smem:[#allocation14 + $0x4]]
        %v1279 = vstv %s1278
        %v1280 = vmul.f32 %v469, %v1279
        %v1281 = vmul.f32 %v470, %v1279
        %v1282 = vmul.f32 %v471, %v1279
        %v1283 = vmul.f32 %v472, %v1279
        %s1284 = sld [smem:[#allocation14 + $0x5]]
        %v1285 = vstv %s1284
        %v1286 = vmul.f32 %v473, %v1285
        %v1287 = vmul.f32 %v474, %v1285
        %v1288 = vmul.f32 %v475, %v1285
        %v1289 = vmul.f32 %v476, %v1285
        %v1290 = vadd.f32 %v1280, %v1286
        %v1291 = vadd.f32 %v1281, %v1287
        %v1292 = vadd.f32 %v1282, %v1288
        %v1293 = vadd.f32 %v1283, %v1289
        %s1294 = sld [smem:[#allocation14 + $0x6]]
        %v1295 = vstv %s1294
        %v1296 = vmul.f32 %v477, %v1295
        %v1297 = vmul.f32 %v478, %v1295
        %v1298 = vmul.f32 %v479, %v1295
        %v1299 = vmul.f32 %v480, %v1295
        %v1300 = vadd.f32 %v1290, %v1296
        %v1301 = vadd.f32 %v1291, %v1297
        %v1302 = vadd.f32 %v1292, %v1298
        %v1303 = vadd.f32 %v1293, %v1299
        %s1304 = sld [smem:[#allocation14 + $0x7]]
        %v1305 = vstv %s1304
        %v1306 = vmul.f32 %v481, %v1305
        %v1307 = vmul.f32 %v482, %v1305
        %v1308 = vmul.f32 %v483, %v1305
        %v1309 = vmul.f32 %v484, %v1305
        %v1310 = vadd.f32 %v1300, %v1306
        %v1311 = vadd.f32 %v1301, %v1307
        %v1312 = vadd.f32 %v1302, %v1308
        %v1313 = vadd.f32 %v1303, %v1309
        %s1314 = sld [smem:[#allocation15 + $0x1]]
        %v1315 = vstv %s1314
        %v1316 = vadd.f32 %v1310, %v1315
        %v1317 = vadd.f32 %v1311, %v1315
        %v1318 = vadd.f32 %v1312, %v1315
        %v1319 = vadd.f32 %v1313, %v1315
        %v1320 = vmax.f32 %v1316, 0.0
        %v1321 = vmax.f32 %v1317, 0.0
        %v1322 = vmax.f32 %v1318, 0.0
        %v1323 = vmax.f32 %v1319, 0.0
        %s1324 = sld [smem:[#allocation14 + $0x8]]
        %v1325 = vstv %s1324
        %v1326 = vmul.f32 %v469, %v1325
        %v1327 = vmul.f32 %v470, %v1325
        %v1328 = vmul.f32 %v471, %v1325
        %v1329 = vmul.f32 %v472, %v1325
        %s1330 = sld [smem:[#allocation14 + $0x9]]
        %v1331 = vstv %s1330
        %v1332 = vmul.f32 %v473, %v1331
        %v1333 = vmul.f32 %v474, %v1331
        %v1334 = vmul.f32 %v475, %v1331
        %v1335 = vmul.f32 %v476, %v1331
        %v1336 = vadd.f32 %v1326, %v1332
        %v1337 = vadd.f32 %v1327, %v1333
        %v1338 = vadd.f32 %v1328, %v1334
        %v1339 = vadd.f32 %v1329, %v1335
        %s1340 = sld [smem:[#allocation14 + $0xa]]
        %v1341 = vstv %s1340
        %v1342 = vmul.f32 %v477, %v1341
        %v1343 = vmul.f32 %v478, %v1341
        %v1344 = vmul.f32 %v479, %v1341
        %v1345 = vmul.f32 %v480, %v1341
        %v1346 = vadd.f32 %v1336, %v1342
        %v1347 = vadd.f32 %v1337, %v1343
        %v1348 = vadd.f32 %v1338, %v1344
        %v1349 = vadd.f32 %v1339, %v1345
        %s1350 = sld [smem:[#allocation14 + $0xb]]
        %v1351 = vstv %s1350
        %v1352 = vmul.f32 %v481, %v1351
        %v1353 = vmul.f32 %v482, %v1351
        %v1354 = vmul.f32 %v483, %v1351
        %v1355 = vmul.f32 %v484, %v1351
        %v1356 = vadd.f32 %v1346, %v1352
        %v1357 = vadd.f32 %v1347, %v1353
        %v1358 = vadd.f32 %v1348, %v1354
        %v1359 = vadd.f32 %v1349, %v1355
        %s1360 = sld [smem:[#allocation15 + $0x2]]
        %v1361 = vstv %s1360
        %v1362 = vadd.f32 %v1356, %v1361
        %v1363 = vadd.f32 %v1357, %v1361
        %v1364 = vadd.f32 %v1358, %v1361
        %v1365 = vadd.f32 %v1359, %v1361
        %v1366 = vmax.f32 %v1362, 0.0
        %v1367 = vmax.f32 %v1363, 0.0
        %v1368 = vmax.f32 %v1364, 0.0
        %v1369 = vmax.f32 %v1365, 0.0
        %s1370 = sld [smem:[#allocation14 + $0xc]]
        %v1371 = vstv %s1370
        %v1372 = vmul.f32 %v469, %v1371
        %v1373 = vmul.f32 %v470, %v1371
        %v1374 = vmul.f32 %v471, %v1371
        %v1375 = vmul.f32 %v472, %v1371
        %s1376 = sld [smem:[#allocation14 + $0xd]]
        %v1377 = vstv %s1376
        %v1378 = vmul.f32 %v473, %v1377
        %v1379 = vmul.f32 %v474, %v1377
        %v1380 = vmul.f32 %v475, %v1377
        %v1381 = vmul.f32 %v476, %v1377
        %v1382 = vadd.f32 %v1372, %v1378
        %v1383 = vadd.f32 %v1373, %v1379
        %v1384 = vadd.f32 %v1374, %v1380
        %v1385 = vadd.f32 %v1375, %v1381
        %s1386 = sld [smem:[#allocation14 + $0xe]]
        %v1387 = vstv %s1386
        %v1388 = vmul.f32 %v477, %v1387
        %v1389 = vmul.f32 %v478, %v1387
        %v1390 = vmul.f32 %v479, %v1387
        %v1391 = vmul.f32 %v480, %v1387
        %v1392 = vadd.f32 %v1382, %v1388
        %v1393 = vadd.f32 %v1383, %v1389
        %v1394 = vadd.f32 %v1384, %v1390
        %v1395 = vadd.f32 %v1385, %v1391
        %s1396 = sld [smem:[#allocation14 + $0xf]]
        %v1397 = vstv %s1396
        %v1398 = vmul.f32 %v481, %v1397
        %v1399 = vmul.f32 %v482, %v1397
        %v1400 = vmul.f32 %v483, %v1397
        %v1401 = vmul.f32 %v484, %v1397
        %v1402 = vadd.f32 %v1392, %v1398
        %v1403 = vadd.f32 %v1393, %v1399
        %v1404 = vadd.f32 %v1394, %v1400
        %v1405 = vadd.f32 %v1395, %v1401
        %s1406 = sld [smem:[#allocation15 + $0x3]]
        %v1407 = vstv %s1406
        %v1408 = vadd.f32 %v1402, %v1407
        %v1409 = vadd.f32 %v1403, %v1407
        %v1410 = vadd.f32 %v1404, %v1407
        %v1411 = vadd.f32 %v1405, %v1407
        %v1412 = vmax.f32 %v1408, 0.0
        %v1413 = vmax.f32 %v1409, 0.0
        %v1414 = vmax.f32 %v1410, 0.0
        %v1415 = vmax.f32 %v1411, 0.0
        %s1416 = sld [smem:[#allocation8 + $0x20]]
        %v1417 = vstv %s1416
        %v1418 = vmul.f32 %v1274, %v1417
        %v1419 = vmul.f32 %v1275, %v1417
        %v1420 = vmul.f32 %v1276, %v1417
        %v1421 = vmul.f32 %v1277, %v1417
        %s1422 = sld [smem:[#allocation8 + $0x21]]
        %v1423 = vstv %s1422
        %v1424 = vmul.f32 %v1320, %v1423
        %v1425 = vmul.f32 %v1321, %v1423
        %v1426 = vmul.f32 %v1322, %v1423
        %v1427 = vmul.f32 %v1323, %v1423
        %v1428 = vadd.f32 %v1418, %v1424
        %v1429 = vadd.f32 %v1419, %v1425
        %v1430 = vadd.f32 %v1420, %v1426
        %v1431 = vadd.f32 %v1421, %v1427
        %s1432 = sld [smem:[#allocation8 + $0x22]]
        %v1433 = vstv %s1432
        %v1434 = vmul.f32 %v1366, %v1433
        %v1435 = vmul.f32 %v1367, %v1433
        %v1436 = vmul.f32 %v1368, %v1433
        %v1437 = vmul.f32 %v1369, %v1433
        %v1438 = vadd.f32 %v1428, %v1434
        %v1439 = vadd.f32 %v1429, %v1435
        %v1440 = vadd.f32 %v1430, %v1436
        %v1441 = vadd.f32 %v1431, %v1437
        %s1442 = sld [smem:[#allocation8 + $0x23]]
        %v1443 = vstv %s1442
        %v1444 = vmul.f32 %v1412, %v1443
        %v1445 = vmul.f32 %v1413, %v1443
        %v1446 = vmul.f32 %v1414, %v1443
        %v1447 = vmul.f32 %v1415, %v1443
        %v1448 = vadd.f32 %v1438, %v1444
        %v1449 = vadd.f32 %v1439, %v1445
        %v1450 = vadd.f32 %v1440, %v1446
        %v1451 = vadd.f32 %v1441, %v1447
        %s1452 = sld [smem:[#allocation9 + $0x8]]
        %v1453 = vstv %s1452
        %v1454 = vadd.f32 %v1448, %v1453
        %v1455 = vadd.f32 %v1449, %v1453
        %v1456 = vadd.f32 %v1450, %v1453
        %v1457 = vadd.f32 %v1451, %v1453
        %v1458 = vmax.f32 %v1454, 0.0
        %v1459 = vmax.f32 %v1455, 0.0
        %v1460 = vmax.f32 %v1456, 0.0
        %v1461 = vmax.f32 %v1457, 0.0
        %s1462 = sld [smem:[#allocation8 + $0x24]]
        %v1463 = vstv %s1462
        %v1464 = vmul.f32 %v1274, %v1463
        %v1465 = vmul.f32 %v1275, %v1463
        %v1466 = vmul.f32 %v1276, %v1463
        %v1467 = vmul.f32 %v1277, %v1463
        %s1468 = sld [smem:[#allocation8 + $0x25]]
        %v1469 = vstv %s1468
        %v1470 = vmul.f32 %v1320, %v1469
        %v1471 = vmul.f32 %v1321, %v1469
        %v1472 = vmul.f32 %v1322, %v1469
        %v1473 = vmul.f32 %v1323, %v1469
        %v1474 = vadd.f32 %v1464, %v1470
        %v1475 = vadd.f32 %v1465, %v1471
        %v1476 = vadd.f32 %v1466, %v1472
        %v1477 = vadd.f32 %v1467, %v1473
        %s1478 = sld [smem:[#allocation8 + $0x26]]
        %v1479 = vstv %s1478
        %v1480 = vmul.f32 %v1366, %v1479
        %v1481 = vmul.f32 %v1367, %v1479
        %v1482 = vmul.f32 %v1368, %v1479
        %v1483 = vmul.f32 %v1369, %v1479
        %v1484 = vadd.f32 %v1474, %v1480
        %v1485 = vadd.f32 %v1475, %v1481
        %v1486 = vadd.f32 %v1476, %v1482
        %v1487 = vadd.f32 %v1477, %v1483
        %s1488 = sld [smem:[#allocation8 + $0x27]]
        %v1489 = vstv %s1488
        %v1490 = vmul.f32 %v1412, %v1489
        %v1491 = vmul.f32 %v1413, %v1489
        %v1492 = vmul.f32 %v1414, %v1489
        %v1493 = vmul.f32 %v1415, %v1489
        %v1494 = vadd.f32 %v1484, %v1490
        %v1495 = vadd.f32 %v1485, %v1491
        %v1496 = vadd.f32 %v1486, %v1492
        %v1497 = vadd.f32 %v1487, %v1493
        %s1498 = sld [smem:[#allocation9 + $0x9]]
        %v1499 = vstv %s1498
        %v1500 = vadd.f32 %v1494, %v1499
        %v1501 = vadd.f32 %v1495, %v1499
        %v1502 = vadd.f32 %v1496, %v1499
        %v1503 = vadd.f32 %v1497, %v1499
        %v1504 = vmax.f32 %v1500, 0.0
        %v1505 = vmax.f32 %v1501, 0.0
        %v1506 = vmax.f32 %v1502, 0.0
        %v1507 = vmax.f32 %v1503, 0.0
        %s1508 = sld [smem:[#allocation8 + $0x28]]
        %v1509 = vstv %s1508
        %v1510 = vmul.f32 %v1274, %v1509
        %v1511 = vmul.f32 %v1275, %v1509
        %v1512 = vmul.f32 %v1276, %v1509
        %v1513 = vmul.f32 %v1277, %v1509
        %s1514 = sld [smem:[#allocation8 + $0x29]]
        %v1515 = vstv %s1514
        %v1516 = vmul.f32 %v1320, %v1515
        %v1517 = vmul.f32 %v1321, %v1515
        %v1518 = vmul.f32 %v1322, %v1515
        %v1519 = vmul.f32 %v1323, %v1515
        %v1520 = vadd.f32 %v1510, %v1516
        %v1521 = vadd.f32 %v1511, %v1517
        %v1522 = vadd.f32 %v1512, %v1518
        %v1523 = vadd.f32 %v1513, %v1519
        %s1524 = sld [smem:[#allocation8 + $0x2a]]
        %v1525 = vstv %s1524
        %v1526 = vmul.f32 %v1366, %v1525
        %v1527 = vmul.f32 %v1367, %v1525
        %v1528 = vmul.f32 %v1368, %v1525
        %v1529 = vmul.f32 %v1369, %v1525
        %v1530 = vadd.f32 %v1520, %v1526
        %v1531 = vadd.f32 %v1521, %v1527
        %v1532 = vadd.f32 %v1522, %v1528
        %v1533 = vadd.f32 %v1523, %v1529
        %s1534 = sld [smem:[#allocation8 + $0x2b]]
        %v1535 = vstv %s1534
        %v1536 = vmul.f32 %v1412, %v1535
        %v1537 = vmul.f32 %v1413, %v1535
        %v1538 = vmul.f32 %v1414, %v1535
        %v1539 = vmul.f32 %v1415, %v1535
        %v1540 = vadd.f32 %v1530, %v1536
        %v1541 = vadd.f32 %v1531, %v1537
        %v1542 = vadd.f32 %v1532, %v1538
        %v1543 = vadd.f32 %v1533, %v1539
        %s1544 = sld [smem:[#allocation9 + $0xa]]
        %v1545 = vstv %s1544
        %v1546 = vadd.f32 %v1540, %v1545
        %v1547 = vadd.f32 %v1541, %v1545
        %v1548 = vadd.f32 %v1542, %v1545
        %v1549 = vadd.f32 %v1543, %v1545
        %v1550 = vmax.f32 %v1546, 0.0
        %v1551 = vmax.f32 %v1547, 0.0
        %v1552 = vmax.f32 %v1548, 0.0
        %v1553 = vmax.f32 %v1549, 0.0
        %s1554 = sld [smem:[#allocation8 + $0x2c]]
        %v1555 = vstv %s1554
        %v1556 = vmul.f32 %v1274, %v1555
        %v1557 = vmul.f32 %v1275, %v1555
        %v1558 = vmul.f32 %v1276, %v1555
        %v1559 = vmul.f32 %v1277, %v1555
        %s1560 = sld [smem:[#allocation8 + $0x2d]]
        %v1561 = vstv %s1560
        %v1562 = vmul.f32 %v1320, %v1561
        %v1563 = vmul.f32 %v1321, %v1561
        %v1564 = vmul.f32 %v1322, %v1561
        %v1565 = vmul.f32 %v1323, %v1561
        %v1566 = vadd.f32 %v1556, %v1562
        %v1567 = vadd.f32 %v1557, %v1563
        %v1568 = vadd.f32 %v1558, %v1564
        %v1569 = vadd.f32 %v1559, %v1565
        %s1570 = sld [smem:[#allocation8 + $0x2e]]
        %v1571 = vstv %s1570
        %v1572 = vmul.f32 %v1366, %v1571
        %v1573 = vmul.f32 %v1367, %v1571
        %v1574 = vmul.f32 %v1368, %v1571
        %v1575 = vmul.f32 %v1369, %v1571
        %v1576 = vadd.f32 %v1566, %v1572
        %v1577 = vadd.f32 %v1567, %v1573
        %v1578 = vadd.f32 %v1568, %v1574
        %v1579 = vadd.f32 %v1569, %v1575
        %s1580 = sld [smem:[#allocation8 + $0x2f]]
        %v1581 = vstv %s1580
        %v1582 = vmul.f32 %v1412, %v1581
        %v1583 = vmul.f32 %v1413, %v1581
        %v1584 = vmul.f32 %v1414, %v1581
        %v1585 = vmul.f32 %v1415, %v1581
        %v1586 = vadd.f32 %v1576, %v1582
        %v1587 = vadd.f32 %v1577, %v1583
        %v1588 = vadd.f32 %v1578, %v1584
        %v1589 = vadd.f32 %v1579, %v1585
        %s1590 = sld [smem:[#allocation9 + $0xb]]
        %v1591 = vstv %s1590
        %v1592 = vadd.f32 %v1586, %v1591
        %v1593 = vadd.f32 %v1587, %v1591
        %v1594 = vadd.f32 %v1588, %v1591
        %v1595 = vadd.f32 %v1589, %v1591
        %v1596 = vmax.f32 %v1592, 0.0
        %v1597 = vmax.f32 %v1593, 0.0
        %v1598 = vmax.f32 %v1594, 0.0
        %v1599 = vmax.f32 %v1595, 0.0
        %s1600 = sld [smem:[#allocation8 + $0x30]]
        %v1601 = vstv %s1600
        %v1602 = vmul.f32 %v1274, %v1601
        %v1603 = vmul.f32 %v1275, %v1601
        %v1604 = vmul.f32 %v1276, %v1601
        %v1605 = vmul.f32 %v1277, %v1601
        %s1606 = sld [smem:[#allocation8 + $0x31]]
        %v1607 = vstv %s1606
        %v1608 = vmul.f32 %v1320, %v1607
        %v1609 = vmul.f32 %v1321, %v1607
        %v1610 = vmul.f32 %v1322, %v1607
        %v1611 = vmul.f32 %v1323, %v1607
        %v1612 = vadd.f32 %v1602, %v1608
        %v1613 = vadd.f32 %v1603, %v1609
        %v1614 = vadd.f32 %v1604, %v1610
        %v1615 = vadd.f32 %v1605, %v1611
        %s1616 = sld [smem:[#allocation8 + $0x32]]
        %v1617 = vstv %s1616
        %v1618 = vmul.f32 %v1366, %v1617
        %v1619 = vmul.f32 %v1367, %v1617
        %v1620 = vmul.f32 %v1368, %v1617
        %v1621 = vmul.f32 %v1369, %v1617
        %v1622 = vadd.f32 %v1612, %v1618
        %v1623 = vadd.f32 %v1613, %v1619
        %v1624 = vadd.f32 %v1614, %v1620
        %v1625 = vadd.f32 %v1615, %v1621
        %s1626 = sld [smem:[#allocation8 + $0x33]]
        %v1627 = vstv %s1626
        %v1628 = vmul.f32 %v1412, %v1627
        %v1629 = vmul.f32 %v1413, %v1627
        %v1630 = vmul.f32 %v1414, %v1627
        %v1631 = vmul.f32 %v1415, %v1627
        %v1632 = vadd.f32 %v1622, %v1628
        %v1633 = vadd.f32 %v1623, %v1629
        %v1634 = vadd.f32 %v1624, %v1630
        %v1635 = vadd.f32 %v1625, %v1631
        %s1636 = sld [smem:[#allocation9 + $0xc]]
        %v1637 = vstv %s1636
        %v1638 = vadd.f32 %v1632, %v1637
        %v1639 = vadd.f32 %v1633, %v1637
        %v1640 = vadd.f32 %v1634, %v1637
        %v1641 = vadd.f32 %v1635, %v1637
        %v1642 = vmax.f32 %v1638, 0.0
        %v1643 = vmax.f32 %v1639, 0.0
        %v1644 = vmax.f32 %v1640, 0.0
        %v1645 = vmax.f32 %v1641, 0.0
        %s1646 = sld [smem:[#allocation8 + $0x34]]
        %v1647 = vstv %s1646
        %v1648 = vmul.f32 %v1274, %v1647
        %v1649 = vmul.f32 %v1275, %v1647
        %v1650 = vmul.f32 %v1276, %v1647
        %v1651 = vmul.f32 %v1277, %v1647
        %s1652 = sld [smem:[#allocation8 + $0x35]]
        %v1653 = vstv %s1652
        %v1654 = vmul.f32 %v1320, %v1653
        %v1655 = vmul.f32 %v1321, %v1653
        %v1656 = vmul.f32 %v1322, %v1653
        %v1657 = vmul.f32 %v1323, %v1653
        %v1658 = vadd.f32 %v1648, %v1654
        %v1659 = vadd.f32 %v1649, %v1655
        %v1660 = vadd.f32 %v1650, %v1656
        %v1661 = vadd.f32 %v1651, %v1657
        %s1662 = sld [smem:[#allocation8 + $0x36]]
        %v1663 = vstv %s1662
        %v1664 = vmul.f32 %v1366, %v1663
        %v1665 = vmul.f32 %v1367, %v1663
        %v1666 = vmul.f32 %v1368, %v1663
        %v1667 = vmul.f32 %v1369, %v1663
        %v1668 = vadd.f32 %v1658, %v1664
        %v1669 = vadd.f32 %v1659, %v1665
        %v1670 = vadd.f32 %v1660, %v1666
        %v1671 = vadd.f32 %v1661, %v1667
        %s1672 = sld [smem:[#allocation8 + $0x37]]
        %v1673 = vstv %s1672
        %v1674 = vmul.f32 %v1412, %v1673
        %v1675 = vmul.f32 %v1413, %v1673
        %v1676 = vmul.f32 %v1414, %v1673
        %v1677 = vmul.f32 %v1415, %v1673
        %v1678 = vadd.f32 %v1668, %v1674
        %v1679 = vadd.f32 %v1669, %v1675
        %v1680 = vadd.f32 %v1670, %v1676
        %v1681 = vadd.f32 %v1671, %v1677
        %s1682 = sld [smem:[#allocation9 + $0xd]]
        %v1683 = vstv %s1682
        %v1684 = vadd.f32 %v1678, %v1683
        %v1685 = vadd.f32 %v1679, %v1683
        %v1686 = vadd.f32 %v1680, %v1683
        %v1687 = vadd.f32 %v1681, %v1683
        %v1688 = vmax.f32 %v1684, 0.0
        %v1689 = vmax.f32 %v1685, 0.0
        %v1690 = vmax.f32 %v1686, 0.0
        %v1691 = vmax.f32 %v1687, 0.0
        %s1692 = sld [smem:[#allocation8 + $0x38]]
        %v1693 = vstv %s1692
        %v1694 = vmul.f32 %v1274, %v1693
        %v1695 = vmul.f32 %v1275, %v1693
        %v1696 = vmul.f32 %v1276, %v1693
        %v1697 = vmul.f32 %v1277, %v1693
        %s1698 = sld [smem:[#allocation8 + $0x39]]
        %v1699 = vstv %s1698
        %v1700 = vmul.f32 %v1320, %v1699
        %v1701 = vmul.f32 %v1321, %v1699
        %v1702 = vmul.f32 %v1322, %v1699
        %v1703 = vmul.f32 %v1323, %v1699
        %v1704 = vadd.f32 %v1694, %v1700
        %v1705 = vadd.f32 %v1695, %v1701
        %v1706 = vadd.f32 %v1696, %v1702
        %v1707 = vadd.f32 %v1697, %v1703
        %s1708 = sld [smem:[#allocation8 + $0x3a]]
        %v1709 = vstv %s1708
        %v1710 = vmul.f32 %v1366, %v1709
        %v1711 = vmul.f32 %v1367, %v1709
        %v1712 = vmul.f32 %v1368, %v1709
        %v1713 = vmul.f32 %v1369, %v1709
        %v1714 = vadd.f32 %v1704, %v1710
        %v1715 = vadd.f32 %v1705, %v1711
        %v1716 = vadd.f32 %v1706, %v1712
        %v1717 = vadd.f32 %v1707, %v1713
        %s1718 = sld [smem:[#allocation8 + $0x3b]]
        %v1719 = vstv %s1718
        %v1720 = vmul.f32 %v1412, %v1719
        %v1721 = vmul.f32 %v1413, %v1719
        %v1722 = vmul.f32 %v1414, %v1719
        %v1723 = vmul.f32 %v1415, %v1719
        %v1724 = vadd.f32 %v1714, %v1720
        %v1725 = vadd.f32 %v1715, %v1721
        %v1726 = vadd.f32 %v1716, %v1722
        %v1727 = vadd.f32 %v1717, %v1723
        %s1728 = sld [smem:[#allocation9 + $0xe]]
        %v1729 = vstv %s1728
        %v1730 = vadd.f32 %v1724, %v1729
        %v1731 = vadd.f32 %v1725, %v1729
        %v1732 = vadd.f32 %v1726, %v1729
        %v1733 = vadd.f32 %v1727, %v1729
        %v1734 = vmax.f32 %v1730, 0.0
        %v1735 = vmax.f32 %v1731, 0.0
        %v1736 = vmax.f32 %v1732, 0.0
        %v1737 = vmax.f32 %v1733, 0.0
        %s1738 = sld [smem:[#allocation8 + $0x3c]]
        %v1739 = vstv %s1738
        %v1740 = vmul.f32 %v1274, %v1739
        %v1741 = vmul.f32 %v1275, %v1739
        %v1742 = vmul.f32 %v1276, %v1739
        %v1743 = vmul.f32 %v1277, %v1739
        %s1744 = sld [smem:[#allocation8 + $0x3d]]
        %v1745 = vstv %s1744
        %v1746 = vmul.f32 %v1320, %v1745
        %v1747 = vmul.f32 %v1321, %v1745
        %v1748 = vmul.f32 %v1322, %v1745
        %v1749 = vmul.f32 %v1323, %v1745
        %v1750 = vadd.f32 %v1740, %v1746
        %v1751 = vadd.f32 %v1741, %v1747
        %v1752 = vadd.f32 %v1742, %v1748
        %v1753 = vadd.f32 %v1743, %v1749
        %s1754 = sld [smem:[#allocation8 + $0x3e]]
        %v1755 = vstv %s1754
        %v1756 = vmul.f32 %v1366, %v1755
        %v1757 = vmul.f32 %v1367, %v1755
        %v1758 = vmul.f32 %v1368, %v1755
        %v1759 = vmul.f32 %v1369, %v1755
        %v1760 = vadd.f32 %v1750, %v1756
        %v1761 = vadd.f32 %v1751, %v1757
        %v1762 = vadd.f32 %v1752, %v1758
        %v1763 = vadd.f32 %v1753, %v1759
        %s1764 = sld [smem:[#allocation8 + $0x3f]]
        %v1765 = vstv %s1764
        %v1766 = vmul.f32 %v1412, %v1765
        %v1767 = vmul.f32 %v1413, %v1765
        %v1768 = vmul.f32 %v1414, %v1765
        %v1769 = vmul.f32 %v1415, %v1765
        %v1770 = vadd.f32 %v1760, %v1766
        %v1771 = vadd.f32 %v1761, %v1767
        %v1772 = vadd.f32 %v1762, %v1768
        %v1773 = vadd.f32 %v1763, %v1769
        %s1774 = sld [smem:[#allocation9 + $0xf]]
        %v1775 = vstv %s1774
        %v1776 = vadd.f32 %v1770, %v1775
        %v1777 = vadd.f32 %v1771, %v1775
        %v1778 = vadd.f32 %v1772, %v1775
        %v1779 = vadd.f32 %v1773, %v1775
        %v1780 = vmax.f32 %v1776, 0.0
        %v1781 = vmax.f32 %v1777, 0.0
        %v1782 = vmax.f32 %v1778, 0.0
        %v1783 = vmax.f32 %v1779, 0.0
        %v1788 = vrot.slane %v1459, 7
        %v1789 = vsel %vm858, %v1788, %v1458
        %v1790 = vrot.slane %v1460, 6
        %v1791 = vsel %vm861, %v1790, %v1789
        %v1792 = vrot.slane %v1461, 5
        %v1793 = vsel %vm864, %v1792, %v1791
        %v1795 = vadd.f32 %v986, %v1793
        %v1800 = vrot.slane %v1505, 7
        %v1801 = vsel %vm858, %v1800, %v1504
        %v1802 = vrot.slane %v1506, 6
        %v1803 = vsel %vm861, %v1802, %v1801
        %v1804 = vrot.slane %v1507, 5
        %v1805 = vsel %vm864, %v1804, %v1803
        %v1807 = vadd.f32 %v1021, %v1805
        %v1812 = vrot.slane %v1551, 7
        %v1813 = vsel %vm858, %v1812, %v1550
        %v1814 = vrot.slane %v1552, 6
        %v1815 = vsel %vm861, %v1814, %v1813
        %v1816 = vrot.slane %v1553, 5
        %v1817 = vsel %vm864, %v1816, %v1815
        %v1819 = vadd.f32 %v1056, %v1817
        %v1824 = vrot.slane %v1597, 7
        %v1825 = vsel %vm858, %v1824, %v1596
        %v1826 = vrot.slane %v1598, 6
        %v1827 = vsel %vm861, %v1826, %v1825
        %v1828 = vrot.slane %v1599, 5
        %v1829 = vsel %vm864, %v1828, %v1827
        %v1831 = vadd.f32 %v1091, %v1829
        %v1836 = vrot.slane %v1643, 7
        %v1837 = vsel %vm858, %v1836, %v1642
        %v1838 = vrot.slane %v1644, 6
        %v1839 = vsel %vm861, %v1838, %v1837
        %v1840 = vrot.slane %v1645, 5
        %v1841 = vsel %vm864, %v1840, %v1839
        %v1843 = vadd.f32 %v1126, %v1841
        %v1848 = vrot.slane %v1689, 7
        %v1849 = vsel %vm858, %v1848, %v1688
        %v1850 = vrot.slane %v1690, 6
        %v1851 = vsel %vm861, %v1850, %v1849
        %v1852 = vrot.slane %v1691, 5
        %v1853 = vsel %vm864, %v1852, %v1851
        %v1855 = vadd.f32 %v1161, %v1853
        %v1860 = vrot.slane %v1735, 7
        %v1861 = vsel %vm858, %v1860, %v1734
        %v1862 = vrot.slane %v1736, 6
        %v1863 = vsel %vm861, %v1862, %v1861
        %v1864 = vrot.slane %v1737, 5
        %v1865 = vsel %vm864, %v1864, %v1863
        %v1867 = vadd.f32 %v1196, %v1865
        %v1872 = vrot.slane %v1781, 7
        %v1873 = vsel %vm858, %v1872, %v1780
        %v1874 = vrot.slane %v1782, 6
        %v1875 = vsel %vm861, %v1874, %v1873
        %v1876 = vrot.slane %v1783, 5
        %v1877 = vsel %vm864, %v1876, %v1875
        %v1879 = vadd.f32 %v1231, %v1877
        %s1880 = sld [smem:[#allocation11 + $0x40]]
        %v1881 = vstv %s1880
        %v1882 = vmul.f32 %v1795, %v1881
        %s1883 = sld [smem:[#allocation11 + $0x41]]
        %v1884 = vstv %s1883
        %v1885 = vmul.f32 %v1807, %v1884
        %v1886 = vadd.f32 %v1882, %v1885
        %s1887 = sld [smem:[#allocation11 + $0x42]]
        %v1888 = vstv %s1887
        %v1889 = vmul.f32 %v1819, %v1888
        %v1890 = vadd.f32 %v1886, %v1889
        %s1891 = sld [smem:[#allocation11 + $0x43]]
        %v1892 = vstv %s1891
        %v1893 = vmul.f32 %v1831, %v1892
        %v1894 = vadd.f32 %v1890, %v1893
        %s1895 = sld [smem:[#allocation11 + $0x44]]
        %v1896 = vstv %s1895
        %v1897 = vmul.f32 %v1843, %v1896
        %v1898 = vadd.f32 %v1894, %v1897
        %s1899 = sld [smem:[#allocation11 + $0x45]]
        %v1900 = vstv %s1899
        %v1901 = vmul.f32 %v1855, %v1900
        %v1902 = vadd.f32 %v1898, %v1901
        %s1903 = sld [smem:[#allocation11 + $0x46]]
        %v1904 = vstv %s1903
        %v1905 = vmul.f32 %v1867, %v1904
        %v1906 = vadd.f32 %v1902, %v1905
        %s1907 = sld [smem:[#allocation11 + $0x47]]
        %v1908 = vstv %s1907
        %v1909 = vmul.f32 %v1879, %v1908
        %v1910 = vadd.f32 %v1906, %v1909
        %s1911 = sld [smem:[#allocation12 + $0x8]]
        %v1912 = vstv %s1911
        %v1913 = vadd.f32 %v1910, %v1912
        %v1914 = vmax.f32 %v1913, 0.0
        %s1915 = sld [smem:[#allocation11 + $0x48]]
        %v1916 = vstv %s1915
        %v1917 = vmul.f32 %v1795, %v1916
        %s1918 = sld [smem:[#allocation11 + $0x49]]
        %v1919 = vstv %s1918
        %v1920 = vmul.f32 %v1807, %v1919
        %v1921 = vadd.f32 %v1917, %v1920
        %s1922 = sld [smem:[#allocation11 + $0x4a]]
        %v1923 = vstv %s1922
        %v1924 = vmul.f32 %v1819, %v1923
        %v1925 = vadd.f32 %v1921, %v1924
        %s1926 = sld [smem:[#allocation11 + $0x4b]]
        %v1927 = vstv %s1926
        %v1928 = vmul.f32 %v1831, %v1927
        %v1929 = vadd.f32 %v1925, %v1928
        %s1930 = sld [smem:[#allocation11 + $0x4c]]
        %v1931 = vstv %s1930
        %v1932 = vmul.f32 %v1843, %v1931
        %v1933 = vadd.f32 %v1929, %v1932
        %s1934 = sld [smem:[#allocation11 + $0x4d]]
        %v1935 = vstv %s1934
        %v1936 = vmul.f32 %v1855, %v1935
        %v1937 = vadd.f32 %v1933, %v1936
        %s1938 = sld [smem:[#allocation11 + $0x4e]]
        %v1939 = vstv %s1938
        %v1940 = vmul.f32 %v1867, %v1939
        %v1941 = vadd.f32 %v1937, %v1940
        %s1942 = sld [smem:[#allocation11 + $0x4f]]
        %v1943 = vstv %s1942
        %v1944 = vmul.f32 %v1879, %v1943
        %v1945 = vadd.f32 %v1941, %v1944
        %s1946 = sld [smem:[#allocation12 + $0x9]]
        %v1947 = vstv %s1946
        %v1948 = vadd.f32 %v1945, %v1947
        %v1949 = vmax.f32 %v1948, 0.0
        %s1950 = sld [smem:[#allocation11 + $0x50]]
        %v1951 = vstv %s1950
        %v1952 = vmul.f32 %v1795, %v1951
        %s1953 = sld [smem:[#allocation11 + $0x51]]
        %v1954 = vstv %s1953
        %v1955 = vmul.f32 %v1807, %v1954
        %v1956 = vadd.f32 %v1952, %v1955
        %s1957 = sld [smem:[#allocation11 + $0x52]]
        %v1958 = vstv %s1957
        %v1959 = vmul.f32 %v1819, %v1958
        %v1960 = vadd.f32 %v1956, %v1959
        %s1961 = sld [smem:[#allocation11 + $0x53]]
        %v1962 = vstv %s1961
        %v1963 = vmul.f32 %v1831, %v1962
        %v1964 = vadd.f32 %v1960, %v1963
        %s1965 = sld [smem:[#allocation11 + $0x54]]
        %v1966 = vstv %s1965
        %v1967 = vmul.f32 %v1843, %v1966
        %v1968 = vadd.f32 %v1964, %v1967
        %s1969 = sld [smem:[#allocation11 + $0x55]]
        %v1970 = vstv %s1969
        %v1971 = vmul.f32 %v1855, %v1970
        %v1972 = vadd.f32 %v1968, %v1971
        %s1973 = sld [smem:[#allocation11 + $0x56]]
        %v1974 = vstv %s1973
        %v1975 = vmul.f32 %v1867, %v1974
        %v1976 = vadd.f32 %v1972, %v1975
        %s1977 = sld [smem:[#allocation11 + $0x57]]
        %v1978 = vstv %s1977
        %v1979 = vmul.f32 %v1879, %v1978
        %v1980 = vadd.f32 %v1976, %v1979
        %s1981 = sld [smem:[#allocation12 + $0xa]]
        %v1982 = vstv %s1981
        %v1983 = vadd.f32 %v1980, %v1982
        %v1984 = vmax.f32 %v1983, 0.0
        %s1985 = sld [smem:[#allocation11 + $0x58]]
        %v1986 = vstv %s1985
        %v1987 = vmul.f32 %v1795, %v1986
        %s1988 = sld [smem:[#allocation11 + $0x59]]
        %v1989 = vstv %s1988
        %v1990 = vmul.f32 %v1807, %v1989
        %v1991 = vadd.f32 %v1987, %v1990
        %s1992 = sld [smem:[#allocation11 + $0x5a]]
        %v1993 = vstv %s1992
        %v1994 = vmul.f32 %v1819, %v1993
        %v1995 = vadd.f32 %v1991, %v1994
        %s1996 = sld [smem:[#allocation11 + $0x5b]]
        %v1997 = vstv %s1996
        %v1998 = vmul.f32 %v1831, %v1997
        %v1999 = vadd.f32 %v1995, %v1998
        %s2000 = sld [smem:[#allocation11 + $0x5c]]
        %v2001 = vstv %s2000
        %v2002 = vmul.f32 %v1843, %v2001
        %v2003 = vadd.f32 %v1999, %v2002
        %s2004 = sld [smem:[#allocation11 + $0x5d]]
        %v2005 = vstv %s2004
        %v2006 = vmul.f32 %v1855, %v2005
        %v2007 = vadd.f32 %v2003, %v2006
        %s2008 = sld [smem:[#allocation11 + $0x5e]]
        %v2009 = vstv %s2008
        %v2010 = vmul.f32 %v1867, %v2009
        %v2011 = vadd.f32 %v2007, %v2010
        %s2012 = sld [smem:[#allocation11 + $0x5f]]
        %v2013 = vstv %s2012
        %v2014 = vmul.f32 %v1879, %v2013
        %v2015 = vadd.f32 %v2011, %v2014
        %s2016 = sld [smem:[#allocation12 + $0xb]]
        %v2017 = vstv %s2016
        %v2018 = vadd.f32 %v2015, %v2017
        %v2019 = vmax.f32 %v2018, 0.0
        %s2020 = sld [smem:[#allocation11 + $0x60]]
        %v2021 = vstv %s2020
        %v2022 = vmul.f32 %v1795, %v2021
        %s2023 = sld [smem:[#allocation11 + $0x61]]
        %v2024 = vstv %s2023
        %v2025 = vmul.f32 %v1807, %v2024
        %v2026 = vadd.f32 %v2022, %v2025
        %s2027 = sld [smem:[#allocation11 + $0x62]]
        %v2028 = vstv %s2027
        %v2029 = vmul.f32 %v1819, %v2028
        %v2030 = vadd.f32 %v2026, %v2029
        %s2031 = sld [smem:[#allocation11 + $0x63]]
        %v2032 = vstv %s2031
        %v2033 = vmul.f32 %v1831, %v2032
        %v2034 = vadd.f32 %v2030, %v2033
        %s2035 = sld [smem:[#allocation11 + $0x64]]
        %v2036 = vstv %s2035
        %v2037 = vmul.f32 %v1843, %v2036
        %v2038 = vadd.f32 %v2034, %v2037
        %s2039 = sld [smem:[#allocation11 + $0x65]]
        %v2040 = vstv %s2039
        %v2041 = vmul.f32 %v1855, %v2040
        %v2042 = vadd.f32 %v2038, %v2041
        %s2043 = sld [smem:[#allocation11 + $0x66]]
        %v2044 = vstv %s2043
        %v2045 = vmul.f32 %v1867, %v2044
        %v2046 = vadd.f32 %v2042, %v2045
        %s2047 = sld [smem:[#allocation11 + $0x67]]
        %v2048 = vstv %s2047
        %v2049 = vmul.f32 %v1879, %v2048
        %v2050 = vadd.f32 %v2046, %v2049
        %s2051 = sld [smem:[#allocation12 + $0xc]]
        %v2052 = vstv %s2051
        %v2053 = vadd.f32 %v2050, %v2052
        %v2054 = vmax.f32 %v2053, 0.0
        %s2055 = sld [smem:[#allocation11 + $0x68]]
        %v2056 = vstv %s2055
        %v2057 = vmul.f32 %v1795, %v2056
        %s2058 = sld [smem:[#allocation11 + $0x69]]
        %v2059 = vstv %s2058
        %v2060 = vmul.f32 %v1807, %v2059
        %v2061 = vadd.f32 %v2057, %v2060
        %s2062 = sld [smem:[#allocation11 + $0x6a]]
        %v2063 = vstv %s2062
        %v2064 = vmul.f32 %v1819, %v2063
        %v2065 = vadd.f32 %v2061, %v2064
        %s2066 = sld [smem:[#allocation11 + $0x6b]]
        %v2067 = vstv %s2066
        %v2068 = vmul.f32 %v1831, %v2067
        %v2069 = vadd.f32 %v2065, %v2068
        %s2070 = sld [smem:[#allocation11 + $0x6c]]
        %v2071 = vstv %s2070
        %v2072 = vmul.f32 %v1843, %v2071
        %v2073 = vadd.f32 %v2069, %v2072
        %s2074 = sld [smem:[#allocation11 + $0x6d]]
        %v2075 = vstv %s2074
        %v2076 = vmul.f32 %v1855, %v2075
        %v2077 = vadd.f32 %v2073, %v2076
        %s2078 = sld [smem:[#allocation11 + $0x6e]]
        %v2079 = vstv %s2078
        %v2080 = vmul.f32 %v1867, %v2079
        %v2081 = vadd.f32 %v2077, %v2080
        %s2082 = sld [smem:[#allocation11 + $0x6f]]
        %v2083 = vstv %s2082
        %v2084 = vmul.f32 %v1879, %v2083
        %v2085 = vadd.f32 %v2081, %v2084
        %s2086 = sld [smem:[#allocation12 + $0xd]]
        %v2087 = vstv %s2086
        %v2088 = vadd.f32 %v2085, %v2087
        %v2089 = vmax.f32 %v2088, 0.0
        %s2090 = sld [smem:[#allocation11 + $0x70]]
        %v2091 = vstv %s2090
        %v2092 = vmul.f32 %v1795, %v2091
        %s2093 = sld [smem:[#allocation11 + $0x71]]
        %v2094 = vstv %s2093
        %v2095 = vmul.f32 %v1807, %v2094
        %v2096 = vadd.f32 %v2092, %v2095
        %s2097 = sld [smem:[#allocation11 + $0x72]]
        %v2098 = vstv %s2097
        %v2099 = vmul.f32 %v1819, %v2098
        %v2100 = vadd.f32 %v2096, %v2099
        %s2101 = sld [smem:[#allocation11 + $0x73]]
        %v2102 = vstv %s2101
        %v2103 = vmul.f32 %v1831, %v2102
        %v2104 = vadd.f32 %v2100, %v2103
        %s2105 = sld [smem:[#allocation11 + $0x74]]
        %v2106 = vstv %s2105
        %v2107 = vmul.f32 %v1843, %v2106
        %v2108 = vadd.f32 %v2104, %v2107
        %s2109 = sld [smem:[#allocation11 + $0x75]]
        %v2110 = vstv %s2109
        %v2111 = vmul.f32 %v1855, %v2110
        %v2112 = vadd.f32 %v2108, %v2111
        %s2113 = sld [smem:[#allocation11 + $0x76]]
        %v2114 = vstv %s2113
        %v2115 = vmul.f32 %v1867, %v2114
        %v2116 = vadd.f32 %v2112, %v2115
        %s2117 = sld [smem:[#allocation11 + $0x77]]
        %v2118 = vstv %s2117
        %v2119 = vmul.f32 %v1879, %v2118
        %v2120 = vadd.f32 %v2116, %v2119
        %s2121 = sld [smem:[#allocation12 + $0xe]]
        %v2122 = vstv %s2121
        %v2123 = vadd.f32 %v2120, %v2122
        %v2124 = vmax.f32 %v2123, 0.0
        %s2125 = sld [smem:[#allocation11 + $0x78]]
        %v2126 = vstv %s2125
        %v2127 = vmul.f32 %v1795, %v2126
        %s2128 = sld [smem:[#allocation11 + $0x79]]
        %v2129 = vstv %s2128
        %v2130 = vmul.f32 %v1807, %v2129
        %v2131 = vadd.f32 %v2127, %v2130
        %s2132 = sld [smem:[#allocation11 + $0x7a]]
        %v2133 = vstv %s2132
        %v2134 = vmul.f32 %v1819, %v2133
        %v2135 = vadd.f32 %v2131, %v2134
        %s2136 = sld [smem:[#allocation11 + $0x7b]]
        %v2137 = vstv %s2136
        %v2138 = vmul.f32 %v1831, %v2137
        %v2139 = vadd.f32 %v2135, %v2138
        %s2140 = sld [smem:[#allocation11 + $0x7c]]
        %v2141 = vstv %s2140
        %v2142 = vmul.f32 %v1843, %v2141
        %v2143 = vadd.f32 %v2139, %v2142
        %s2144 = sld [smem:[#allocation11 + $0x7d]]
        %v2145 = vstv %s2144
        %v2146 = vmul.f32 %v1855, %v2145
        %v2147 = vadd.f32 %v2143, %v2146
        %s2148 = sld [smem:[#allocation11 + $0x7e]]
        %v2149 = vstv %s2148
        %v2150 = vmul.f32 %v1867, %v2149
        %v2151 = vadd.f32 %v2147, %v2150
        %s2152 = sld [smem:[#allocation11 + $0x7f]]
        %v2153 = vstv %s2152
        %v2154 = vmul.f32 %v1879, %v2153
        %v2155 = vadd.f32 %v2151, %v2154
        %s2156 = sld [smem:[#allocation12 + $0xf]]
        %v2157 = vstv %s2156
        %v2158 = vadd.f32 %v2155, %v2157
        %v2159 = vmax.f32 %v2158, 0.0
        %s2160 = sld [smem:[#allocation14 + $0x10]]
        %v2161 = vstv %s2160
        %v2162 = vmul.f32 %v1274, %v2161
        %v2163 = vmul.f32 %v1275, %v2161
        %v2164 = vmul.f32 %v1276, %v2161
        %v2165 = vmul.f32 %v1277, %v2161
        %s2166 = sld [smem:[#allocation14 + $0x11]]
        %v2167 = vstv %s2166
        %v2168 = vmul.f32 %v1320, %v2167
        %v2169 = vmul.f32 %v1321, %v2167
        %v2170 = vmul.f32 %v1322, %v2167
        %v2171 = vmul.f32 %v1323, %v2167
        %v2172 = vadd.f32 %v2162, %v2168
        %v2173 = vadd.f32 %v2163, %v2169
        %v2174 = vadd.f32 %v2164, %v2170
        %v2175 = vadd.f32 %v2165, %v2171
        %s2176 = sld [smem:[#allocation14 + $0x12]]
        %v2177 = vstv %s2176
        %v2178 = vmul.f32 %v1366, %v2177
        %v2179 = vmul.f32 %v1367, %v2177
        %v2180 = vmul.f32 %v1368, %v2177
        %v2181 = vmul.f32 %v1369, %v2177
        %v2182 = vadd.f32 %v2172, %v2178
        %v2183 = vadd.f32 %v2173, %v2179
        %v2184 = vadd.f32 %v2174, %v2180
        %v2185 = vadd.f32 %v2175, %v2181
        %s2186 = sld [smem:[#allocation14 + $0x13]]
        %v2187 = vstv %s2186
        %v2188 = vmul.f32 %v1412, %v2187
        %v2189 = vmul.f32 %v1413, %v2187
        %v2190 = vmul.f32 %v1414, %v2187
        %v2191 = vmul.f32 %v1415, %v2187
        %v2192 = vadd.f32 %v2182, %v2188
        %v2193 = vadd.f32 %v2183, %v2189
        %v2194 = vadd.f32 %v2184, %v2190
        %v2195 = vadd.f32 %v2185, %v2191
        %s2196 = sld [smem:[#allocation15 + $0x4]]
        %v2197 = vstv %s2196
        %v2198 = vadd.f32 %v2192, %v2197
        %v2199 = vadd.f32 %v2193, %v2197
        %v2200 = vadd.f32 %v2194, %v2197
        %v2201 = vadd.f32 %v2195, %v2197
        %v2202 = vmax.f32 %v2198, 0.0
        %v2203 = vmax.f32 %v2199, 0.0
        %v2204 = vmax.f32 %v2200, 0.0
        %v2205 = vmax.f32 %v2201, 0.0
        %s2206 = sld [smem:[#allocation14 + $0x14]]
        %v2207 = vstv %s2206
        %v2208 = vmul.f32 %v1274, %v2207
        %v2209 = vmul.f32 %v1275, %v2207
        %v2210 = vmul.f32 %v1276, %v2207
        %v2211 = vmul.f32 %v1277, %v2207
        %s2212 = sld [smem:[#allocation14 + $0x15]]
        %v2213 = vstv %s2212
        %v2214 = vmul.f32 %v1320, %v2213
        %v2215 = vmul.f32 %v1321, %v2213
        %v2216 = vmul.f32 %v1322, %v2213
        %v2217 = vmul.f32 %v1323, %v2213
        %v2218 = vadd.f32 %v2208, %v2214
        %v2219 = vadd.f32 %v2209, %v2215
        %v2220 = vadd.f32 %v2210, %v2216
        %v2221 = vadd.f32 %v2211, %v2217
        %s2222 = sld [smem:[#allocation14 + $0x16]]
        %v2223 = vstv %s2222
        %v2224 = vmul.f32 %v1366, %v2223
        %v2225 = vmul.f32 %v1367, %v2223
        %v2226 = vmul.f32 %v1368, %v2223
        %v2227 = vmul.f32 %v1369, %v2223
        %v2228 = vadd.f32 %v2218, %v2224
        %v2229 = vadd.f32 %v2219, %v2225
        %v2230 = vadd.f32 %v2220, %v2226
        %v2231 = vadd.f32 %v2221, %v2227
        %s2232 = sld [smem:[#allocation14 + $0x17]]
        %v2233 = vstv %s2232
        %v2234 = vmul.f32 %v1412, %v2233
        %v2235 = vmul.f32 %v1413, %v2233
        %v2236 = vmul.f32 %v1414, %v2233
        %v2237 = vmul.f32 %v1415, %v2233
        %v2238 = vadd.f32 %v2228, %v2234
        %v2239 = vadd.f32 %v2229, %v2235
        %v2240 = vadd.f32 %v2230, %v2236
        %v2241 = vadd.f32 %v2231, %v2237
        %s2242 = sld [smem:[#allocation15 + $0x5]]
        %v2243 = vstv %s2242
        %v2244 = vadd.f32 %v2238, %v2243
        %v2245 = vadd.f32 %v2239, %v2243
        %v2246 = vadd.f32 %v2240, %v2243
        %v2247 = vadd.f32 %v2241, %v2243
        %v2248 = vmax.f32 %v2244, 0.0
        %v2249 = vmax.f32 %v2245, 0.0
        %v2250 = vmax.f32 %v2246, 0.0
        %v2251 = vmax.f32 %v2247, 0.0
        %s2252 = sld [smem:[#allocation14 + $0x18]]
        %v2253 = vstv %s2252
        %v2254 = vmul.f32 %v1274, %v2253
        %v2255 = vmul.f32 %v1275, %v2253
        %v2256 = vmul.f32 %v1276, %v2253
        %v2257 = vmul.f32 %v1277, %v2253
        %s2258 = sld [smem:[#allocation14 + $0x19]]
        %v2259 = vstv %s2258
        %v2260 = vmul.f32 %v1320, %v2259
        %v2261 = vmul.f32 %v1321, %v2259
        %v2262 = vmul.f32 %v1322, %v2259
        %v2263 = vmul.f32 %v1323, %v2259
        %v2264 = vadd.f32 %v2254, %v2260
        %v2265 = vadd.f32 %v2255, %v2261
        %v2266 = vadd.f32 %v2256, %v2262
        %v2267 = vadd.f32 %v2257, %v2263
        %s2268 = sld [smem:[#allocation14 + $0x1a]]
        %v2269 = vstv %s2268
        %v2270 = vmul.f32 %v1366, %v2269
        %v2271 = vmul.f32 %v1367, %v2269
        %v2272 = vmul.f32 %v1368, %v2269
        %v2273 = vmul.f32 %v1369, %v2269
        %v2274 = vadd.f32 %v2264, %v2270
        %v2275 = vadd.f32 %v2265, %v2271
        %v2276 = vadd.f32 %v2266, %v2272
        %v2277 = vadd.f32 %v2267, %v2273
        %s2278 = sld [smem:[#allocation14 + $0x1b]]
        %v2279 = vstv %s2278
        %v2280 = vmul.f32 %v1412, %v2279
        %v2281 = vmul.f32 %v1413, %v2279
        %v2282 = vmul.f32 %v1414, %v2279
        %v2283 = vmul.f32 %v1415, %v2279
        %v2284 = vadd.f32 %v2274, %v2280
        %v2285 = vadd.f32 %v2275, %v2281
        %v2286 = vadd.f32 %v2276, %v2282
        %v2287 = vadd.f32 %v2277, %v2283
        %s2288 = sld [smem:[#allocation15 + $0x6]]
        %v2289 = vstv %s2288
        %v2290 = vadd.f32 %v2284, %v2289
        %v2291 = vadd.f32 %v2285, %v2289
        %v2292 = vadd.f32 %v2286, %v2289
        %v2293 = vadd.f32 %v2287, %v2289
        %v2294 = vmax.f32 %v2290, 0.0
        %v2295 = vmax.f32 %v2291, 0.0
        %v2296 = vmax.f32 %v2292, 0.0
        %v2297 = vmax.f32 %v2293, 0.0
        %s2298 = sld [smem:[#allocation14 + $0x1c]]
        %v2299 = vstv %s2298
        %v2300 = vmul.f32 %v1274, %v2299
        %v2301 = vmul.f32 %v1275, %v2299
        %v2302 = vmul.f32 %v1276, %v2299
        %v2303 = vmul.f32 %v1277, %v2299
        %s2304 = sld [smem:[#allocation14 + $0x1d]]
        %v2305 = vstv %s2304
        %v2306 = vmul.f32 %v1320, %v2305
        %v2307 = vmul.f32 %v1321, %v2305
        %v2308 = vmul.f32 %v1322, %v2305
        %v2309 = vmul.f32 %v1323, %v2305
        %v2310 = vadd.f32 %v2300, %v2306
        %v2311 = vadd.f32 %v2301, %v2307
        %v2312 = vadd.f32 %v2302, %v2308
        %v2313 = vadd.f32 %v2303, %v2309
        %s2314 = sld [smem:[#allocation14 + $0x1e]]
        %v2315 = vstv %s2314
        %v2316 = vmul.f32 %v1366, %v2315
        %v2317 = vmul.f32 %v1367, %v2315
        %v2318 = vmul.f32 %v1368, %v2315
        %v2319 = vmul.f32 %v1369, %v2315
        %v2320 = vadd.f32 %v2310, %v2316
        %v2321 = vadd.f32 %v2311, %v2317
        %v2322 = vadd.f32 %v2312, %v2318
        %v2323 = vadd.f32 %v2313, %v2319
        %s2324 = sld [smem:[#allocation14 + $0x1f]]
        %v2325 = vstv %s2324
        %v2326 = vmul.f32 %v1412, %v2325
        %v2327 = vmul.f32 %v1413, %v2325
        %v2328 = vmul.f32 %v1414, %v2325
        %v2329 = vmul.f32 %v1415, %v2325
        %v2330 = vadd.f32 %v2320, %v2326
        %v2331 = vadd.f32 %v2321, %v2327
        %v2332 = vadd.f32 %v2322, %v2328
        %v2333 = vadd.f32 %v2323, %v2329
        %s2334 = sld [smem:[#allocation15 + $0x7]]
        %v2335 = vstv %s2334
        %v2336 = vadd.f32 %v2330, %v2335
        %v2337 = vadd.f32 %v2331, %v2335
        %v2338 = vadd.f32 %v2332, %v2335
        %v2339 = vadd.f32 %v2333, %v2335
        %v2340 = vmax.f32 %v2336, 0.0
        %v2341 = vmax.f32 %v2337, 0.0
        %v2342 = vmax.f32 %v2338, 0.0
        %v2343 = vmax.f32 %v2339, 0.0
        %vm2344 = vcmask 519168
        %2345 = vst.msk [vmem:[%s460] sm:$0xf] %vm2344, %v1914
        %s2346 = scalar_lea.vmem %s460, 4 [#allocation17]
        %2347 = vst.msk [vmem:[%s2346] sm:$0xf] %vm2344, %v1949
        %s2348 = scalar_lea.vmem %s460, 8 [#allocation17]
        %2349 = vst.msk [vmem:[%s2348] sm:$0xf] %vm2344, %v1984
        %s2350 = scalar_lea.vmem %s460, 12 [#allocation17]
        %2351 = vst.msk [vmem:[%s2350] sm:$0xf] %vm2344, %v2019
        %s2352 = scalar_lea.vmem %s460, 16 [#allocation17]
        %2353 = vst.msk [vmem:[%s2352] sm:$0xf] %vm2344, %v2054
        %s2354 = scalar_lea.vmem %s460, 20 [#allocation17]
        %2355 = vst.msk [vmem:[%s2354] sm:$0xf] %vm2344, %v2089
        %s2356 = scalar_lea.vmem %s460, 24 [#allocation17]
        %2357 = vst.msk [vmem:[%s2356] sm:$0xf] %vm2344, %v2124
        %s2358 = scalar_lea.vmem %s460, 28 [#allocation17]
        %2359 = vst.msk [vmem:[%s2358] sm:$0xf] %vm2344, %v2159
        %v2364 = vrot.slane %v2202, 1
        %v2365 = vrot.slane %v2203, 1
        %v2366 = vrot.slane %v2204, 1
        %v2367 = vrot.slane %v2205, 1
        %v2372 = vadd.f32 %v2202, %v2364
        %v2373 = vadd.f32 %v2203, %v2365
        %v2374 = vadd.f32 %v2204, %v2366
        %v2375 = vadd.f32 %v2205, %v2367
        %v2376 = vrot.slane %v2202, 2
        %v2377 = vrot.slane %v2203, 2
        %v2378 = vrot.slane %v2204, 2
        %v2379 = vrot.slane %v2205, 2
        %v2384 = vadd.f32 %v2372, %v2376
        %v2385 = vadd.f32 %v2373, %v2377
        %v2386 = vadd.f32 %v2374, %v2378
        %v2387 = vadd.f32 %v2375, %v2379
        %v2388 = vrot.slane %v2202, 3
        %v2389 = vrot.slane %v2203, 3
        %v2390 = vrot.slane %v2204, 3
        %v2391 = vrot.slane %v2205, 3
        %v2396 = vadd.f32 %v2384, %v2388
        %v2397 = vadd.f32 %v2385, %v2389
        %v2398 = vadd.f32 %v2386, %v2390
        %v2399 = vadd.f32 %v2387, %v2391
        %v2400 = vmul.f32 %v2396, 0.25
        %v2401 = vmul.f32 %v2397, 0.25
        %v2402 = vmul.f32 %v2398, 0.25
        %v2403 = vmul.f32 %v2399, 0.25
        %v2408 = vrot.slane %v2401, 7
        %v2409 = vsel %vm858, %v2408, %v2400
        %v2410 = vrot.slane %v2402, 6
        %v2411 = vsel %vm861, %v2410, %v2409
        %v2412 = vrot.slane %v2403, 5
        %v2413 = vsel %vm864, %v2412, %v2411
        %s2415 = scalar_lea.vmem %s460, 32 [#allocation17]
        %2416 = vst.msk [vmem:[%s2415] sm:$0xf] %vm2344, %v2413
        %v2421 = vrot.slane %v2248, 1
        %v2422 = vrot.slane %v2249, 1
        %v2423 = vrot.slane %v2250, 1
        %v2424 = vrot.slane %v2251, 1
        %v2429 = vadd.f32 %v2248, %v2421
        %v2430 = vadd.f32 %v2249, %v2422
        %v2431 = vadd.f32 %v2250, %v2423
        %v2432 = vadd.f32 %v2251, %v2424
        %v2433 = vrot.slane %v2248, 2
        %v2434 = vrot.slane %v2249, 2
        %v2435 = vrot.slane %v2250, 2
        %v2436 = vrot.slane %v2251, 2
        %v2441 = vadd.f32 %v2429, %v2433
        %v2442 = vadd.f32 %v2430, %v2434
        %v2443 = vadd.f32 %v2431, %v2435
        %v2444 = vadd.f32 %v2432, %v2436
        %v2445 = vrot.slane %v2248, 3
        %v2446 = vrot.slane %v2249, 3
        %v2447 = vrot.slane %v2250, 3
        %v2448 = vrot.slane %v2251, 3
        %v2453 = vadd.f32 %v2441, %v2445
        %v2454 = vadd.f32 %v2442, %v2446
        %v2455 = vadd.f32 %v2443, %v2447
        %v2456 = vadd.f32 %v2444, %v2448
        %v2457 = vmul.f32 %v2453, 0.25
        %v2458 = vmul.f32 %v2454, 0.25
        %v2459 = vmul.f32 %v2455, 0.25
        %v2460 = vmul.f32 %v2456, 0.25
        %v2465 = vrot.slane %v2458, 7
        %v2466 = vsel %vm858, %v2465, %v2457
        %v2467 = vrot.slane %v2459, 6
        %v2468 = vsel %vm861, %v2467, %v2466
        %v2469 = vrot.slane %v2460, 5
        %v2470 = vsel %vm864, %v2469, %v2468
        %s2472 = scalar_lea.vmem %s460, 36 [#allocation17]
        %2473 = vst.msk [vmem:[%s2472] sm:$0xf] %vm2344, %v2470
        %v2478 = vrot.slane %v2294, 1
        %v2479 = vrot.slane %v2295, 1
        %v2480 = vrot.slane %v2296, 1
        %v2481 = vrot.slane %v2297, 1
        %v2486 = vadd.f32 %v2294, %v2478
        %v2487 = vadd.f32 %v2295, %v2479
        %v2488 = vadd.f32 %v2296, %v2480
        %v2489 = vadd.f32 %v2297, %v2481
        %v2490 = vrot.slane %v2294, 2
        %v2491 = vrot.slane %v2295, 2
        %v2492 = vrot.slane %v2296, 2
        %v2493 = vrot.slane %v2297, 2
        %v2498 = vadd.f32 %v2486, %v2490
        %v2499 = vadd.f32 %v2487, %v2491
        %v2500 = vadd.f32 %v2488, %v2492
        %v2501 = vadd.f32 %v2489, %v2493
        %v2502 = vrot.slane %v2294, 3
        %v2503 = vrot.slane %v2295, 3
        %v2504 = vrot.slane %v2296, 3
        %v2505 = vrot.slane %v2297, 3
        %v2510 = vadd.f32 %v2498, %v2502
        %v2511 = vadd.f32 %v2499, %v2503
        %v2512 = vadd.f32 %v2500, %v2504
        %v2513 = vadd.f32 %v2501, %v2505
        %v2514 = vmul.f32 %v2510, 0.25
        %v2515 = vmul.f32 %v2511, 0.25
        %v2516 = vmul.f32 %v2512, 0.25
        %v2517 = vmul.f32 %v2513, 0.25
        %v2522 = vrot.slane %v2515, 7
        %v2523 = vsel %vm858, %v2522, %v2514
        %v2524 = vrot.slane %v2516, 6
        %v2525 = vsel %vm861, %v2524, %v2523
        %v2526 = vrot.slane %v2517, 5
        %v2527 = vsel %vm864, %v2526, %v2525
        %s2529 = scalar_lea.vmem %s460, 40 [#allocation17]
        %2530 = vst.msk [vmem:[%s2529] sm:$0xf] %vm2344, %v2527
        %v2535 = vrot.slane %v2340, 1
        %v2536 = vrot.slane %v2341, 1
        %v2537 = vrot.slane %v2342, 1
        %v2538 = vrot.slane %v2343, 1
        %v2543 = vadd.f32 %v2340, %v2535
        %v2544 = vadd.f32 %v2341, %v2536
        %v2545 = vadd.f32 %v2342, %v2537
        %v2546 = vadd.f32 %v2343, %v2538
        %v2547 = vrot.slane %v2340, 2
        %v2548 = vrot.slane %v2341, 2
        %v2549 = vrot.slane %v2342, 2
        %v2550 = vrot.slane %v2343, 2
        %v2555 = vadd.f32 %v2543, %v2547
        %v2556 = vadd.f32 %v2544, %v2548
        %v2557 = vadd.f32 %v2545, %v2549
        %v2558 = vadd.f32 %v2546, %v2550
        %v2559 = vrot.slane %v2340, 3
        %v2560 = vrot.slane %v2341, 3
        %v2561 = vrot.slane %v2342, 3
        %v2562 = vrot.slane %v2343, 3
        %v2567 = vadd.f32 %v2555, %v2559
        %v2568 = vadd.f32 %v2556, %v2560
        %v2569 = vadd.f32 %v2557, %v2561
        %v2570 = vadd.f32 %v2558, %v2562
        %v2571 = vmul.f32 %v2567, 0.25
        %v2572 = vmul.f32 %v2568, 0.25
        %v2573 = vmul.f32 %v2569, 0.25
        %v2574 = vmul.f32 %v2570, 0.25
        %v2579 = vrot.slane %v2572, 7
        %v2580 = vsel %vm858, %v2579, %v2571
        %v2581 = vrot.slane %v2573, 6
        %v2582 = vsel %vm861, %v2581, %v2580
        %v2583 = vrot.slane %v2574, 5
        %v2584 = vsel %vm864, %v2583, %v2582
        %s2586 = scalar_lea.vmem %s460, 44 [#allocation17]
        %2587 = vst.msk [vmem:[%s2586] sm:$0xf] %vm2344, %v2584
        %s2588 = sand.u32 %s236, 1
        %s2589 = scalar_lea.sflag [#allocation4], %s2588
        %s2590 = sand.u32 %s236, 1
        %s2591 = smul.addr %s2590, 48
        %s2592 = scalar_lea.vmem [#allocation17], %s2591
        // Predicated region
        $region85: #{tpu_custom_call.1} parent=51 // pred_check
          %p2593 = pneg %p246
        $region86: #{tpu_custom_call.1} parent=51 // pred_check_branch
          %2595 = sbr.rel (%p2593) target = $region88
        $region87: #{tpu_custom_call.1} parent=51 // pred_region
          %s2597 = ssub.s32 768, 768
          %2598 = vsyncadd %s2589, %s2597
          %s2599 = smul.addr %s36, 12
          %s2600 = sadd.s32 %s37, %s2599
          %s2601 = smul.addr %s2600, 64
          %s2602 = scalar_lea.hbm %s8, %s2601
          %s2603 = sshll.u32 %s2592, 4
          %s2604 = int_to_ptr.vmem [resolvable:$true] %s2603
          %2609 = dma.vmem_to_hbm [thread:$0]  %s2604, 768, %s2602, %s2589, 64, 64, 4
        $region88: #{tpu_custom_call.1} parent=51 // pred_fallthru
          _
      $region52: #{tpu_custom_call.1} parent=5 // pred_fallthru
        _
      %p2610 = scmp.le.s32.totalorder 2, %s27
      // Predicated region
      $region89: #{tpu_custom_call.1} parent=5 // pred_check
        %p2611 = pneg %p2610
      $region90: #{tpu_custom_call.1} parent=5 // pred_check_branch
        %2613 = sbr.rel (%p2611) target = $region92
      $region91: #{tpu_custom_call.1} parent=5 // pred_region
        %s2614 = ssub.s32 %s27, 2
        // Predicated region
        $region93: #{tpu_custom_call.1} parent=91 // pred_check
          %p2615 = pneg %p252
        $region94: #{tpu_custom_call.1} parent=91 // pred_check_branch
          %2617 = sbr.rel (%p2615) target = $region96
        $region95: #{tpu_custom_call.1} parent=91 // pred_region
          %s2618 = sand.u32 %s237, 1
          %s2619 = scalar_lea.sflag [#allocation4], %s2618
          %s2620 = sand.u32 %s237, 1
          %s2621 = smul.addr %s2620, 48
          %s2622 = scalar_lea.vmem [#allocation17], %s2621
          %2623 = dma.done %s2619, 768
        $region96: #{tpu_custom_call.1} parent=91 // pred_fallthru
          _
      $region92: #{tpu_custom_call.1} parent=5 // pred_fallthru
        _
    $region6: #{tpu_custom_call.1} parent=1 // loop_footer
      %s31 = sadd.s32 1, %s27
    $region7: #{tpu_custom_call.1} parent=1 // loop_footer_branch
      %26 = sbr.rel target = $region3
    $region8: #{tpu_custom_call.1} parent=1 // loop_exit
      _
    %2624 = vsyncpa [#allocation3], 1
    %s2625 = scalar_lea.sflag [#allocation3], 1
    %2626 = vsyncpa %s2625, 1
    %2627 = vsyncpa [#allocation7], 1
    %s2628 = scalar_lea.sflag [#allocation7], 1
    %2629 = vsyncpa %s2628, 1
    %2630 = vsyncpa [#allocation4], 1
    %s2631 = scalar_lea.sflag [#allocation4], 1
    %2632 = vsyncpa %s2631, 1
    %2633 = vsyncpa [#allocation5], 1
    %s2634 = scalar_lea.sflag [#allocation5], 1
    %2635 = vsyncpa %s2634, 1
    %2636 = vsyncpa [#allocation10], 1
    %2637 = vsyncpa [#allocation13], 1
    %2638 = vsyncpa [#allocation16], 1

</llo_original>
